<compile_context>
chip_gen: v7x
topology: tpu7x:2x2x1
jax: 0.10.0
libtpu: 0.0.40
codegen_flags: <defaults>
</compile_context>

<pallas_src>
import functools

import jax
import jax.numpy as jnp
from jax.experimental import pallas as pl
from jax.experimental.pallas import tpu as pltpu

# Sized against the smallest-VMEM target (v7x: 64 MiB physical per TensorCore).
_BLOCK_BUDGET_BYTES = 32 * 1024 * 1024   # double-buffered (input + output) blocks
_VMEM_LIMIT_BYTES = 48 * 1024 * 1024     # scoped VMEM limit handed to Mosaic


def _upsample_nearest_kernel(x_ref, o_ref, *, scale):
    # x_ref: (Hb, W, C) VMEM tile, o_ref: (Hb*scale, W*scale, C) VMEM tile.
    # Lane axis is C; both repeats below touch only sublane / leading axes, so
    # there is no cross-lane (XLU) shuffling and output stores are full-lane.
    x = x_ref[...]
    y = jnp.repeat(x, scale, axis=1)   # W-repeat along the sublane axis
    y = jnp.repeat(y, scale, axis=0)   # H-repeat along the leading axis
    o_ref[...] = y


def _choose_row_block(n, h, bytes_per_row_pair):
    """Largest Hb (a divisor of H) whose double-buffered input+output blocks fit
    the VMEM budget; split further so the grid has >=2 steps (v7x has 2 TCs)."""
    hb = max(1, min(h, _BLOCK_BUDGET_BYTES // (2 * bytes_per_row_pair)))
    while h % hb:
        hb -= 1
    if n * (h // hb) < 2 and h % 2 == 0:
        hb = h // 2
    return hb


def _upsample_nearest_nhwc(x, scale):
    """Nearest-neighbor upsample of a channels-last (N, H, W, C) array."""
    s = int(scale)
    N, H, W, C = x.shape
    itemsize = jnp.dtype(x.dtype).itemsize
    # One input row of the block plus its s^2 output rows (both double-buffered).
    bytes_per_row_pair = W * C * itemsize * (1 + s * s)
    hb = _choose_row_block(N, H, bytes_per_row_pair)

    kernel = functools.partial(_upsample_nearest_kernel, scale=s)
    out_shape = jax.ShapeDtypeStruct((N, H * s, W * s, C), x.dtype)
    bytes_accessed = (1 + s * s) * N * H * W * C * itemsize

    return pl.pallas_call(
        kernel,
        out_shape=out_shape,
        grid=(N, H // hb),
        in_specs=[
            pl.BlockSpec((None, hb, W, C), lambda n, h: (n, h, 0, 0)),
        ],
        out_specs=pl.BlockSpec(
            (None, hb * s, W * s, C), lambda n, h: (n, h, 0, 0)
        ),
        compiler_params=pltpu.CompilerParams(
            dimension_semantics=("parallel", "parallel"),
            vmem_limit_bytes=_VMEM_LIMIT_BYTES,
        ),
        cost_estimate=pl.CostEstimate(
            flops=0, transcendentals=0, bytes_accessed=bytes_accessed
        ),
    )(x)


def upsample_nearest(x, scale_factor):
    """Equivalent of F.interpolate(x, scale_factor=scale_factor, mode='nearest')
    for NCHW input (the YOLOv3 `Upsample` module forward)."""
    s = int(scale_factor)
    if s == 1:
        return x
    # Channels-last view so the kernel's lane axis is C (lane-dense stores).
    # In a channels-last pipeline these transposes are free layout plumbing.
    x_nhwc = jnp.transpose(x, (0, 2, 3, 1))
    y_nhwc = _upsample_nearest_nhwc(x_nhwc, s)
    return jnp.transpose(y_nhwc, (0, 3, 1, 2))


if __name__ == "__main__":
    key = jax.random.PRNGKey(0)
    scale_factor = 2  # YOLOv3 uses nearest x2 upsampling

    # Required small shape + a YOLO-like channels-heavy shape (lane-dense path).
    shapes = [(2, 4, 16, 16), (1, 128, 26, 26)]
    for i, shp in enumerate(shapes):
        x = jax.random.normal(jax.random.fold_in(key, i), shp, dtype=jnp.float32)
        y = jax.block_until_ready(upsample_nearest(x, scale_factor))

        # Pure-JAX reference (matches F.interpolate(..., mode='nearest')).
        y_ref = jnp.repeat(jnp.repeat(x, scale_factor, axis=2), scale_factor, axis=3)

        N, C, H, W = shp
        assert y.shape == (N, C, H * scale_factor, W * scale_factor), y.shape
        assert y.dtype == x.dtype
        assert bool(jnp.array_equal(y, y_ref)), "mismatch vs nearest-neighbor reference"

    print("KERNEL_OK")
</pallas_src>

<mosaic_0001>
module attributes {stable_mosaic.version = 11 : i64} {
  func.func @_upsample_nearest_kernel(%arg0: i32, %arg1: i32, %arg2: memref<1x16x16x4xf32, #tpu.memory_space<vmem>>, %arg3: memref<1x32x32x4xf32, #tpu.memory_space<vmem>>) attributes {dimension_semantics = [#tpu.dimension_semantics<parallel>, #tpu.dimension_semantics<parallel>], iteration_bounds = array<i64: 2, 1>, scalar_prefetch = 0 : i64, scratch_operands = 0 : i64, tpu.core_type = #tpu.core_type<tc>, window_params = [{transform_indices = @transform_0, window_bounds = array<i64: 1, 16, 16, 4>}, {transform_indices = @transform_1, window_bounds = array<i64: 1, 32, 32, 4>}]} {
    %c0 = arith.constant 0 : index
    %c0_0 = arith.constant 0 : index
    %c0_1 = arith.constant 0 : index
    %c0_2 = arith.constant 0 : index
    %0 = vector.load %arg2[%c0, %c0_0, %c0_1, %c0_2] : memref<1x16x16x4xf32, #tpu.memory_space<vmem>>, vector<1x16x16x4xf32>
    %1 = vector.shape_cast %0 : vector<1x16x16x4xf32> to vector<16x16x4xf32>
    %2 = vector.shape_cast %1 : vector<16x16x4xf32> to vector<16x16x1x4xf32>
    %3 = vector.broadcast %2 : vector<16x16x1x4xf32> to vector<16x16x2x4xf32>
    %4 = vector.shape_cast %3 : vector<16x16x2x4xf32> to vector<16x32x4xf32>
    %5 = vector.shape_cast %4 : vector<16x32x4xf32> to vector<16x1x32x4xf32>
    %6 = vector.broadcast %5 : vector<16x1x32x4xf32> to vector<16x2x32x4xf32>
    %7 = vector.shape_cast %6 : vector<16x2x32x4xf32> to vector<32x32x4xf32>
    %c0_3 = arith.constant 0 : index
    %c0_4 = arith.constant 0 : index
    %c0_5 = arith.constant 0 : index
    %c0_6 = arith.constant 0 : index
    %8 = vector.load %arg3[%c0_3, %c0_4, %c0_5, %c0_6] : memref<1x32x32x4xf32, #tpu.memory_space<vmem>>, vector<1x32x32x4xf32>
    %9 = vector.shape_cast %8 : vector<1x32x32x4xf32> to vector<32x32x4xf32>
    %10 = vector.shape_cast %7 : vector<32x32x4xf32> to vector<1x32x32x4xf32>
    tpu.vector_store %arg3[%c0_3, %c0_4, %c0_5, %c0_6], %10 {strides = array<i32>} : memref<1x32x32x4xf32, #tpu.memory_space<vmem>>, vector<1x32x32x4xf32>,
    return
  }
  func.func @transform_0(%arg0: i32, %arg1: i32) -> (i32, i32, i32, i32) {
    %c0_i32 = arith.constant 0 : i32
    %c0_i32_0 = arith.constant 0 : i32
    %c0_i32_1 = arith.constant 0 : i32
    return %arg0, %arg1, %c0_i32, %c0_i32_0 : i32, i32, i32, i32
  }
  func.func @transform_1(%arg0: i32, %arg1: i32) -> (i32, i32, i32, i32) {
    %c0_i32 = arith.constant 0 : i32
    %c0_i32_0 = arith.constant 0 : i32
    %c0_i32_1 = arith.constant 0 : i32
    return %arg0, %arg1, %c0_i32, %c0_i32_0 : i32, i32, i32, i32
  }
}

</mosaic_0001>

<llo_original>
// kernel: tpu_custom_call.1
$region0: #{tpu_custom_call.1}
  #allocation0 [shape = 'u32[]', space=smem, size = 0x4, offset = 0x4, fixed_abs, tag = 'smem constant byte address 0x4 - core index']
  #allocation1 [shape = 'u32[144,128]{1,0:T(1,128)}', space=vmem, size = 0x12000, scoped, tag = 'internal scratch']
  %s0 = inlined_call_operand.vmem [shape: f32[2,16,16,4], index: 0, kind: input, shape index: {}]
  %s1 = inlined_call_operand.vmem [shape: f32[2,32,32,4], index: 1, kind: output, shape index: {}]
  %s2 = sld [smem:[#allocation0]]
  $region37: #{tpu_custom_call.1} parent=0
    _
  %s4 = ssub.s32 1, %s2
  %s5 = scalar_select 0, %s4, %s2
  loop: start=0, step=1, limit=4
  $region2: #{tpu_custom_call.1} parent=0 // loop_pre_header
    _
  $region3: #{tpu_custom_call.1} parent=0 // loop_header
    %s7 = sphi 0, %s11
    %p8 = scmp.ge.s32.totalorder %s7, 4
    %s14 = sphi 0, %s26
    %s15 = sphi 0, %s22
    %s16 = sphi 0, %s14
    %s17 = sphi 0, %s15
    %s18 = sphi 0, %s16
    %s19 = sphi 0, %s17
    %s31 = sphi 0, %s33
    %s34 = sphi 0, %s31
    %s35 = sphi 0, %s34
    %s51 = sphi 0, %s35
    %s59 = sphi 0, %s61
    %s62 = sphi 0, %s59
    %s63 = sphi 0, %s62
    %s79 = sphi 0, %s63
  $region4: #{tpu_custom_call.1} parent=0 // loop_header_branch
    %10 = sbr.rel (%p8) target = $region8
  $region5: #{tpu_custom_call.1} parent=0 // loop_body
    %s12 = ssub.s32 %s7, 1
    %s13 = ssub.s32 %s7, 2
    %s20 = sadd.s32 1, %s15
    %p21 = scmp.ge.s32.totalorder %s20, 1
    %s22 = scalar_select %p21, 0, %s20
    %s23 = sadd.s32 1, %s14
    %s24 = scalar_select %p21, %s23, %s14
    %p25 = scmp.ge.s32.totalorder %s24, 2
    %s26 = scalar_select %p25, 0, %s24
    %s27 = ssub.s32 %s14, %s26
    %s28 = ssub.s32 %s15, %s22
    %s29 = sor.u32 %s27, %s28
    %p30 = scmp.eq.s32.totalorder %s29, 0
    %s32 = sadd.s32 %s31, 1
    %s33 = scalar_select %p30, %s31, %s32
    %p36 = pneg %p30
    %p37 = scmp.eq.s32.totalorder %s7, 1
    %p38 = por %p36, %p37
    %p39 = scmp.ne.s32.totalorder %s31, %s34
    %p40 = scmp.eq.s32.totalorder %s7, 0
    %p41 = por %p39, %p40
    %p42 = scmp.ne.s32.totalorder %s31, %s34
    %p43 = scmp.eq.s32.totalorder %s12, 1
    %p44 = por %p42, %p43
    %p45 = scmp.ne.s32.totalorder %s34, %s35
    %p46 = scmp.eq.s32.totalorder %s12, 0
    %p47 = por %p45, %p46
    %p48 = scmp.ne.s32.totalorder %s34, %s35
    %p49 = scmp.eq.s32.totalorder %s13, 1
    %p50 = por %p48, %p49
    %p52 = scmp.ne.s32.totalorder %s35, %s51
    %p53 = scmp.eq.s32.totalorder %s13, 0
    %p54 = por %p52, %p53
    %s55 = ssub.s32 %s14, %s26
    %s56 = ssub.s32 %s15, %s22
    %s57 = sor.u32 %s55, %s56
    %p58 = scmp.eq.s32.totalorder %s57, 0
    %s60 = sadd.s32 %s59, 1
    %s61 = scalar_select %p58, %s59, %s60
    %p64 = pneg %p58
    %p65 = scmp.eq.s32.totalorder %s7, 1
    %p66 = por %p64, %p65
    %p67 = scmp.ne.s32.totalorder %s59, %s62
    %p68 = scmp.eq.s32.totalorder %s7, 0
    %p69 = por %p67, %p68
    %p70 = scmp.ne.s32.totalorder %s59, %s62
    %p71 = scmp.eq.s32.totalorder %s12, 1
    %p72 = por %p70, %p71
    %p73 = scmp.ne.s32.totalorder %s62, %s63
    %p74 = scmp.eq.s32.totalorder %s12, 0
    %p75 = por %p73, %p74
    %p76 = scmp.ne.s32.totalorder %s62, %s63
    %p77 = scmp.eq.s32.totalorder %s13, 1
    %p78 = por %p76, %p77
    %p80 = scmp.ne.s32.totalorder %s63, %s79
    %p81 = scmp.eq.s32.totalorder %s13, 0
    %p82 = por %p80, %p81
    %p83 = scmp.le.s32.totalorder 1, %s7
    %p84 = scmp.lt.s32.totalorder %s7, 3
    %p85 = pnand %p83, %p84
    %p86 = pneg %p85
    // Predicated region
    $region9: #{tpu_custom_call.1} parent=5 // pred_check
      _
    $region10: #{tpu_custom_call.1} parent=5 // pred_check_branch
      %88 = sbr.rel (%p85) target = $region12
    $region11: #{tpu_custom_call.1} parent=5 // pred_region
      %s89 = ssub.s32 %s7, 1
    $region12: #{tpu_custom_call.1} parent=5 // pred_fallthru
      _
    %p90 = scmp.lt.s32.totalorder %s7, 2
    // Predicated region
    $region13: #{tpu_custom_call.1} parent=5 // pred_check
      %p91 = pneg %p90
    $region14: #{tpu_custom_call.1} parent=5 // pred_check_branch
      %93 = sbr.rel (%p91) target = $region16
    $region15: #{tpu_custom_call.1} parent=5 // pred_region
      // Predicated region
      $region17: #{tpu_custom_call.1} parent=15 // pred_check
        %p94 = pneg %p41
      $region18: #{tpu_custom_call.1} parent=15 // pred_check_branch
        %96 = sbr.rel (%p94) target = $region20
      $region19: #{tpu_custom_call.1} parent=15 // pred_region
        %s97 = smul.u32 16, %s15
        %p98 = scmp.lt.s32.totalorder %s14, 1
        %s99 = scalar_select %p98, %s14, 1
        %p100 = scmp.lt.s32.totalorder %s97, 15
        %s101 = scalar_select %p100, %s97, 15
        %s102 = smul.addr %s101, 2
        %s103 = smul.addr %s99, 32
        %s104 = sadd.s32 %s102, %s103
        %s105 = smul.addr %s104, 8
        %s106 = scalar_lea.vmem %s0, %s105
        %s107 = smul.u32 16, %s15
      $region20: #{tpu_custom_call.1} parent=15 // pred_fallthru
        _
    $region16: #{tpu_custom_call.1} parent=5 // pred_fallthru
      _
    %p108 = scmp.le.s32.totalorder 1, %s7
    %p109 = scmp.lt.s32.totalorder %s7, 3
    %p110 = pnand %p108, %p109
    %p111 = pneg %p110
    // Predicated region
    $region21: #{tpu_custom_call.1} parent=5 // pred_check
      _
    $region22: #{tpu_custom_call.1} parent=5 // pred_check_branch
      %113 = sbr.rel (%p110) target = $region24
    $region23: #{tpu_custom_call.1} parent=5 // pred_region
      %s114 = ssub.s32 %s7, 1
      %s115 = smul.u32 16, %s17
      %p116 = scmp.lt.s32.totalorder %s16, 1
      %s117 = scalar_select %p116, %s16, 1
      %p118 = scmp.lt.s32.totalorder %s115, 15
      %s119 = scalar_select %p118, %s115, 15
      %s120 = smul.addr %s119, 2
      %s121 = smul.addr %s117, 32
      %s122 = sadd.s32 %s120, %s121
      %s123 = smul.addr %s122, 8
      %s124 = scalar_lea.vmem %s0, %s123
      %p125 = pneg %p47
      %p126 = pneg %p44
      %p127 = pneg %p75
      %p128 = pneg %p72
      %s129 = smul.u32 32, %s17
      %p130 = scmp.lt.s32.totalorder %s16, 1
      %s131 = scalar_select %p130, %s16, 1
      %p132 = scmp.lt.s32.totalorder %s129, 31
      %s133 = scalar_select %p132, %s129, 31
      %s134 = smul.addr %s133, 4
      %s135 = smul.addr %s131, 128
      %s136 = sadd.s32 %s134, %s135
      %s137 = smul.addr %s136, 8
      %s138 = scalar_lea.vmem %s1, %s137
      %s139 = smul.u32 16, %s17
      %p140 = scmp.lt.s32.totalorder %s16, 1
      %s141 = scalar_select %p140, %s16, 1
      %p142 = scmp.lt.s32.totalorder %s139, 15
      %s143 = scalar_select %p142, %s139, 15
      %s144 = smul.addr %s143, 2
      %s145 = smul.addr %s141, 32
      %s146 = sadd.s32 %s144, %s145
      %s147 = smul.addr %s146, 8
      %s148 = scalar_lea.vmem %s0, %s147
      %s149 = smul.u32 16, %s17
      %s150 = smul.u32 32, %s17
      %p151 = scmp.lt.s32.totalorder %s16, 1
      %s152 = scalar_select %p151, %s16, 1
      %p153 = scmp.lt.s32.totalorder %s150, 31
      %s154 = scalar_select %p153, %s150, 31
      %s155 = smul.addr %s154, 4
      %s156 = smul.addr %s152, 128
      %s157 = sadd.s32 %s155, %s156
      %s158 = smul.addr %s157, 8
      %s159 = scalar_lea.vmem %s1, %s158
      %s160 = smul.u32 32, %s17
      %v161 = vld [vmem:[%s148] sm:$0xff]
      %v162 = vld [vmem:[%s148 + $0x8] sm:$0xff]
      %v163 = vld [vmem:[%s148 + $0x10] sm:$0xff]
      %v164 = vld [vmem:[%s148 + $0x18] sm:$0xff]
      %v165 = vld [vmem:[%s148 + $0x20] sm:$0xff]
      %v166 = vld [vmem:[%s148 + $0x28] sm:$0xff]
      %v167 = vld [vmem:[%s148 + $0x30] sm:$0xff]
      %v168 = vld [vmem:[%s148 + $0x38] sm:$0xff]
      %v169 = vld [vmem:[%s148 + $0x40] sm:$0xff]
      %v170 = vld [vmem:[%s148 + $0x48] sm:$0xff]
      %v171 = vld [vmem:[%s148 + $0x50] sm:$0xff]
      %v172 = vld [vmem:[%s148 + $0x58] sm:$0xff]
      %v173 = vld [vmem:[%s148 + $0x60] sm:$0xff]
      %v174 = vld [vmem:[%s148 + $0x68] sm:$0xff]
      %v175 = vld [vmem:[%s148 + $0x70] sm:$0xff]
      %v176 = vld [vmem:[%s148 + $0x78] sm:$0xff]
      %v177 = vld [vmem:[%s148 + $0x80] sm:$0xff]
      %v178 = vld [vmem:[%s148 + $0x88] sm:$0xff]
      %v179 = vld [vmem:[%s148 + $0x90] sm:$0xff]
      %v180 = vld [vmem:[%s148 + $0x98] sm:$0xff]
      %v181 = vld [vmem:[%s148 + $0xa0] sm:$0xff]
      %v182 = vld [vmem:[%s148 + $0xa8] sm:$0xff]
      %v183 = vld [vmem:[%s148 + $0xb0] sm:$0xff]
      %v184 = vld [vmem:[%s148 + $0xb8] sm:$0xff]
      %v185 = vld [vmem:[%s148 + $0xc0] sm:$0xff]
      %v186 = vld [vmem:[%s148 + $0xc8] sm:$0xff]
      %v187 = vld [vmem:[%s148 + $0xd0] sm:$0xff]
      %v188 = vld [vmem:[%s148 + $0xd8] sm:$0xff]
      %v189 = vld [vmem:[%s148 + $0xe0] sm:$0xff]
      %v190 = vld [vmem:[%s148 + $0xe8] sm:$0xff]
      %v191 = vld [vmem:[%s148 + $0xf0] sm:$0xff]
      %v192 = vld [vmem:[%s148 + $0xf8] sm:$0xff]
      %v225 = vcombine.high %v161, %v161
      %v227 = vunpack.c.l.s4 1966171168
      %v228 = vunpack.c.0.s8 %v227
      %v229 = vlaneseq
      %v230 = vshrl.u32 %v229, 7
      %v231 = vsub.s32 %v228, %v230
      %v232 = vrot.slane %v161, %v231
      %v234 = vunpack.c.l.s4 1966171168
      %v235 = vunpack.c.0.s8 %v234
      %v236 = vlaneseq
      %v237 = vshrl.u32 %v236, 7
      %v238 = vsub.s32 %v235, %v237
      %v239 = vrot.slane %v225, %v238
      %v240 = vcombine.high %v232, %v232
      %v241 = vcombine.high %v239, %v239
      %v243 = vunpack.c.l.s4 1966171168
      %v244 = vunpack.c.0.s8 %v243
      %v245 = vlaneseq
      %v246 = vshrl.u32 %v245, 7
      %v247 = vsub.s32 %v244, %v246
      %v248 = vrot.slane %v232, %v247
      %v250 = vunpack.c.l.s4 1966171168
      %v251 = vunpack.c.0.s8 %v250
      %v252 = vlaneseq
      %v253 = vshrl.u32 %v252, 7
      %v254 = vsub.s32 %v251, %v253
      %v255 = vrot.slane %v239, %v254
      %v257 = vunpack.c.l.s4 1966171168
      %v258 = vunpack.c.0.s8 %v257
      %v259 = vlaneseq
      %v260 = vshrl.u32 %v259, 7
      %v261 = vsub.s32 %v258, %v260
      %v262 = vrot.slane %v240, %v261
      %v264 = vunpack.c.l.s4 1966171168
      %v265 = vunpack.c.0.s8 %v264
      %v266 = vlaneseq
      %v267 = vshrl.u32 %v266, 7
      %v268 = vsub.s32 %v265, %v267
      %v269 = vrot.slane %v241, %v268
      %v270 = vcombine.high %v248, %v248
      %v271 = vcombine.high %v255, %v255
      %v272 = vcombine.high %v262, %v262
      %v273 = vcombine.high %v269, %v269
      %v274 = vcombine.high %v162, %v162
      %v276 = vunpack.c.l.s4 1966171168
      %v277 = vunpack.c.0.s8 %v276
      %v278 = vlaneseq
      %v279 = vshrl.u32 %v278, 7
      %v280 = vsub.s32 %v277, %v279
      %v281 = vrot.slane %v162, %v280
      %v283 = vunpack.c.l.s4 1966171168
      %v284 = vunpack.c.0.s8 %v283
      %v285 = vlaneseq
      %v286 = vshrl.u32 %v285, 7
      %v287 = vsub.s32 %v284, %v286
      %v288 = vrot.slane %v274, %v287
      %v289 = vcombine.high %v281, %v281
      %v290 = vcombine.high %v288, %v288
      %v292 = vunpack.c.l.s4 1966171168
      %v293 = vunpack.c.0.s8 %v292
      %v294 = vlaneseq
      %v295 = vshrl.u32 %v294, 7
      %v296 = vsub.s32 %v293, %v295
      %v297 = vrot.slane %v281, %v296
      %v299 = vunpack.c.l.s4 1966171168
      %v300 = vunpack.c.0.s8 %v299
      %v301 = vlaneseq
      %v302 = vshrl.u32 %v301, 7
      %v303 = vsub.s32 %v300, %v302
      %v304 = vrot.slane %v288, %v303
      %v306 = vunpack.c.l.s4 1966171168
      %v307 = vunpack.c.0.s8 %v306
      %v308 = vlaneseq
      %v309 = vshrl.u32 %v308, 7
      %v310 = vsub.s32 %v307, %v309
      %v311 = vrot.slane %v289, %v310
      %v313 = vunpack.c.l.s4 1966171168
      %v314 = vunpack.c.0.s8 %v313
      %v315 = vlaneseq
      %v316 = vshrl.u32 %v315, 7
      %v317 = vsub.s32 %v314, %v316
      %v318 = vrot.slane %v290, %v317
      %v319 = vcombine.high %v297, %v297
      %v320 = vcombine.high %v304, %v304
      %v321 = vcombine.high %v311, %v311
      %v322 = vcombine.high %v318, %v318
      %v323 = vcombine.high %v163, %v163
      %v325 = vunpack.c.l.s4 1966171168
      %v326 = vunpack.c.0.s8 %v325
      %v327 = vlaneseq
      %v328 = vshrl.u32 %v327, 7
      %v329 = vsub.s32 %v326, %v328
      %v330 = vrot.slane %v163, %v329
      %v332 = vunpack.c.l.s4 1966171168
      %v333 = vunpack.c.0.s8 %v332
      %v334 = vlaneseq
      %v335 = vshrl.u32 %v334, 7
      %v336 = vsub.s32 %v333, %v335
      %v337 = vrot.slane %v323, %v336
      %v338 = vcombine.high %v330, %v330
      %v339 = vcombine.high %v337, %v337
      %v341 = vunpack.c.l.s4 1966171168
      %v342 = vunpack.c.0.s8 %v341
      %v343 = vlaneseq
      %v344 = vshrl.u32 %v343, 7
      %v345 = vsub.s32 %v342, %v344
      %v346 = vrot.slane %v330, %v345
      %v348 = vunpack.c.l.s4 1966171168
      %v349 = vunpack.c.0.s8 %v348
      %v350 = vlaneseq
      %v351 = vshrl.u32 %v350, 7
      %v352 = vsub.s32 %v349, %v351
      %v353 = vrot.slane %v337, %v352
      %v355 = vunpack.c.l.s4 1966171168
      %v356 = vunpack.c.0.s8 %v355
      %v357 = vlaneseq
      %v358 = vshrl.u32 %v357, 7
      %v359 = vsub.s32 %v356, %v358
      %v360 = vrot.slane %v338, %v359
      %v362 = vunpack.c.l.s4 1966171168
      %v363 = vunpack.c.0.s8 %v362
      %v364 = vlaneseq
      %v365 = vshrl.u32 %v364, 7
      %v366 = vsub.s32 %v363, %v365
      %v367 = vrot.slane %v339, %v366
      %v368 = vcombine.high %v346, %v346
      %v369 = vcombine.high %v353, %v353
      %v370 = vcombine.high %v360, %v360
      %v371 = vcombine.high %v367, %v367
      %v372 = vcombine.high %v164, %v164
      %v374 = vunpack.c.l.s4 1966171168
      %v375 = vunpack.c.0.s8 %v374
      %v376 = vlaneseq
      %v377 = vshrl.u32 %v376, 7
      %v378 = vsub.s32 %v375, %v377
      %v379 = vrot.slane %v164, %v378
      %v381 = vunpack.c.l.s4 1966171168
      %v382 = vunpack.c.0.s8 %v381
      %v383 = vlaneseq
      %v384 = vshrl.u32 %v383, 7
      %v385 = vsub.s32 %v382, %v384
      %v386 = vrot.slane %v372, %v385
      %v387 = vcombine.high %v379, %v379
      %v388 = vcombine.high %v386, %v386
      %v390 = vunpack.c.l.s4 1966171168
      %v391 = vunpack.c.0.s8 %v390
      %v392 = vlaneseq
      %v393 = vshrl.u32 %v392, 7
      %v394 = vsub.s32 %v391, %v393
      %v395 = vrot.slane %v379, %v394
      %v397 = vunpack.c.l.s4 1966171168
      %v398 = vunpack.c.0.s8 %v397
      %v399 = vlaneseq
      %v400 = vshrl.u32 %v399, 7
      %v401 = vsub.s32 %v398, %v400
      %v402 = vrot.slane %v386, %v401
      %v404 = vunpack.c.l.s4 1966171168
      %v405 = vunpack.c.0.s8 %v404
      %v406 = vlaneseq
      %v407 = vshrl.u32 %v406, 7
      %v408 = vsub.s32 %v405, %v407
      %v409 = vrot.slane %v387, %v408
      %v411 = vunpack.c.l.s4 1966171168
      %v412 = vunpack.c.0.s8 %v411
      %v413 = vlaneseq
      %v414 = vshrl.u32 %v413, 7
      %v415 = vsub.s32 %v412, %v414
      %v416 = vrot.slane %v388, %v415
      %v417 = vcombine.high %v395, %v395
      %v418 = vcombine.high %v402, %v402
      %v419 = vcombine.high %v409, %v409
      %v420 = vcombine.high %v416, %v416
      %v421 = vcombine.high %v165, %v165
      %v423 = vunpack.c.l.s4 1966171168
      %v424 = vunpack.c.0.s8 %v423
      %v425 = vlaneseq
      %v426 = vshrl.u32 %v425, 7
      %v427 = vsub.s32 %v424, %v426
      %v428 = vrot.slane %v165, %v427
      %v430 = vunpack.c.l.s4 1966171168
      %v431 = vunpack.c.0.s8 %v430
      %v432 = vlaneseq
      %v433 = vshrl.u32 %v432, 7
      %v434 = vsub.s32 %v431, %v433
      %v435 = vrot.slane %v421, %v434
      %v436 = vcombine.high %v428, %v428
      %v437 = vcombine.high %v435, %v435
      %v439 = vunpack.c.l.s4 1966171168
      %v440 = vunpack.c.0.s8 %v439
      %v441 = vlaneseq
      %v442 = vshrl.u32 %v441, 7
      %v443 = vsub.s32 %v440, %v442
      %v444 = vrot.slane %v428, %v443
      %v446 = vunpack.c.l.s4 1966171168
      %v447 = vunpack.c.0.s8 %v446
      %v448 = vlaneseq
      %v449 = vshrl.u32 %v448, 7
      %v450 = vsub.s32 %v447, %v449
      %v451 = vrot.slane %v435, %v450
      %v453 = vunpack.c.l.s4 1966171168
      %v454 = vunpack.c.0.s8 %v453
      %v455 = vlaneseq
      %v456 = vshrl.u32 %v455, 7
      %v457 = vsub.s32 %v454, %v456
      %v458 = vrot.slane %v436, %v457
      %v460 = vunpack.c.l.s4 1966171168
      %v461 = vunpack.c.0.s8 %v460
      %v462 = vlaneseq
      %v463 = vshrl.u32 %v462, 7
      %v464 = vsub.s32 %v461, %v463
      %v465 = vrot.slane %v437, %v464
      %v466 = vcombine.high %v444, %v444
      %v467 = vcombine.high %v451, %v451
      %v468 = vcombine.high %v458, %v458
      %v469 = vcombine.high %v465, %v465
      %v470 = vcombine.high %v166, %v166
      %v472 = vunpack.c.l.s4 1966171168
      %v473 = vunpack.c.0.s8 %v472
      %v474 = vlaneseq
      %v475 = vshrl.u32 %v474, 7
      %v476 = vsub.s32 %v473, %v475
      %v477 = vrot.slane %v166, %v476
      %v479 = vunpack.c.l.s4 1966171168
      %v480 = vunpack.c.0.s8 %v479
      %v481 = vlaneseq
      %v482 = vshrl.u32 %v481, 7
      %v483 = vsub.s32 %v480, %v482
      %v484 = vrot.slane %v470, %v483
      %v485 = vcombine.high %v477, %v477
      %v486 = vcombine.high %v484, %v484
      %v488 = vunpack.c.l.s4 1966171168
      %v489 = vunpack.c.0.s8 %v488
      %v490 = vlaneseq
      %v491 = vshrl.u32 %v490, 7
      %v492 = vsub.s32 %v489, %v491
      %v493 = vrot.slane %v477, %v492
      %v495 = vunpack.c.l.s4 1966171168
      %v496 = vunpack.c.0.s8 %v495
      %v497 = vlaneseq
      %v498 = vshrl.u32 %v497, 7
      %v499 = vsub.s32 %v496, %v498
      %v500 = vrot.slane %v484, %v499
      %v502 = vunpack.c.l.s4 1966171168
      %v503 = vunpack.c.0.s8 %v502
      %v504 = vlaneseq
      %v505 = vshrl.u32 %v504, 7
      %v506 = vsub.s32 %v503, %v505
      %v507 = vrot.slane %v485, %v506
      %v509 = vunpack.c.l.s4 1966171168
      %v510 = vunpack.c.0.s8 %v509
      %v511 = vlaneseq
      %v512 = vshrl.u32 %v511, 7
      %v513 = vsub.s32 %v510, %v512
      %v514 = vrot.slane %v486, %v513
      %v515 = vcombine.high %v493, %v493
      %v516 = vcombine.high %v500, %v500
      %v517 = vcombine.high %v507, %v507
      %v518 = vcombine.high %v514, %v514
      %v519 = vcombine.high %v167, %v167
      %v521 = vunpack.c.l.s4 1966171168
      %v522 = vunpack.c.0.s8 %v521
      %v523 = vlaneseq
      %v524 = vshrl.u32 %v523, 7
      %v525 = vsub.s32 %v522, %v524
      %v526 = vrot.slane %v167, %v525
      %v528 = vunpack.c.l.s4 1966171168
      %v529 = vunpack.c.0.s8 %v528
      %v530 = vlaneseq
      %v531 = vshrl.u32 %v530, 7
      %v532 = vsub.s32 %v529, %v531
      %v533 = vrot.slane %v519, %v532
      %v534 = vcombine.high %v526, %v526
      %v535 = vcombine.high %v533, %v533
      %v537 = vunpack.c.l.s4 1966171168
      %v538 = vunpack.c.0.s8 %v537
      %v539 = vlaneseq
      %v540 = vshrl.u32 %v539, 7
      %v541 = vsub.s32 %v538, %v540
      %v542 = vrot.slane %v526, %v541
      %v544 = vunpack.c.l.s4 1966171168
      %v545 = vunpack.c.0.s8 %v544
      %v546 = vlaneseq
      %v547 = vshrl.u32 %v546, 7
      %v548 = vsub.s32 %v545, %v547
      %v549 = vrot.slane %v533, %v548
      %v551 = vunpack.c.l.s4 1966171168
      %v552 = vunpack.c.0.s8 %v551
      %v553 = vlaneseq
      %v554 = vshrl.u32 %v553, 7
      %v555 = vsub.s32 %v552, %v554
      %v556 = vrot.slane %v534, %v555
      %v558 = vunpack.c.l.s4 1966171168
      %v559 = vunpack.c.0.s8 %v558
      %v560 = vlaneseq
      %v561 = vshrl.u32 %v560, 7
      %v562 = vsub.s32 %v559, %v561
      %v563 = vrot.slane %v535, %v562
      %v564 = vcombine.high %v542, %v542
      %v565 = vcombine.high %v549, %v549
      %v566 = vcombine.high %v556, %v556
      %v567 = vcombine.high %v563, %v563
      %v568 = vcombine.high %v168, %v168
      %v570 = vunpack.c.l.s4 1966171168
      %v571 = vunpack.c.0.s8 %v570
      %v572 = vlaneseq
      %v573 = vshrl.u32 %v572, 7
      %v574 = vsub.s32 %v571, %v573
      %v575 = vrot.slane %v168, %v574
      %v577 = vunpack.c.l.s4 1966171168
      %v578 = vunpack.c.0.s8 %v577
      %v579 = vlaneseq
      %v580 = vshrl.u32 %v579, 7
      %v581 = vsub.s32 %v578, %v580
      %v582 = vrot.slane %v568, %v581
      %v583 = vcombine.high %v575, %v575
      %v584 = vcombine.high %v582, %v582
      %v586 = vunpack.c.l.s4 1966171168
      %v587 = vunpack.c.0.s8 %v586
      %v588 = vlaneseq
      %v589 = vshrl.u32 %v588, 7
      %v590 = vsub.s32 %v587, %v589
      %v591 = vrot.slane %v575, %v590
      %v593 = vunpack.c.l.s4 1966171168
      %v594 = vunpack.c.0.s8 %v593
      %v595 = vlaneseq
      %v596 = vshrl.u32 %v595, 7
      %v597 = vsub.s32 %v594, %v596
      %v598 = vrot.slane %v582, %v597
      %v600 = vunpack.c.l.s4 1966171168
      %v601 = vunpack.c.0.s8 %v600
      %v602 = vlaneseq
      %v603 = vshrl.u32 %v602, 7
      %v604 = vsub.s32 %v601, %v603
      %v605 = vrot.slane %v583, %v604
      %v607 = vunpack.c.l.s4 1966171168
      %v608 = vunpack.c.0.s8 %v607
      %v609 = vlaneseq
      %v610 = vshrl.u32 %v609, 7
      %v611 = vsub.s32 %v608, %v610
      %v612 = vrot.slane %v584, %v611
      %v613 = vcombine.high %v591, %v591
      %v614 = vcombine.high %v598, %v598
      %v615 = vcombine.high %v605, %v605
      %v616 = vcombine.high %v612, %v612
      %v617 = vcombine.high %v169, %v169
      %v619 = vunpack.c.l.s4 1966171168
      %v620 = vunpack.c.0.s8 %v619
      %v621 = vlaneseq
      %v622 = vshrl.u32 %v621, 7
      %v623 = vsub.s32 %v620, %v622
      %v624 = vrot.slane %v169, %v623
      %v626 = vunpack.c.l.s4 1966171168
      %v627 = vunpack.c.0.s8 %v626
      %v628 = vlaneseq
      %v629 = vshrl.u32 %v628, 7
      %v630 = vsub.s32 %v627, %v629
      %v631 = vrot.slane %v617, %v630
      %v632 = vcombine.high %v624, %v624
      %v633 = vcombine.high %v631, %v631
      %v635 = vunpack.c.l.s4 1966171168
      %v636 = vunpack.c.0.s8 %v635
      %v637 = vlaneseq
      %v638 = vshrl.u32 %v637, 7
      %v639 = vsub.s32 %v636, %v638
      %v640 = vrot.slane %v624, %v639
      %v642 = vunpack.c.l.s4 1966171168
      %v643 = vunpack.c.0.s8 %v642
      %v644 = vlaneseq
      %v645 = vshrl.u32 %v644, 7
      %v646 = vsub.s32 %v643, %v645
      %v647 = vrot.slane %v631, %v646
      %v649 = vunpack.c.l.s4 1966171168
      %v650 = vunpack.c.0.s8 %v649
      %v651 = vlaneseq
      %v652 = vshrl.u32 %v651, 7
      %v653 = vsub.s32 %v650, %v652
      %v654 = vrot.slane %v632, %v653
      %v656 = vunpack.c.l.s4 1966171168
      %v657 = vunpack.c.0.s8 %v656
      %v658 = vlaneseq
      %v659 = vshrl.u32 %v658, 7
      %v660 = vsub.s32 %v657, %v659
      %v661 = vrot.slane %v633, %v660
      %v662 = vcombine.high %v640, %v640
      %v663 = vcombine.high %v647, %v647
      %v664 = vcombine.high %v654, %v654
      %v665 = vcombine.high %v661, %v661
      %v666 = vcombine.high %v170, %v170
      %v668 = vunpack.c.l.s4 1966171168
      %v669 = vunpack.c.0.s8 %v668
      %v670 = vlaneseq
      %v671 = vshrl.u32 %v670, 7
      %v672 = vsub.s32 %v669, %v671
      %v673 = vrot.slane %v170, %v672
      %v675 = vunpack.c.l.s4 1966171168
      %v676 = vunpack.c.0.s8 %v675
      %v677 = vlaneseq
      %v678 = vshrl.u32 %v677, 7
      %v679 = vsub.s32 %v676, %v678
      %v680 = vrot.slane %v666, %v679
      %v681 = vcombine.high %v673, %v673
      %v682 = vcombine.high %v680, %v680
      %v684 = vunpack.c.l.s4 1966171168
      %v685 = vunpack.c.0.s8 %v684
      %v686 = vlaneseq
      %v687 = vshrl.u32 %v686, 7
      %v688 = vsub.s32 %v685, %v687
      %v689 = vrot.slane %v673, %v688
      %v691 = vunpack.c.l.s4 1966171168
      %v692 = vunpack.c.0.s8 %v691
      %v693 = vlaneseq
      %v694 = vshrl.u32 %v693, 7
      %v695 = vsub.s32 %v692, %v694
      %v696 = vrot.slane %v680, %v695
      %v698 = vunpack.c.l.s4 1966171168
      %v699 = vunpack.c.0.s8 %v698
      %v700 = vlaneseq
      %v701 = vshrl.u32 %v700, 7
      %v702 = vsub.s32 %v699, %v701
      %v703 = vrot.slane %v681, %v702
      %v705 = vunpack.c.l.s4 1966171168
      %v706 = vunpack.c.0.s8 %v705
      %v707 = vlaneseq
      %v708 = vshrl.u32 %v707, 7
      %v709 = vsub.s32 %v706, %v708
      %v710 = vrot.slane %v682, %v709
      %v711 = vcombine.high %v689, %v689
      %v712 = vcombine.high %v696, %v696
      %v713 = vcombine.high %v703, %v703
      %v714 = vcombine.high %v710, %v710
      %v715 = vcombine.high %v171, %v171
      %v717 = vunpack.c.l.s4 1966171168
      %v718 = vunpack.c.0.s8 %v717
      %v719 = vlaneseq
      %v720 = vshrl.u32 %v719, 7
      %v721 = vsub.s32 %v718, %v720
      %v722 = vrot.slane %v171, %v721
      %v724 = vunpack.c.l.s4 1966171168
      %v725 = vunpack.c.0.s8 %v724
      %v726 = vlaneseq
      %v727 = vshrl.u32 %v726, 7
      %v728 = vsub.s32 %v725, %v727
      %v729 = vrot.slane %v715, %v728
      %v730 = vcombine.high %v722, %v722
      %v731 = vcombine.high %v729, %v729
      %v733 = vunpack.c.l.s4 1966171168
      %v734 = vunpack.c.0.s8 %v733
      %v735 = vlaneseq
      %v736 = vshrl.u32 %v735, 7
      %v737 = vsub.s32 %v734, %v736
      %v738 = vrot.slane %v722, %v737
      %v740 = vunpack.c.l.s4 1966171168
      %v741 = vunpack.c.0.s8 %v740
      %v742 = vlaneseq
      %v743 = vshrl.u32 %v742, 7
      %v744 = vsub.s32 %v741, %v743
      %v745 = vrot.slane %v729, %v744
      %v747 = vunpack.c.l.s4 1966171168
      %v748 = vunpack.c.0.s8 %v747
      %v749 = vlaneseq
      %v750 = vshrl.u32 %v749, 7
      %v751 = vsub.s32 %v748, %v750
      %v752 = vrot.slane %v730, %v751
      %v754 = vunpack.c.l.s4 1966171168
      %v755 = vunpack.c.0.s8 %v754
      %v756 = vlaneseq
      %v757 = vshrl.u32 %v756, 7
      %v758 = vsub.s32 %v755, %v757
      %v759 = vrot.slane %v731, %v758
      %v760 = vcombine.high %v738, %v738
      %v761 = vcombine.high %v745, %v745
      %v762 = vcombine.high %v752, %v752
      %v763 = vcombine.high %v759, %v759
      %v764 = vcombine.high %v172, %v172
      %v766 = vunpack.c.l.s4 1966171168
      %v767 = vunpack.c.0.s8 %v766
      %v768 = vlaneseq
      %v769 = vshrl.u32 %v768, 7
      %v770 = vsub.s32 %v767, %v769
      %v771 = vrot.slane %v172, %v770
      %v773 = vunpack.c.l.s4 1966171168
      %v774 = vunpack.c.0.s8 %v773
      %v775 = vlaneseq
      %v776 = vshrl.u32 %v775, 7
      %v777 = vsub.s32 %v774, %v776
      %v778 = vrot.slane %v764, %v777
      %v779 = vcombine.high %v771, %v771
      %v780 = vcombine.high %v778, %v778
      %v782 = vunpack.c.l.s4 1966171168
      %v783 = vunpack.c.0.s8 %v782
      %v784 = vlaneseq
      %v785 = vshrl.u32 %v784, 7
      %v786 = vsub.s32 %v783, %v785
      %v787 = vrot.slane %v771, %v786
      %v789 = vunpack.c.l.s4 1966171168
      %v790 = vunpack.c.0.s8 %v789
      %v791 = vlaneseq
      %v792 = vshrl.u32 %v791, 7
      %v793 = vsub.s32 %v790, %v792
      %v794 = vrot.slane %v778, %v793
      %v796 = vunpack.c.l.s4 1966171168
      %v797 = vunpack.c.0.s8 %v796
      %v798 = vlaneseq
      %v799 = vshrl.u32 %v798, 7
      %v800 = vsub.s32 %v797, %v799
      %v801 = vrot.slane %v779, %v800
      %v803 = vunpack.c.l.s4 1966171168
      %v804 = vunpack.c.0.s8 %v803
      %v805 = vlaneseq
      %v806 = vshrl.u32 %v805, 7
      %v807 = vsub.s32 %v804, %v806
      %v808 = vrot.slane %v780, %v807
      %v809 = vcombine.high %v787, %v787
      %v810 = vcombine.high %v794, %v794
      %v811 = vcombine.high %v801, %v801
      %v812 = vcombine.high %v808, %v808
      %v813 = vcombine.high %v173, %v173
      %v815 = vunpack.c.l.s4 1966171168
      %v816 = vunpack.c.0.s8 %v815
      %v817 = vlaneseq
      %v818 = vshrl.u32 %v817, 7
      %v819 = vsub.s32 %v816, %v818
      %v820 = vrot.slane %v173, %v819
      %v822 = vunpack.c.l.s4 1966171168
      %v823 = vunpack.c.0.s8 %v822
      %v824 = vlaneseq
      %v825 = vshrl.u32 %v824, 7
      %v826 = vsub.s32 %v823, %v825
      %v827 = vrot.slane %v813, %v826
      %v828 = vcombine.high %v820, %v820
      %v829 = vcombine.high %v827, %v827
      %v831 = vunpack.c.l.s4 1966171168
      %v832 = vunpack.c.0.s8 %v831
      %v833 = vlaneseq
      %v834 = vshrl.u32 %v833, 7
      %v835 = vsub.s32 %v832, %v834
      %v836 = vrot.slane %v820, %v835
      %v838 = vunpack.c.l.s4 1966171168
      %v839 = vunpack.c.0.s8 %v838
      %v840 = vlaneseq
      %v841 = vshrl.u32 %v840, 7
      %v842 = vsub.s32 %v839, %v841
      %v843 = vrot.slane %v827, %v842
      %v845 = vunpack.c.l.s4 1966171168
      %v846 = vunpack.c.0.s8 %v845
      %v847 = vlaneseq
      %v848 = vshrl.u32 %v847, 7
      %v849 = vsub.s32 %v846, %v848
      %v850 = vrot.slane %v828, %v849
      %v852 = vunpack.c.l.s4 1966171168
      %v853 = vunpack.c.0.s8 %v852
      %v854 = vlaneseq
      %v855 = vshrl.u32 %v854, 7
      %v856 = vsub.s32 %v853, %v855
      %v857 = vrot.slane %v829, %v856
      %v858 = vcombine.high %v836, %v836
      %v859 = vcombine.high %v843, %v843
      %v860 = vcombine.high %v850, %v850
      %v861 = vcombine.high %v857, %v857
      %v862 = vcombine.high %v174, %v174
      %v864 = vunpack.c.l.s4 1966171168
      %v865 = vunpack.c.0.s8 %v864
      %v866 = vlaneseq
      %v867 = vshrl.u32 %v866, 7
      %v868 = vsub.s32 %v865, %v867
      %v869 = vrot.slane %v174, %v868
      %v871 = vunpack.c.l.s4 1966171168
      %v872 = vunpack.c.0.s8 %v871
      %v873 = vlaneseq
      %v874 = vshrl.u32 %v873, 7
      %v875 = vsub.s32 %v872, %v874
      %v876 = vrot.slane %v862, %v875
      %v877 = vcombine.high %v869, %v869
      %v878 = vcombine.high %v876, %v876
      %v880 = vunpack.c.l.s4 1966171168
      %v881 = vunpack.c.0.s8 %v880
      %v882 = vlaneseq
      %v883 = vshrl.u32 %v882, 7
      %v884 = vsub.s32 %v881, %v883
      %v885 = vrot.slane %v869, %v884
      %v887 = vunpack.c.l.s4 1966171168
      %v888 = vunpack.c.0.s8 %v887
      %v889 = vlaneseq
      %v890 = vshrl.u32 %v889, 7
      %v891 = vsub.s32 %v888, %v890
      %v892 = vrot.slane %v876, %v891
      %v894 = vunpack.c.l.s4 1966171168
      %v895 = vunpack.c.0.s8 %v894
      %v896 = vlaneseq
      %v897 = vshrl.u32 %v896, 7
      %v898 = vsub.s32 %v895, %v897
      %v899 = vrot.slane %v877, %v898
      %v901 = vunpack.c.l.s4 1966171168
      %v902 = vunpack.c.0.s8 %v901
      %v903 = vlaneseq
      %v904 = vshrl.u32 %v903, 7
      %v905 = vsub.s32 %v902, %v904
      %v906 = vrot.slane %v878, %v905
      %v907 = vcombine.high %v885, %v885
      %v908 = vcombine.high %v892, %v892
      %v909 = vcombine.high %v899, %v899
      %v910 = vcombine.high %v906, %v906
      %v911 = vcombine.high %v175, %v175
      %v913 = vunpack.c.l.s4 1966171168
      %v914 = vunpack.c.0.s8 %v913
      %v915 = vlaneseq
      %v916 = vshrl.u32 %v915, 7
      %v917 = vsub.s32 %v914, %v916
      %v918 = vrot.slane %v175, %v917
      %v920 = vunpack.c.l.s4 1966171168
      %v921 = vunpack.c.0.s8 %v920
      %v922 = vlaneseq
      %v923 = vshrl.u32 %v922, 7
      %v924 = vsub.s32 %v921, %v923
      %v925 = vrot.slane %v911, %v924
      %v926 = vcombine.high %v918, %v918
      %v927 = vcombine.high %v925, %v925
      %v929 = vunpack.c.l.s4 1966171168
      %v930 = vunpack.c.0.s8 %v929
      %v931 = vlaneseq
      %v932 = vshrl.u32 %v931, 7
      %v933 = vsub.s32 %v930, %v932
      %v934 = vrot.slane %v918, %v933
      %v936 = vunpack.c.l.s4 1966171168
      %v937 = vunpack.c.0.s8 %v936
      %v938 = vlaneseq
      %v939 = vshrl.u32 %v938, 7
      %v940 = vsub.s32 %v937, %v939
      %v941 = vrot.slane %v925, %v940
      %v943 = vunpack.c.l.s4 1966171168
      %v944 = vunpack.c.0.s8 %v943
      %v945 = vlaneseq
      %v946 = vshrl.u32 %v945, 7
      %v947 = vsub.s32 %v944, %v946
      %v948 = vrot.slane %v926, %v947
      %v950 = vunpack.c.l.s4 1966171168
      %v951 = vunpack.c.0.s8 %v950
      %v952 = vlaneseq
      %v953 = vshrl.u32 %v952, 7
      %v954 = vsub.s32 %v951, %v953
      %v955 = vrot.slane %v927, %v954
      %v956 = vcombine.high %v934, %v934
      %v957 = vcombine.high %v941, %v941
      %v958 = vcombine.high %v948, %v948
      %v959 = vcombine.high %v955, %v955
      %v960 = vcombine.high %v176, %v176
      %v962 = vunpack.c.l.s4 1966171168
      %v963 = vunpack.c.0.s8 %v962
      %v964 = vlaneseq
      %v965 = vshrl.u32 %v964, 7
      %v966 = vsub.s32 %v963, %v965
      %v967 = vrot.slane %v176, %v966
      %v969 = vunpack.c.l.s4 1966171168
      %v970 = vunpack.c.0.s8 %v969
      %v971 = vlaneseq
      %v972 = vshrl.u32 %v971, 7
      %v973 = vsub.s32 %v970, %v972
      %v974 = vrot.slane %v960, %v973
      %v975 = vcombine.high %v967, %v967
      %v976 = vcombine.high %v974, %v974
      %v978 = vunpack.c.l.s4 1966171168
      %v979 = vunpack.c.0.s8 %v978
      %v980 = vlaneseq
      %v981 = vshrl.u32 %v980, 7
      %v982 = vsub.s32 %v979, %v981
      %v983 = vrot.slane %v967, %v982
      %v985 = vunpack.c.l.s4 1966171168
      %v986 = vunpack.c.0.s8 %v985
      %v987 = vlaneseq
      %v988 = vshrl.u32 %v987, 7
      %v989 = vsub.s32 %v986, %v988
      %v990 = vrot.slane %v974, %v989
      %v992 = vunpack.c.l.s4 1966171168
      %v993 = vunpack.c.0.s8 %v992
      %v994 = vlaneseq
      %v995 = vshrl.u32 %v994, 7
      %v996 = vsub.s32 %v993, %v995
      %v997 = vrot.slane %v975, %v996
      %v999 = vunpack.c.l.s4 1966171168
      %v1000 = vunpack.c.0.s8 %v999
      %v1001 = vlaneseq
      %v1002 = vshrl.u32 %v1001, 7
      %v1003 = vsub.s32 %v1000, %v1002
      %v1004 = vrot.slane %v976, %v1003
      %v1005 = vcombine.high %v983, %v983
      %v1006 = vcombine.high %v990, %v990
      %v1007 = vcombine.high %v997, %v997
      %v1008 = vcombine.high %v1004, %v1004
      %v1009 = vcombine.high %v177, %v177
      %v1011 = vunpack.c.l.s4 1966171168
      %v1012 = vunpack.c.0.s8 %v1011
      %v1013 = vlaneseq
      %v1014 = vshrl.u32 %v1013, 7
      %v1015 = vsub.s32 %v1012, %v1014
      %v1016 = vrot.slane %v177, %v1015
      %v1018 = vunpack.c.l.s4 1966171168
      %v1019 = vunpack.c.0.s8 %v1018
      %v1020 = vlaneseq
      %v1021 = vshrl.u32 %v1020, 7
      %v1022 = vsub.s32 %v1019, %v1021
      %v1023 = vrot.slane %v1009, %v1022
      %v1024 = vcombine.high %v1016, %v1016
      %v1025 = vcombine.high %v1023, %v1023
      %v1027 = vunpack.c.l.s4 1966171168
      %v1028 = vunpack.c.0.s8 %v1027
      %v1029 = vlaneseq
      %v1030 = vshrl.u32 %v1029, 7
      %v1031 = vsub.s32 %v1028, %v1030
      %v1032 = vrot.slane %v1016, %v1031
      %v1034 = vunpack.c.l.s4 1966171168
      %v1035 = vunpack.c.0.s8 %v1034
      %v1036 = vlaneseq
      %v1037 = vshrl.u32 %v1036, 7
      %v1038 = vsub.s32 %v1035, %v1037
      %v1039 = vrot.slane %v1023, %v1038
      %v1041 = vunpack.c.l.s4 1966171168
      %v1042 = vunpack.c.0.s8 %v1041
      %v1043 = vlaneseq
      %v1044 = vshrl.u32 %v1043, 7
      %v1045 = vsub.s32 %v1042, %v1044
      %v1046 = vrot.slane %v1024, %v1045
      %v1048 = vunpack.c.l.s4 1966171168
      %v1049 = vunpack.c.0.s8 %v1048
      %v1050 = vlaneseq
      %v1051 = vshrl.u32 %v1050, 7
      %v1052 = vsub.s32 %v1049, %v1051
      %v1053 = vrot.slane %v1025, %v1052
      %v1054 = vcombine.high %v1032, %v1032
      %v1055 = vcombine.high %v1039, %v1039
      %v1056 = vcombine.high %v1046, %v1046
      %v1057 = vcombine.high %v1053, %v1053
      %v1058 = vcombine.high %v178, %v178
      %v1060 = vunpack.c.l.s4 1966171168
      %v1061 = vunpack.c.0.s8 %v1060
      %v1062 = vlaneseq
      %v1063 = vshrl.u32 %v1062, 7
      %v1064 = vsub.s32 %v1061, %v1063
      %v1065 = vrot.slane %v178, %v1064
      %v1067 = vunpack.c.l.s4 1966171168
      %v1068 = vunpack.c.0.s8 %v1067
      %v1069 = vlaneseq
      %v1070 = vshrl.u32 %v1069, 7
      %v1071 = vsub.s32 %v1068, %v1070
      %v1072 = vrot.slane %v1058, %v1071
      %v1073 = vcombine.high %v1065, %v1065
      %v1074 = vcombine.high %v1072, %v1072
      %v1076 = vunpack.c.l.s4 1966171168
      %v1077 = vunpack.c.0.s8 %v1076
      %v1078 = vlaneseq
      %v1079 = vshrl.u32 %v1078, 7
      %v1080 = vsub.s32 %v1077, %v1079
      %v1081 = vrot.slane %v1065, %v1080
      %v1083 = vunpack.c.l.s4 1966171168
      %v1084 = vunpack.c.0.s8 %v1083
      %v1085 = vlaneseq
      %v1086 = vshrl.u32 %v1085, 7
      %v1087 = vsub.s32 %v1084, %v1086
      %v1088 = vrot.slane %v1072, %v1087
      %v1090 = vunpack.c.l.s4 1966171168
      %v1091 = vunpack.c.0.s8 %v1090
      %v1092 = vlaneseq
      %v1093 = vshrl.u32 %v1092, 7
      %v1094 = vsub.s32 %v1091, %v1093
      %v1095 = vrot.slane %v1073, %v1094
      %v1097 = vunpack.c.l.s4 1966171168
      %v1098 = vunpack.c.0.s8 %v1097
      %v1099 = vlaneseq
      %v1100 = vshrl.u32 %v1099, 7
      %v1101 = vsub.s32 %v1098, %v1100
      %v1102 = vrot.slane %v1074, %v1101
      %v1103 = vcombine.high %v1081, %v1081
      %v1104 = vcombine.high %v1088, %v1088
      %v1105 = vcombine.high %v1095, %v1095
      %v1106 = vcombine.high %v1102, %v1102
      %v1107 = vcombine.high %v179, %v179
      %v1109 = vunpack.c.l.s4 1966171168
      %v1110 = vunpack.c.0.s8 %v1109
      %v1111 = vlaneseq
      %v1112 = vshrl.u32 %v1111, 7
      %v1113 = vsub.s32 %v1110, %v1112
      %v1114 = vrot.slane %v179, %v1113
      %v1116 = vunpack.c.l.s4 1966171168
      %v1117 = vunpack.c.0.s8 %v1116
      %v1118 = vlaneseq
      %v1119 = vshrl.u32 %v1118, 7
      %v1120 = vsub.s32 %v1117, %v1119
      %v1121 = vrot.slane %v1107, %v1120
      %v1122 = vcombine.high %v1114, %v1114
      %v1123 = vcombine.high %v1121, %v1121
      %v1125 = vunpack.c.l.s4 1966171168
      %v1126 = vunpack.c.0.s8 %v1125
      %v1127 = vlaneseq
      %v1128 = vshrl.u32 %v1127, 7
      %v1129 = vsub.s32 %v1126, %v1128
      %v1130 = vrot.slane %v1114, %v1129
      %v1132 = vunpack.c.l.s4 1966171168
      %v1133 = vunpack.c.0.s8 %v1132
      %v1134 = vlaneseq
      %v1135 = vshrl.u32 %v1134, 7
      %v1136 = vsub.s32 %v1133, %v1135
      %v1137 = vrot.slane %v1121, %v1136
      %v1139 = vunpack.c.l.s4 1966171168
      %v1140 = vunpack.c.0.s8 %v1139
      %v1141 = vlaneseq
      %v1142 = vshrl.u32 %v1141, 7
      %v1143 = vsub.s32 %v1140, %v1142
      %v1144 = vrot.slane %v1122, %v1143
      %v1146 = vunpack.c.l.s4 1966171168
      %v1147 = vunpack.c.0.s8 %v1146
      %v1148 = vlaneseq
      %v1149 = vshrl.u32 %v1148, 7
      %v1150 = vsub.s32 %v1147, %v1149
      %v1151 = vrot.slane %v1123, %v1150
      %v1152 = vcombine.high %v1130, %v1130
      %v1153 = vcombine.high %v1137, %v1137
      %v1154 = vcombine.high %v1144, %v1144
      %v1155 = vcombine.high %v1151, %v1151
      %v1156 = vcombine.high %v180, %v180
      %v1158 = vunpack.c.l.s4 1966171168
      %v1159 = vunpack.c.0.s8 %v1158
      %v1160 = vlaneseq
      %v1161 = vshrl.u32 %v1160, 7
      %v1162 = vsub.s32 %v1159, %v1161
      %v1163 = vrot.slane %v180, %v1162
      %v1165 = vunpack.c.l.s4 1966171168
      %v1166 = vunpack.c.0.s8 %v1165
      %v1167 = vlaneseq
      %v1168 = vshrl.u32 %v1167, 7
      %v1169 = vsub.s32 %v1166, %v1168
      %v1170 = vrot.slane %v1156, %v1169
      %v1171 = vcombine.high %v1163, %v1163
      %v1172 = vcombine.high %v1170, %v1170
      %v1174 = vunpack.c.l.s4 1966171168
      %v1175 = vunpack.c.0.s8 %v1174
      %v1176 = vlaneseq
      %v1177 = vshrl.u32 %v1176, 7
      %v1178 = vsub.s32 %v1175, %v1177
      %v1179 = vrot.slane %v1163, %v1178
      %v1181 = vunpack.c.l.s4 1966171168
      %v1182 = vunpack.c.0.s8 %v1181
      %v1183 = vlaneseq
      %v1184 = vshrl.u32 %v1183, 7
      %v1185 = vsub.s32 %v1182, %v1184
      %v1186 = vrot.slane %v1170, %v1185
      %v1188 = vunpack.c.l.s4 1966171168
      %v1189 = vunpack.c.0.s8 %v1188
      %v1190 = vlaneseq
      %v1191 = vshrl.u32 %v1190, 7
      %v1192 = vsub.s32 %v1189, %v1191
      %v1193 = vrot.slane %v1171, %v1192
      %v1195 = vunpack.c.l.s4 1966171168
      %v1196 = vunpack.c.0.s8 %v1195
      %v1197 = vlaneseq
      %v1198 = vshrl.u32 %v1197, 7
      %v1199 = vsub.s32 %v1196, %v1198
      %v1200 = vrot.slane %v1172, %v1199
      %v1201 = vcombine.high %v1179, %v1179
      %v1202 = vcombine.high %v1186, %v1186
      %v1203 = vcombine.high %v1193, %v1193
      %v1204 = vcombine.high %v1200, %v1200
      %v1205 = vcombine.high %v181, %v181
      %v1207 = vunpack.c.l.s4 1966171168
      %v1208 = vunpack.c.0.s8 %v1207
      %v1209 = vlaneseq
      %v1210 = vshrl.u32 %v1209, 7
      %v1211 = vsub.s32 %v1208, %v1210
      %v1212 = vrot.slane %v181, %v1211
      %v1214 = vunpack.c.l.s4 1966171168
      %v1215 = vunpack.c.0.s8 %v1214
      %v1216 = vlaneseq
      %v1217 = vshrl.u32 %v1216, 7
      %v1218 = vsub.s32 %v1215, %v1217
      %v1219 = vrot.slane %v1205, %v1218
      %v1220 = vcombine.high %v1212, %v1212
      %v1221 = vcombine.high %v1219, %v1219
      %v1223 = vunpack.c.l.s4 1966171168
      %v1224 = vunpack.c.0.s8 %v1223
      %v1225 = vlaneseq
      %v1226 = vshrl.u32 %v1225, 7
      %v1227 = vsub.s32 %v1224, %v1226
      %v1228 = vrot.slane %v1212, %v1227
      %v1230 = vunpack.c.l.s4 1966171168
      %v1231 = vunpack.c.0.s8 %v1230
      %v1232 = vlaneseq
      %v1233 = vshrl.u32 %v1232, 7
      %v1234 = vsub.s32 %v1231, %v1233
      %v1235 = vrot.slane %v1219, %v1234
      %v1237 = vunpack.c.l.s4 1966171168
      %v1238 = vunpack.c.0.s8 %v1237
      %v1239 = vlaneseq
      %v1240 = vshrl.u32 %v1239, 7
      %v1241 = vsub.s32 %v1238, %v1240
      %v1242 = vrot.slane %v1220, %v1241
      %v1244 = vunpack.c.l.s4 1966171168
      %v1245 = vunpack.c.0.s8 %v1244
      %v1246 = vlaneseq
      %v1247 = vshrl.u32 %v1246, 7
      %v1248 = vsub.s32 %v1245, %v1247
      %v1249 = vrot.slane %v1221, %v1248
      %v1250 = vcombine.high %v1228, %v1228
      %v1251 = vcombine.high %v1235, %v1235
      %v1252 = vcombine.high %v1242, %v1242
      %v1253 = vcombine.high %v1249, %v1249
      %v1254 = vcombine.high %v182, %v182
      %v1256 = vunpack.c.l.s4 1966171168
      %v1257 = vunpack.c.0.s8 %v1256
      %v1258 = vlaneseq
      %v1259 = vshrl.u32 %v1258, 7
      %v1260 = vsub.s32 %v1257, %v1259
      %v1261 = vrot.slane %v182, %v1260
      %v1263 = vunpack.c.l.s4 1966171168
      %v1264 = vunpack.c.0.s8 %v1263
      %v1265 = vlaneseq
      %v1266 = vshrl.u32 %v1265, 7
      %v1267 = vsub.s32 %v1264, %v1266
      %v1268 = vrot.slane %v1254, %v1267
      %v1269 = vcombine.high %v1261, %v1261
      %v1270 = vcombine.high %v1268, %v1268
      %v1272 = vunpack.c.l.s4 1966171168
      %v1273 = vunpack.c.0.s8 %v1272
      %v1274 = vlaneseq
      %v1275 = vshrl.u32 %v1274, 7
      %v1276 = vsub.s32 %v1273, %v1275
      %v1277 = vrot.slane %v1261, %v1276
      %v1279 = vunpack.c.l.s4 1966171168
      %v1280 = vunpack.c.0.s8 %v1279
      %v1281 = vlaneseq
      %v1282 = vshrl.u32 %v1281, 7
      %v1283 = vsub.s32 %v1280, %v1282
      %v1284 = vrot.slane %v1268, %v1283
      %v1286 = vunpack.c.l.s4 1966171168
      %v1287 = vunpack.c.0.s8 %v1286
      %v1288 = vlaneseq
      %v1289 = vshrl.u32 %v1288, 7
      %v1290 = vsub.s32 %v1287, %v1289
      %v1291 = vrot.slane %v1269, %v1290
      %v1293 = vunpack.c.l.s4 1966171168
      %v1294 = vunpack.c.0.s8 %v1293
      %v1295 = vlaneseq
      %v1296 = vshrl.u32 %v1295, 7
      %v1297 = vsub.s32 %v1294, %v1296
      %v1298 = vrot.slane %v1270, %v1297
      %v1299 = vcombine.high %v1277, %v1277
      %v1300 = vcombine.high %v1284, %v1284
      %v1301 = vcombine.high %v1291, %v1291
      %v1302 = vcombine.high %v1298, %v1298
      %v1303 = vcombine.high %v183, %v183
      %v1305 = vunpack.c.l.s4 1966171168
      %v1306 = vunpack.c.0.s8 %v1305
      %v1307 = vlaneseq
      %v1308 = vshrl.u32 %v1307, 7
      %v1309 = vsub.s32 %v1306, %v1308
      %v1310 = vrot.slane %v183, %v1309
      %v1312 = vunpack.c.l.s4 1966171168
      %v1313 = vunpack.c.0.s8 %v1312
      %v1314 = vlaneseq
      %v1315 = vshrl.u32 %v1314, 7
      %v1316 = vsub.s32 %v1313, %v1315
      %v1317 = vrot.slane %v1303, %v1316
      %v1318 = vcombine.high %v1310, %v1310
      %v1319 = vcombine.high %v1317, %v1317
      %v1321 = vunpack.c.l.s4 1966171168
      %v1322 = vunpack.c.0.s8 %v1321
      %v1323 = vlaneseq
      %v1324 = vshrl.u32 %v1323, 7
      %v1325 = vsub.s32 %v1322, %v1324
      %v1326 = vrot.slane %v1310, %v1325
      %v1328 = vunpack.c.l.s4 1966171168
      %v1329 = vunpack.c.0.s8 %v1328
      %v1330 = vlaneseq
      %v1331 = vshrl.u32 %v1330, 7
      %v1332 = vsub.s32 %v1329, %v1331
      %v1333 = vrot.slane %v1317, %v1332
      %v1335 = vunpack.c.l.s4 1966171168
      %v1336 = vunpack.c.0.s8 %v1335
      %v1337 = vlaneseq
      %v1338 = vshrl.u32 %v1337, 7
      %v1339 = vsub.s32 %v1336, %v1338
      %v1340 = vrot.slane %v1318, %v1339
      %v1342 = vunpack.c.l.s4 1966171168
      %v1343 = vunpack.c.0.s8 %v1342
      %v1344 = vlaneseq
      %v1345 = vshrl.u32 %v1344, 7
      %v1346 = vsub.s32 %v1343, %v1345
      %v1347 = vrot.slane %v1319, %v1346
      %v1348 = vcombine.high %v1326, %v1326
      %v1349 = vcombine.high %v1333, %v1333
      %v1350 = vcombine.high %v1340, %v1340
      %v1351 = vcombine.high %v1347, %v1347
      %v1352 = vcombine.high %v184, %v184
      %v1354 = vunpack.c.l.s4 1966171168
      %v1355 = vunpack.c.0.s8 %v1354
      %v1356 = vlaneseq
      %v1357 = vshrl.u32 %v1356, 7
      %v1358 = vsub.s32 %v1355, %v1357
      %v1359 = vrot.slane %v184, %v1358
      %v1361 = vunpack.c.l.s4 1966171168
      %v1362 = vunpack.c.0.s8 %v1361
      %v1363 = vlaneseq
      %v1364 = vshrl.u32 %v1363, 7
      %v1365 = vsub.s32 %v1362, %v1364
      %v1366 = vrot.slane %v1352, %v1365
      %v1367 = vcombine.high %v1359, %v1359
      %v1368 = vcombine.high %v1366, %v1366
      %v1370 = vunpack.c.l.s4 1966171168
      %v1371 = vunpack.c.0.s8 %v1370
      %v1372 = vlaneseq
      %v1373 = vshrl.u32 %v1372, 7
      %v1374 = vsub.s32 %v1371, %v1373
      %v1375 = vrot.slane %v1359, %v1374
      %v1377 = vunpack.c.l.s4 1966171168
      %v1378 = vunpack.c.0.s8 %v1377
      %v1379 = vlaneseq
      %v1380 = vshrl.u32 %v1379, 7
      %v1381 = vsub.s32 %v1378, %v1380
      %v1382 = vrot.slane %v1366, %v1381
      %v1384 = vunpack.c.l.s4 1966171168
      %v1385 = vunpack.c.0.s8 %v1384
      %v1386 = vlaneseq
      %v1387 = vshrl.u32 %v1386, 7
      %v1388 = vsub.s32 %v1385, %v1387
      %v1389 = vrot.slane %v1367, %v1388
      %v1391 = vunpack.c.l.s4 1966171168
      %v1392 = vunpack.c.0.s8 %v1391
      %v1393 = vlaneseq
      %v1394 = vshrl.u32 %v1393, 7
      %v1395 = vsub.s32 %v1392, %v1394
      %v1396 = vrot.slane %v1368, %v1395
      %v1397 = vcombine.high %v1375, %v1375
      %v1398 = vcombine.high %v1382, %v1382
      %v1399 = vcombine.high %v1389, %v1389
      %v1400 = vcombine.high %v1396, %v1396
      %v1401 = vcombine.high %v185, %v185
      %v1403 = vunpack.c.l.s4 1966171168
      %v1404 = vunpack.c.0.s8 %v1403
      %v1405 = vlaneseq
      %v1406 = vshrl.u32 %v1405, 7
      %v1407 = vsub.s32 %v1404, %v1406
      %v1408 = vrot.slane %v185, %v1407
      %v1410 = vunpack.c.l.s4 1966171168
      %v1411 = vunpack.c.0.s8 %v1410
      %v1412 = vlaneseq
      %v1413 = vshrl.u32 %v1412, 7
      %v1414 = vsub.s32 %v1411, %v1413
      %v1415 = vrot.slane %v1401, %v1414
      %v1416 = vcombine.high %v1408, %v1408
      %v1417 = vcombine.high %v1415, %v1415
      %v1419 = vunpack.c.l.s4 1966171168
      %v1420 = vunpack.c.0.s8 %v1419
      %v1421 = vlaneseq
      %v1422 = vshrl.u32 %v1421, 7
      %v1423 = vsub.s32 %v1420, %v1422
      %v1424 = vrot.slane %v1408, %v1423
      %v1426 = vunpack.c.l.s4 1966171168
      %v1427 = vunpack.c.0.s8 %v1426
      %v1428 = vlaneseq
      %v1429 = vshrl.u32 %v1428, 7
      %v1430 = vsub.s32 %v1427, %v1429
      %v1431 = vrot.slane %v1415, %v1430
      %v1433 = vunpack.c.l.s4 1966171168
      %v1434 = vunpack.c.0.s8 %v1433
      %v1435 = vlaneseq
      %v1436 = vshrl.u32 %v1435, 7
      %v1437 = vsub.s32 %v1434, %v1436
      %v1438 = vrot.slane %v1416, %v1437
      %v1440 = vunpack.c.l.s4 1966171168
      %v1441 = vunpack.c.0.s8 %v1440
      %v1442 = vlaneseq
      %v1443 = vshrl.u32 %v1442, 7
      %v1444 = vsub.s32 %v1441, %v1443
      %v1445 = vrot.slane %v1417, %v1444
      %v1446 = vcombine.high %v1424, %v1424
      %v1447 = vcombine.high %v1431, %v1431
      %v1448 = vcombine.high %v1438, %v1438
      %v1449 = vcombine.high %v1445, %v1445
      %v1450 = vcombine.high %v186, %v186
      %v1452 = vunpack.c.l.s4 1966171168
      %v1453 = vunpack.c.0.s8 %v1452
      %v1454 = vlaneseq
      %v1455 = vshrl.u32 %v1454, 7
      %v1456 = vsub.s32 %v1453, %v1455
      %v1457 = vrot.slane %v186, %v1456
      %v1459 = vunpack.c.l.s4 1966171168
      %v1460 = vunpack.c.0.s8 %v1459
      %v1461 = vlaneseq
      %v1462 = vshrl.u32 %v1461, 7
      %v1463 = vsub.s32 %v1460, %v1462
      %v1464 = vrot.slane %v1450, %v1463
      %v1465 = vcombine.high %v1457, %v1457
      %v1466 = vcombine.high %v1464, %v1464
      %v1468 = vunpack.c.l.s4 1966171168
      %v1469 = vunpack.c.0.s8 %v1468
      %v1470 = vlaneseq
      %v1471 = vshrl.u32 %v1470, 7
      %v1472 = vsub.s32 %v1469, %v1471
      %v1473 = vrot.slane %v1457, %v1472
      %v1475 = vunpack.c.l.s4 1966171168
      %v1476 = vunpack.c.0.s8 %v1475
      %v1477 = vlaneseq
      %v1478 = vshrl.u32 %v1477, 7
      %v1479 = vsub.s32 %v1476, %v1478
      %v1480 = vrot.slane %v1464, %v1479
      %v1482 = vunpack.c.l.s4 1966171168
      %v1483 = vunpack.c.0.s8 %v1482
      %v1484 = vlaneseq
      %v1485 = vshrl.u32 %v1484, 7
      %v1486 = vsub.s32 %v1483, %v1485
      %v1487 = vrot.slane %v1465, %v1486
      %v1489 = vunpack.c.l.s4 1966171168
      %v1490 = vunpack.c.0.s8 %v1489
      %v1491 = vlaneseq
      %v1492 = vshrl.u32 %v1491, 7
      %v1493 = vsub.s32 %v1490, %v1492
      %v1494 = vrot.slane %v1466, %v1493
      %v1495 = vcombine.high %v1473, %v1473
      %v1496 = vcombine.high %v1480, %v1480
      %v1497 = vcombine.high %v1487, %v1487
      %v1498 = vcombine.high %v1494, %v1494
      %v1499 = vcombine.high %v187, %v187
      %v1501 = vunpack.c.l.s4 1966171168
      %v1502 = vunpack.c.0.s8 %v1501
      %v1503 = vlaneseq
      %v1504 = vshrl.u32 %v1503, 7
      %v1505 = vsub.s32 %v1502, %v1504
      %v1506 = vrot.slane %v187, %v1505
      %v1508 = vunpack.c.l.s4 1966171168
      %v1509 = vunpack.c.0.s8 %v1508
      %v1510 = vlaneseq
      %v1511 = vshrl.u32 %v1510, 7
      %v1512 = vsub.s32 %v1509, %v1511
      %v1513 = vrot.slane %v1499, %v1512
      %v1514 = vcombine.high %v1506, %v1506
      %v1515 = vcombine.high %v1513, %v1513
      %v1517 = vunpack.c.l.s4 1966171168
      %v1518 = vunpack.c.0.s8 %v1517
      %v1519 = vlaneseq
      %v1520 = vshrl.u32 %v1519, 7
      %v1521 = vsub.s32 %v1518, %v1520
      %v1522 = vrot.slane %v1506, %v1521
      %v1524 = vunpack.c.l.s4 1966171168
      %v1525 = vunpack.c.0.s8 %v1524
      %v1526 = vlaneseq
      %v1527 = vshrl.u32 %v1526, 7
      %v1528 = vsub.s32 %v1525, %v1527
      %v1529 = vrot.slane %v1513, %v1528
      %v1531 = vunpack.c.l.s4 1966171168
      %v1532 = vunpack.c.0.s8 %v1531
      %v1533 = vlaneseq
      %v1534 = vshrl.u32 %v1533, 7
      %v1535 = vsub.s32 %v1532, %v1534
      %v1536 = vrot.slane %v1514, %v1535
      %v1538 = vunpack.c.l.s4 1966171168
      %v1539 = vunpack.c.0.s8 %v1538
      %v1540 = vlaneseq
      %v1541 = vshrl.u32 %v1540, 7
      %v1542 = vsub.s32 %v1539, %v1541
      %v1543 = vrot.slane %v1515, %v1542
      %v1544 = vcombine.high %v1522, %v1522
      %v1545 = vcombine.high %v1529, %v1529
      %v1546 = vcombine.high %v1536, %v1536
      %v1547 = vcombine.high %v1543, %v1543
      %v1548 = vcombine.high %v188, %v188
      %v1550 = vunpack.c.l.s4 1966171168
      %v1551 = vunpack.c.0.s8 %v1550
      %v1552 = vlaneseq
      %v1553 = vshrl.u32 %v1552, 7
      %v1554 = vsub.s32 %v1551, %v1553
      %v1555 = vrot.slane %v188, %v1554
      %v1557 = vunpack.c.l.s4 1966171168
      %v1558 = vunpack.c.0.s8 %v1557
      %v1559 = vlaneseq
      %v1560 = vshrl.u32 %v1559, 7
      %v1561 = vsub.s32 %v1558, %v1560
      %v1562 = vrot.slane %v1548, %v1561
      %v1563 = vcombine.high %v1555, %v1555
      %v1564 = vcombine.high %v1562, %v1562
      %v1566 = vunpack.c.l.s4 1966171168
      %v1567 = vunpack.c.0.s8 %v1566
      %v1568 = vlaneseq
      %v1569 = vshrl.u32 %v1568, 7
      %v1570 = vsub.s32 %v1567, %v1569
      %v1571 = vrot.slane %v1555, %v1570
      %v1573 = vunpack.c.l.s4 1966171168
      %v1574 = vunpack.c.0.s8 %v1573
      %v1575 = vlaneseq
      %v1576 = vshrl.u32 %v1575, 7
      %v1577 = vsub.s32 %v1574, %v1576
      %v1578 = vrot.slane %v1562, %v1577
      %v1580 = vunpack.c.l.s4 1966171168
      %v1581 = vunpack.c.0.s8 %v1580
      %v1582 = vlaneseq
      %v1583 = vshrl.u32 %v1582, 7
      %v1584 = vsub.s32 %v1581, %v1583
      %v1585 = vrot.slane %v1563, %v1584
      %v1587 = vunpack.c.l.s4 1966171168
      %v1588 = vunpack.c.0.s8 %v1587
      %v1589 = vlaneseq
      %v1590 = vshrl.u32 %v1589, 7
      %v1591 = vsub.s32 %v1588, %v1590
      %v1592 = vrot.slane %v1564, %v1591
      %v1593 = vcombine.high %v1571, %v1571
      %v1594 = vcombine.high %v1578, %v1578
      %v1595 = vcombine.high %v1585, %v1585
      %v1596 = vcombine.high %v1592, %v1592
      %v1597 = vcombine.high %v189, %v189
      %v1599 = vunpack.c.l.s4 1966171168
      %v1600 = vunpack.c.0.s8 %v1599
      %v1601 = vlaneseq
      %v1602 = vshrl.u32 %v1601, 7
      %v1603 = vsub.s32 %v1600, %v1602
      %v1604 = vrot.slane %v189, %v1603
      %v1606 = vunpack.c.l.s4 1966171168
      %v1607 = vunpack.c.0.s8 %v1606
      %v1608 = vlaneseq
      %v1609 = vshrl.u32 %v1608, 7
      %v1610 = vsub.s32 %v1607, %v1609
      %v1611 = vrot.slane %v1597, %v1610
      %v1612 = vcombine.high %v1604, %v1604
      %v1613 = vcombine.high %v1611, %v1611
      %v1615 = vunpack.c.l.s4 1966171168
      %v1616 = vunpack.c.0.s8 %v1615
      %v1617 = vlaneseq
      %v1618 = vshrl.u32 %v1617, 7
      %v1619 = vsub.s32 %v1616, %v1618
      %v1620 = vrot.slane %v1604, %v1619
      %v1622 = vunpack.c.l.s4 1966171168
      %v1623 = vunpack.c.0.s8 %v1622
      %v1624 = vlaneseq
      %v1625 = vshrl.u32 %v1624, 7
      %v1626 = vsub.s32 %v1623, %v1625
      %v1627 = vrot.slane %v1611, %v1626
      %v1629 = vunpack.c.l.s4 1966171168
      %v1630 = vunpack.c.0.s8 %v1629
      %v1631 = vlaneseq
      %v1632 = vshrl.u32 %v1631, 7
      %v1633 = vsub.s32 %v1630, %v1632
      %v1634 = vrot.slane %v1612, %v1633
      %v1636 = vunpack.c.l.s4 1966171168
      %v1637 = vunpack.c.0.s8 %v1636
      %v1638 = vlaneseq
      %v1639 = vshrl.u32 %v1638, 7
      %v1640 = vsub.s32 %v1637, %v1639
      %v1641 = vrot.slane %v1613, %v1640
      %v1642 = vcombine.high %v1620, %v1620
      %v1643 = vcombine.high %v1627, %v1627
      %v1644 = vcombine.high %v1634, %v1634
      %v1645 = vcombine.high %v1641, %v1641
      %v1646 = vcombine.high %v190, %v190
      %v1648 = vunpack.c.l.s4 1966171168
      %v1649 = vunpack.c.0.s8 %v1648
      %v1650 = vlaneseq
      %v1651 = vshrl.u32 %v1650, 7
      %v1652 = vsub.s32 %v1649, %v1651
      %v1653 = vrot.slane %v190, %v1652
      %v1655 = vunpack.c.l.s4 1966171168
      %v1656 = vunpack.c.0.s8 %v1655
      %v1657 = vlaneseq
      %v1658 = vshrl.u32 %v1657, 7
      %v1659 = vsub.s32 %v1656, %v1658
      %v1660 = vrot.slane %v1646, %v1659
      %v1661 = vcombine.high %v1653, %v1653
      %v1662 = vcombine.high %v1660, %v1660
      %v1664 = vunpack.c.l.s4 1966171168
      %v1665 = vunpack.c.0.s8 %v1664
      %v1666 = vlaneseq
      %v1667 = vshrl.u32 %v1666, 7
      %v1668 = vsub.s32 %v1665, %v1667
      %v1669 = vrot.slane %v1653, %v1668
      %v1671 = vunpack.c.l.s4 1966171168
      %v1672 = vunpack.c.0.s8 %v1671
      %v1673 = vlaneseq
      %v1674 = vshrl.u32 %v1673, 7
      %v1675 = vsub.s32 %v1672, %v1674
      %v1676 = vrot.slane %v1660, %v1675
      %v1678 = vunpack.c.l.s4 1966171168
      %v1679 = vunpack.c.0.s8 %v1678
      %v1680 = vlaneseq
      %v1681 = vshrl.u32 %v1680, 7
      %v1682 = vsub.s32 %v1679, %v1681
      %v1683 = vrot.slane %v1661, %v1682
      %v1685 = vunpack.c.l.s4 1966171168
      %v1686 = vunpack.c.0.s8 %v1685
      %v1687 = vlaneseq
      %v1688 = vshrl.u32 %v1687, 7
      %v1689 = vsub.s32 %v1686, %v1688
      %v1690 = vrot.slane %v1662, %v1689
      %v1691 = vcombine.high %v1669, %v1669
      %v1692 = vcombine.high %v1676, %v1676
      %v1693 = vcombine.high %v1683, %v1683
      %v1694 = vcombine.high %v1690, %v1690
      %v1695 = vcombine.high %v191, %v191
      %v1697 = vunpack.c.l.s4 1966171168
      %v1698 = vunpack.c.0.s8 %v1697
      %v1699 = vlaneseq
      %v1700 = vshrl.u32 %v1699, 7
      %v1701 = vsub.s32 %v1698, %v1700
      %v1702 = vrot.slane %v191, %v1701
      %v1704 = vunpack.c.l.s4 1966171168
      %v1705 = vunpack.c.0.s8 %v1704
      %v1706 = vlaneseq
      %v1707 = vshrl.u32 %v1706, 7
      %v1708 = vsub.s32 %v1705, %v1707
      %v1709 = vrot.slane %v1695, %v1708
      %v1710 = vcombine.high %v1702, %v1702
      %v1711 = vcombine.high %v1709, %v1709
      %v1713 = vunpack.c.l.s4 1966171168
      %v1714 = vunpack.c.0.s8 %v1713
      %v1715 = vlaneseq
      %v1716 = vshrl.u32 %v1715, 7
      %v1717 = vsub.s32 %v1714, %v1716
      %v1718 = vrot.slane %v1702, %v1717
      %v1720 = vunpack.c.l.s4 1966171168
      %v1721 = vunpack.c.0.s8 %v1720
      %v1722 = vlaneseq
      %v1723 = vshrl.u32 %v1722, 7
      %v1724 = vsub.s32 %v1721, %v1723
      %v1725 = vrot.slane %v1709, %v1724
      %v1727 = vunpack.c.l.s4 1966171168
      %v1728 = vunpack.c.0.s8 %v1727
      %v1729 = vlaneseq
      %v1730 = vshrl.u32 %v1729, 7
      %v1731 = vsub.s32 %v1728, %v1730
      %v1732 = vrot.slane %v1710, %v1731
      %v1734 = vunpack.c.l.s4 1966171168
      %v1735 = vunpack.c.0.s8 %v1734
      %v1736 = vlaneseq
      %v1737 = vshrl.u32 %v1736, 7
      %v1738 = vsub.s32 %v1735, %v1737
      %v1739 = vrot.slane %v1711, %v1738
      %v1740 = vcombine.high %v1718, %v1718
      %v1741 = vcombine.high %v1725, %v1725
      %v1742 = vcombine.high %v1732, %v1732
      %v1743 = vcombine.high %v1739, %v1739
      %v1744 = vcombine.high %v192, %v192
      %v1746 = vunpack.c.l.s4 1966171168
      %v1747 = vunpack.c.0.s8 %v1746
      %v1748 = vlaneseq
      %v1749 = vshrl.u32 %v1748, 7
      %v1750 = vsub.s32 %v1747, %v1749
      %v1751 = vrot.slane %v192, %v1750
      %v1753 = vunpack.c.l.s4 1966171168
      %v1754 = vunpack.c.0.s8 %v1753
      %v1755 = vlaneseq
      %v1756 = vshrl.u32 %v1755, 7
      %v1757 = vsub.s32 %v1754, %v1756
      %v1758 = vrot.slane %v1744, %v1757
      %v1759 = vcombine.high %v1751, %v1751
      %v1760 = vcombine.high %v1758, %v1758
      %v1762 = vunpack.c.l.s4 1966171168
      %v1763 = vunpack.c.0.s8 %v1762
      %v1764 = vlaneseq
      %v1765 = vshrl.u32 %v1764, 7
      %v1766 = vsub.s32 %v1763, %v1765
      %v1767 = vrot.slane %v1751, %v1766
      %v1769 = vunpack.c.l.s4 1966171168
      %v1770 = vunpack.c.0.s8 %v1769
      %v1771 = vlaneseq
      %v1772 = vshrl.u32 %v1771, 7
      %v1773 = vsub.s32 %v1770, %v1772
      %v1774 = vrot.slane %v1758, %v1773
      %v1776 = vunpack.c.l.s4 1966171168
      %v1777 = vunpack.c.0.s8 %v1776
      %v1778 = vlaneseq
      %v1779 = vshrl.u32 %v1778, 7
      %v1780 = vsub.s32 %v1777, %v1779
      %v1781 = vrot.slane %v1759, %v1780
      %v1783 = vunpack.c.l.s4 1966171168
      %v1784 = vunpack.c.0.s8 %v1783
      %v1785 = vlaneseq
      %v1786 = vshrl.u32 %v1785, 7
      %v1787 = vsub.s32 %v1784, %v1786
      %v1788 = vrot.slane %v1760, %v1787
      %v1789 = vcombine.high %v1767, %v1767
      %v1790 = vcombine.high %v1774, %v1774
      %v1791 = vcombine.high %v1781, %v1781
      %v1792 = vcombine.high %v1788, %v1788
      %v1793 = vlaneseq
      %v1794 = vshrl.u32 %v1793, 7
      %v1795 = vsub.s32 0, %v1794
      %v1796 = vrot.slane %v248, %v1795
      %v1797 = vlaneseq
      %v1798 = vshrl.u32 %v1797, 7
      %v1799 = vsub.s32 0, %v1798
      %v1800 = vrot.slane %v262, %v1799
      %v1801 = vlaneseq
      %v1802 = vshrl.u32 %v1801, 7
      %v1803 = vsub.s32 0, %v1802
      %v1804 = vrot.slane %v270, %v1803
      %v1805 = vlaneseq
      %v1806 = vshrl.u32 %v1805, 7
      %v1807 = vsub.s32 0, %v1806
      %v1808 = vrot.slane %v272, %v1807
      %v1809 = vlaneseq
      %v1810 = vshrl.u32 %v1809, 7
      %v1811 = vsub.s32 0, %v1810
      %v1812 = vrot.slane %v255, %v1811
      %v1813 = vlaneseq
      %v1814 = vshrl.u32 %v1813, 7
      %v1815 = vsub.s32 0, %v1814
      %v1816 = vrot.slane %v269, %v1815
      %v1817 = vlaneseq
      %v1818 = vshrl.u32 %v1817, 7
      %v1819 = vsub.s32 0, %v1818
      %v1820 = vrot.slane %v271, %v1819
      %v1821 = vlaneseq
      %v1822 = vshrl.u32 %v1821, 7
      %v1823 = vsub.s32 0, %v1822
      %v1824 = vrot.slane %v273, %v1823
      %v1825 = vlaneseq
      %v1826 = vshrl.u32 %v1825, 7
      %v1827 = vsub.s32 0, %v1826
      %v1828 = vrot.slane %v297, %v1827
      %v1829 = vlaneseq
      %v1830 = vshrl.u32 %v1829, 7
      %v1831 = vsub.s32 0, %v1830
      %v1832 = vrot.slane %v311, %v1831
      %v1833 = vlaneseq
      %v1834 = vshrl.u32 %v1833, 7
      %v1835 = vsub.s32 0, %v1834
      %v1836 = vrot.slane %v319, %v1835
      %v1837 = vlaneseq
      %v1838 = vshrl.u32 %v1837, 7
      %v1839 = vsub.s32 0, %v1838
      %v1840 = vrot.slane %v321, %v1839
      %v1841 = vlaneseq
      %v1842 = vshrl.u32 %v1841, 7
      %v1843 = vsub.s32 0, %v1842
      %v1844 = vrot.slane %v304, %v1843
      %v1845 = vlaneseq
      %v1846 = vshrl.u32 %v1845, 7
      %v1847 = vsub.s32 0, %v1846
      %v1848 = vrot.slane %v318, %v1847
      %v1849 = vlaneseq
      %v1850 = vshrl.u32 %v1849, 7
      %v1851 = vsub.s32 0, %v1850
      %v1852 = vrot.slane %v320, %v1851
      %v1853 = vlaneseq
      %v1854 = vshrl.u32 %v1853, 7
      %v1855 = vsub.s32 0, %v1854
      %v1856 = vrot.slane %v322, %v1855
      %v1857 = vlaneseq
      %v1858 = vshrl.u32 %v1857, 7
      %v1859 = vsub.s32 0, %v1858
      %v1860 = vrot.slane %v346, %v1859
      %v1861 = vlaneseq
      %v1862 = vshrl.u32 %v1861, 7
      %v1863 = vsub.s32 0, %v1862
      %v1864 = vrot.slane %v360, %v1863
      %v1865 = vlaneseq
      %v1866 = vshrl.u32 %v1865, 7
      %v1867 = vsub.s32 0, %v1866
      %v1868 = vrot.slane %v368, %v1867
      %v1869 = vlaneseq
      %v1870 = vshrl.u32 %v1869, 7
      %v1871 = vsub.s32 0, %v1870
      %v1872 = vrot.slane %v370, %v1871
      %v1873 = vlaneseq
      %v1874 = vshrl.u32 %v1873, 7
      %v1875 = vsub.s32 0, %v1874
      %v1876 = vrot.slane %v353, %v1875
      %v1877 = vlaneseq
      %v1878 = vshrl.u32 %v1877, 7
      %v1879 = vsub.s32 0, %v1878
      %v1880 = vrot.slane %v367, %v1879
      %v1881 = vlaneseq
      %v1882 = vshrl.u32 %v1881, 7
      %v1883 = vsub.s32 0, %v1882
      %v1884 = vrot.slane %v369, %v1883
      %v1885 = vlaneseq
      %v1886 = vshrl.u32 %v1885, 7
      %v1887 = vsub.s32 0, %v1886
      %v1888 = vrot.slane %v371, %v1887
      %v1889 = vlaneseq
      %v1890 = vshrl.u32 %v1889, 7
      %v1891 = vsub.s32 0, %v1890
      %v1892 = vrot.slane %v395, %v1891
      %v1893 = vlaneseq
      %v1894 = vshrl.u32 %v1893, 7
      %v1895 = vsub.s32 0, %v1894
      %v1896 = vrot.slane %v409, %v1895
      %v1897 = vlaneseq
      %v1898 = vshrl.u32 %v1897, 7
      %v1899 = vsub.s32 0, %v1898
      %v1900 = vrot.slane %v417, %v1899
      %v1901 = vlaneseq
      %v1902 = vshrl.u32 %v1901, 7
      %v1903 = vsub.s32 0, %v1902
      %v1904 = vrot.slane %v419, %v1903
      %v1905 = vlaneseq
      %v1906 = vshrl.u32 %v1905, 7
      %v1907 = vsub.s32 0, %v1906
      %v1908 = vrot.slane %v402, %v1907
      %v1909 = vlaneseq
      %v1910 = vshrl.u32 %v1909, 7
      %v1911 = vsub.s32 0, %v1910
      %v1912 = vrot.slane %v416, %v1911
      %v1913 = vlaneseq
      %v1914 = vshrl.u32 %v1913, 7
      %v1915 = vsub.s32 0, %v1914
      %v1916 = vrot.slane %v418, %v1915
      %v1917 = vlaneseq
      %v1918 = vshrl.u32 %v1917, 7
      %v1919 = vsub.s32 0, %v1918
      %v1920 = vrot.slane %v420, %v1919
      %v1921 = vlaneseq
      %v1922 = vshrl.u32 %v1921, 7
      %v1923 = vsub.s32 0, %v1922
      %v1924 = vrot.slane %v444, %v1923
      %v1925 = vlaneseq
      %v1926 = vshrl.u32 %v1925, 7
      %v1927 = vsub.s32 0, %v1926
      %v1928 = vrot.slane %v458, %v1927
      %v1929 = vlaneseq
      %v1930 = vshrl.u32 %v1929, 7
      %v1931 = vsub.s32 0, %v1930
      %v1932 = vrot.slane %v466, %v1931
      %v1933 = vlaneseq
      %v1934 = vshrl.u32 %v1933, 7
      %v1935 = vsub.s32 0, %v1934
      %v1936 = vrot.slane %v468, %v1935
      %v1937 = vlaneseq
      %v1938 = vshrl.u32 %v1937, 7
      %v1939 = vsub.s32 0, %v1938
      %v1940 = vrot.slane %v451, %v1939
      %v1941 = vlaneseq
      %v1942 = vshrl.u32 %v1941, 7
      %v1943 = vsub.s32 0, %v1942
      %v1944 = vrot.slane %v465, %v1943
      %v1945 = vlaneseq
      %v1946 = vshrl.u32 %v1945, 7
      %v1947 = vsub.s32 0, %v1946
      %v1948 = vrot.slane %v467, %v1947
      %v1949 = vlaneseq
      %v1950 = vshrl.u32 %v1949, 7
      %v1951 = vsub.s32 0, %v1950
      %v1952 = vrot.slane %v469, %v1951
      %v1953 = vlaneseq
      %v1954 = vshrl.u32 %v1953, 7
      %v1955 = vsub.s32 0, %v1954
      %v1956 = vrot.slane %v493, %v1955
      %v1957 = vlaneseq
      %v1958 = vshrl.u32 %v1957, 7
      %v1959 = vsub.s32 0, %v1958
      %v1960 = vrot.slane %v507, %v1959
      %v1961 = vlaneseq
      %v1962 = vshrl.u32 %v1961, 7
      %v1963 = vsub.s32 0, %v1962
      %v1964 = vrot.slane %v515, %v1963
      %v1965 = vlaneseq
      %v1966 = vshrl.u32 %v1965, 7
      %v1967 = vsub.s32 0, %v1966
      %v1968 = vrot.slane %v517, %v1967
      %v1969 = vlaneseq
      %v1970 = vshrl.u32 %v1969, 7
      %v1971 = vsub.s32 0, %v1970
      %v1972 = vrot.slane %v500, %v1971
      %v1973 = vlaneseq
      %v1974 = vshrl.u32 %v1973, 7
      %v1975 = vsub.s32 0, %v1974
      %v1976 = vrot.slane %v514, %v1975
      %v1977 = vlaneseq
      %v1978 = vshrl.u32 %v1977, 7
      %v1979 = vsub.s32 0, %v1978
      %v1980 = vrot.slane %v516, %v1979
      %v1981 = vlaneseq
      %v1982 = vshrl.u32 %v1981, 7
      %v1983 = vsub.s32 0, %v1982
      %v1984 = vrot.slane %v518, %v1983
      %v1985 = vlaneseq
      %v1986 = vshrl.u32 %v1985, 7
      %v1987 = vsub.s32 0, %v1986
      %v1988 = vrot.slane %v542, %v1987
      %v1989 = vlaneseq
      %v1990 = vshrl.u32 %v1989, 7
      %v1991 = vsub.s32 0, %v1990
      %v1992 = vrot.slane %v556, %v1991
      %v1993 = vlaneseq
      %v1994 = vshrl.u32 %v1993, 7
      %v1995 = vsub.s32 0, %v1994
      %v1996 = vrot.slane %v564, %v1995
      %v1997 = vlaneseq
      %v1998 = vshrl.u32 %v1997, 7
      %v1999 = vsub.s32 0, %v1998
      %v2000 = vrot.slane %v566, %v1999
      %v2001 = vlaneseq
      %v2002 = vshrl.u32 %v2001, 7
      %v2003 = vsub.s32 0, %v2002
      %v2004 = vrot.slane %v549, %v2003
      %v2005 = vlaneseq
      %v2006 = vshrl.u32 %v2005, 7
      %v2007 = vsub.s32 0, %v2006
      %v2008 = vrot.slane %v563, %v2007
      %v2009 = vlaneseq
      %v2010 = vshrl.u32 %v2009, 7
      %v2011 = vsub.s32 0, %v2010
      %v2012 = vrot.slane %v565, %v2011
      %v2013 = vlaneseq
      %v2014 = vshrl.u32 %v2013, 7
      %v2015 = vsub.s32 0, %v2014
      %v2016 = vrot.slane %v567, %v2015
      %v2017 = vlaneseq
      %v2018 = vshrl.u32 %v2017, 7
      %v2019 = vsub.s32 0, %v2018
      %v2020 = vrot.slane %v591, %v2019
      %v2021 = vlaneseq
      %v2022 = vshrl.u32 %v2021, 7
      %v2023 = vsub.s32 0, %v2022
      %v2024 = vrot.slane %v605, %v2023
      %v2025 = vlaneseq
      %v2026 = vshrl.u32 %v2025, 7
      %v2027 = vsub.s32 0, %v2026
      %v2028 = vrot.slane %v613, %v2027
      %v2029 = vlaneseq
      %v2030 = vshrl.u32 %v2029, 7
      %v2031 = vsub.s32 0, %v2030
      %v2032 = vrot.slane %v615, %v2031
      %v2033 = vlaneseq
      %v2034 = vshrl.u32 %v2033, 7
      %v2035 = vsub.s32 0, %v2034
      %v2036 = vrot.slane %v598, %v2035
      %v2037 = vlaneseq
      %v2038 = vshrl.u32 %v2037, 7
      %v2039 = vsub.s32 0, %v2038
      %v2040 = vrot.slane %v612, %v2039
      %v2041 = vlaneseq
      %v2042 = vshrl.u32 %v2041, 7
      %v2043 = vsub.s32 0, %v2042
      %v2044 = vrot.slane %v614, %v2043
      %v2045 = vlaneseq
      %v2046 = vshrl.u32 %v2045, 7
      %v2047 = vsub.s32 0, %v2046
      %v2048 = vrot.slane %v616, %v2047
      %v2049 = vlaneseq
      %v2050 = vshrl.u32 %v2049, 7
      %v2051 = vsub.s32 0, %v2050
      %v2052 = vrot.slane %v640, %v2051
      %v2053 = vlaneseq
      %v2054 = vshrl.u32 %v2053, 7
      %v2055 = vsub.s32 0, %v2054
      %v2056 = vrot.slane %v654, %v2055
      %v2057 = vlaneseq
      %v2058 = vshrl.u32 %v2057, 7
      %v2059 = vsub.s32 0, %v2058
      %v2060 = vrot.slane %v662, %v2059
      %v2061 = vlaneseq
      %v2062 = vshrl.u32 %v2061, 7
      %v2063 = vsub.s32 0, %v2062
      %v2064 = vrot.slane %v664, %v2063
      %v2065 = vlaneseq
      %v2066 = vshrl.u32 %v2065, 7
      %v2067 = vsub.s32 0, %v2066
      %v2068 = vrot.slane %v647, %v2067
      %v2069 = vlaneseq
      %v2070 = vshrl.u32 %v2069, 7
      %v2071 = vsub.s32 0, %v2070
      %v2072 = vrot.slane %v661, %v2071
      %v2073 = vlaneseq
      %v2074 = vshrl.u32 %v2073, 7
      %v2075 = vsub.s32 0, %v2074
      %v2076 = vrot.slane %v663, %v2075
      %v2077 = vlaneseq
      %v2078 = vshrl.u32 %v2077, 7
      %v2079 = vsub.s32 0, %v2078
      %v2080 = vrot.slane %v665, %v2079
      %v2081 = vlaneseq
      %v2082 = vshrl.u32 %v2081, 7
      %v2083 = vsub.s32 0, %v2082
      %v2084 = vrot.slane %v689, %v2083
      %v2085 = vlaneseq
      %v2086 = vshrl.u32 %v2085, 7
      %v2087 = vsub.s32 0, %v2086
      %v2088 = vrot.slane %v703, %v2087
      %v2089 = vlaneseq
      %v2090 = vshrl.u32 %v2089, 7
      %v2091 = vsub.s32 0, %v2090
      %v2092 = vrot.slane %v711, %v2091
      %v2093 = vlaneseq
      %v2094 = vshrl.u32 %v2093, 7
      %v2095 = vsub.s32 0, %v2094
      %v2096 = vrot.slane %v713, %v2095
      %v2097 = vlaneseq
      %v2098 = vshrl.u32 %v2097, 7
      %v2099 = vsub.s32 0, %v2098
      %v2100 = vrot.slane %v696, %v2099
      %v2101 = vlaneseq
      %v2102 = vshrl.u32 %v2101, 7
      %v2103 = vsub.s32 0, %v2102
      %v2104 = vrot.slane %v710, %v2103
      %v2105 = vlaneseq
      %v2106 = vshrl.u32 %v2105, 7
      %v2107 = vsub.s32 0, %v2106
      %v2108 = vrot.slane %v712, %v2107
      %v2109 = vlaneseq
      %v2110 = vshrl.u32 %v2109, 7
      %v2111 = vsub.s32 0, %v2110
      %v2112 = vrot.slane %v714, %v2111
      %v2113 = vlaneseq
      %v2114 = vshrl.u32 %v2113, 7
      %v2115 = vsub.s32 0, %v2114
      %v2116 = vrot.slane %v738, %v2115
      %v2117 = vlaneseq
      %v2118 = vshrl.u32 %v2117, 7
      %v2119 = vsub.s32 0, %v2118
      %v2120 = vrot.slane %v752, %v2119
      %v2121 = vlaneseq
      %v2122 = vshrl.u32 %v2121, 7
      %v2123 = vsub.s32 0, %v2122
      %v2124 = vrot.slane %v760, %v2123
      %v2125 = vlaneseq
      %v2126 = vshrl.u32 %v2125, 7
      %v2127 = vsub.s32 0, %v2126
      %v2128 = vrot.slane %v762, %v2127
      %v2129 = vlaneseq
      %v2130 = vshrl.u32 %v2129, 7
      %v2131 = vsub.s32 0, %v2130
      %v2132 = vrot.slane %v745, %v2131
      %v2133 = vlaneseq
      %v2134 = vshrl.u32 %v2133, 7
      %v2135 = vsub.s32 0, %v2134
      %v2136 = vrot.slane %v759, %v2135
      %v2137 = vlaneseq
      %v2138 = vshrl.u32 %v2137, 7
      %v2139 = vsub.s32 0, %v2138
      %v2140 = vrot.slane %v761, %v2139
      %v2141 = vlaneseq
      %v2142 = vshrl.u32 %v2141, 7
      %v2143 = vsub.s32 0, %v2142
      %v2144 = vrot.slane %v763, %v2143
      %v2145 = vlaneseq
      %v2146 = vshrl.u32 %v2145, 7
      %v2147 = vsub.s32 0, %v2146
      %v2148 = vrot.slane %v787, %v2147
      %v2149 = vlaneseq
      %v2150 = vshrl.u32 %v2149, 7
      %v2151 = vsub.s32 0, %v2150
      %v2152 = vrot.slane %v801, %v2151
      %v2153 = vlaneseq
      %v2154 = vshrl.u32 %v2153, 7
      %v2155 = vsub.s32 0, %v2154
      %v2156 = vrot.slane %v809, %v2155
      %v2157 = vlaneseq
      %v2158 = vshrl.u32 %v2157, 7
      %v2159 = vsub.s32 0, %v2158
      %v2160 = vrot.slane %v811, %v2159
      %v2161 = vlaneseq
      %v2162 = vshrl.u32 %v2161, 7
      %v2163 = vsub.s32 0, %v2162
      %v2164 = vrot.slane %v794, %v2163
      %v2165 = vlaneseq
      %v2166 = vshrl.u32 %v2165, 7
      %v2167 = vsub.s32 0, %v2166
      %v2168 = vrot.slane %v808, %v2167
      %v2169 = vlaneseq
      %v2170 = vshrl.u32 %v2169, 7
      %v2171 = vsub.s32 0, %v2170
      %v2172 = vrot.slane %v810, %v2171
      %v2173 = vlaneseq
      %v2174 = vshrl.u32 %v2173, 7
      %v2175 = vsub.s32 0, %v2174
      %v2176 = vrot.slane %v812, %v2175
      %v2177 = vlaneseq
      %v2178 = vshrl.u32 %v2177, 7
      %v2179 = vsub.s32 0, %v2178
      %v2180 = vrot.slane %v836, %v2179
      %v2181 = vlaneseq
      %v2182 = vshrl.u32 %v2181, 7
      %v2183 = vsub.s32 0, %v2182
      %v2184 = vrot.slane %v850, %v2183
      %v2185 = vlaneseq
      %v2186 = vshrl.u32 %v2185, 7
      %v2187 = vsub.s32 0, %v2186
      %v2188 = vrot.slane %v858, %v2187
      %v2189 = vlaneseq
      %v2190 = vshrl.u32 %v2189, 7
      %v2191 = vsub.s32 0, %v2190
      %v2192 = vrot.slane %v860, %v2191
      %v2193 = vlaneseq
      %v2194 = vshrl.u32 %v2193, 7
      %v2195 = vsub.s32 0, %v2194
      %v2196 = vrot.slane %v843, %v2195
      %v2197 = vlaneseq
      %v2198 = vshrl.u32 %v2197, 7
      %v2199 = vsub.s32 0, %v2198
      %v2200 = vrot.slane %v857, %v2199
      %v2201 = vlaneseq
      %v2202 = vshrl.u32 %v2201, 7
      %v2203 = vsub.s32 0, %v2202
      %v2204 = vrot.slane %v859, %v2203
      %v2205 = vlaneseq
      %v2206 = vshrl.u32 %v2205, 7
      %v2207 = vsub.s32 0, %v2206
      %v2208 = vrot.slane %v861, %v2207
      %v2209 = vlaneseq
      %v2210 = vshrl.u32 %v2209, 7
      %v2211 = vsub.s32 0, %v2210
      %v2212 = vrot.slane %v885, %v2211
      %v2213 = vlaneseq
      %v2214 = vshrl.u32 %v2213, 7
      %v2215 = vsub.s32 0, %v2214
      %v2216 = vrot.slane %v899, %v2215
      %v2217 = vlaneseq
      %v2218 = vshrl.u32 %v2217, 7
      %v2219 = vsub.s32 0, %v2218
      %v2220 = vrot.slane %v907, %v2219
      %v2221 = vlaneseq
      %v2222 = vshrl.u32 %v2221, 7
      %v2223 = vsub.s32 0, %v2222
      %v2224 = vrot.slane %v909, %v2223
      %v2225 = vlaneseq
      %v2226 = vshrl.u32 %v2225, 7
      %v2227 = vsub.s32 0, %v2226
      %v2228 = vrot.slane %v892, %v2227
      %v2229 = vlaneseq
      %v2230 = vshrl.u32 %v2229, 7
      %v2231 = vsub.s32 0, %v2230
      %v2232 = vrot.slane %v906, %v2231
      %v2233 = vlaneseq
      %v2234 = vshrl.u32 %v2233, 7
      %v2235 = vsub.s32 0, %v2234
      %v2236 = vrot.slane %v908, %v2235
      %v2237 = vlaneseq
      %v2238 = vshrl.u32 %v2237, 7
      %v2239 = vsub.s32 0, %v2238
      %v2240 = vrot.slane %v910, %v2239
      %v2241 = vlaneseq
      %v2242 = vshrl.u32 %v2241, 7
      %v2243 = vsub.s32 0, %v2242
      %v2244 = vrot.slane %v934, %v2243
      %v2245 = vlaneseq
      %v2246 = vshrl.u32 %v2245, 7
      %v2247 = vsub.s32 0, %v2246
      %v2248 = vrot.slane %v948, %v2247
      %v2249 = vlaneseq
      %v2250 = vshrl.u32 %v2249, 7
      %v2251 = vsub.s32 0, %v2250
      %v2252 = vrot.slane %v956, %v2251
      %v2253 = vlaneseq
      %v2254 = vshrl.u32 %v2253, 7
      %v2255 = vsub.s32 0, %v2254
      %v2256 = vrot.slane %v958, %v2255
      %v2257 = vlaneseq
      %v2258 = vshrl.u32 %v2257, 7
      %v2259 = vsub.s32 0, %v2258
      %v2260 = vrot.slane %v941, %v2259
      %v2261 = vlaneseq
      %v2262 = vshrl.u32 %v2261, 7
      %v2263 = vsub.s32 0, %v2262
      %v2264 = vrot.slane %v955, %v2263
      %v2265 = vlaneseq
      %v2266 = vshrl.u32 %v2265, 7
      %v2267 = vsub.s32 0, %v2266
      %v2268 = vrot.slane %v957, %v2267
      %v2269 = vlaneseq
      %v2270 = vshrl.u32 %v2269, 7
      %v2271 = vsub.s32 0, %v2270
      %v2272 = vrot.slane %v959, %v2271
      %v2273 = vlaneseq
      %v2274 = vshrl.u32 %v2273, 7
      %v2275 = vsub.s32 0, %v2274
      %v2276 = vrot.slane %v983, %v2275
      %v2277 = vlaneseq
      %v2278 = vshrl.u32 %v2277, 7
      %v2279 = vsub.s32 0, %v2278
      %v2280 = vrot.slane %v997, %v2279
      %v2281 = vlaneseq
      %v2282 = vshrl.u32 %v2281, 7
      %v2283 = vsub.s32 0, %v2282
      %v2284 = vrot.slane %v1005, %v2283
      %v2285 = vlaneseq
      %v2286 = vshrl.u32 %v2285, 7
      %v2287 = vsub.s32 0, %v2286
      %v2288 = vrot.slane %v1007, %v2287
      %v2289 = vlaneseq
      %v2290 = vshrl.u32 %v2289, 7
      %v2291 = vsub.s32 0, %v2290
      %v2292 = vrot.slane %v990, %v2291
      %v2293 = vlaneseq
      %v2294 = vshrl.u32 %v2293, 7
      %v2295 = vsub.s32 0, %v2294
      %v2296 = vrot.slane %v1004, %v2295
      %v2297 = vlaneseq
      %v2298 = vshrl.u32 %v2297, 7
      %v2299 = vsub.s32 0, %v2298
      %v2300 = vrot.slane %v1006, %v2299
      %v2301 = vlaneseq
      %v2302 = vshrl.u32 %v2301, 7
      %v2303 = vsub.s32 0, %v2302
      %v2304 = vrot.slane %v1008, %v2303
      %v2305 = vlaneseq
      %v2306 = vshrl.u32 %v2305, 7
      %v2307 = vsub.s32 0, %v2306
      %v2308 = vrot.slane %v1032, %v2307
      %v2309 = vlaneseq
      %v2310 = vshrl.u32 %v2309, 7
      %v2311 = vsub.s32 0, %v2310
      %v2312 = vrot.slane %v1046, %v2311
      %v2313 = vlaneseq
      %v2314 = vshrl.u32 %v2313, 7
      %v2315 = vsub.s32 0, %v2314
      %v2316 = vrot.slane %v1054, %v2315
      %v2317 = vlaneseq
      %v2318 = vshrl.u32 %v2317, 7
      %v2319 = vsub.s32 0, %v2318
      %v2320 = vrot.slane %v1056, %v2319
      %v2321 = vlaneseq
      %v2322 = vshrl.u32 %v2321, 7
      %v2323 = vsub.s32 0, %v2322
      %v2324 = vrot.slane %v1039, %v2323
      %v2325 = vlaneseq
      %v2326 = vshrl.u32 %v2325, 7
      %v2327 = vsub.s32 0, %v2326
      %v2328 = vrot.slane %v1053, %v2327
      %v2329 = vlaneseq
      %v2330 = vshrl.u32 %v2329, 7
      %v2331 = vsub.s32 0, %v2330
      %v2332 = vrot.slane %v1055, %v2331
      %v2333 = vlaneseq
      %v2334 = vshrl.u32 %v2333, 7
      %v2335 = vsub.s32 0, %v2334
      %v2336 = vrot.slane %v1057, %v2335
      %v2337 = vlaneseq
      %v2338 = vshrl.u32 %v2337, 7
      %v2339 = vsub.s32 0, %v2338
      %v2340 = vrot.slane %v1081, %v2339
      %v2341 = vlaneseq
      %v2342 = vshrl.u32 %v2341, 7
      %v2343 = vsub.s32 0, %v2342
      %v2344 = vrot.slane %v1095, %v2343
      %v2345 = vlaneseq
      %v2346 = vshrl.u32 %v2345, 7
      %v2347 = vsub.s32 0, %v2346
      %v2348 = vrot.slane %v1103, %v2347
      %v2349 = vlaneseq
      %v2350 = vshrl.u32 %v2349, 7
      %v2351 = vsub.s32 0, %v2350
      %v2352 = vrot.slane %v1105, %v2351
      %v2353 = vlaneseq
      %v2354 = vshrl.u32 %v2353, 7
      %v2355 = vsub.s32 0, %v2354
      %v2356 = vrot.slane %v1088, %v2355
      %v2357 = vlaneseq
      %v2358 = vshrl.u32 %v2357, 7
      %v2359 = vsub.s32 0, %v2358
      %v2360 = vrot.slane %v1102, %v2359
      %v2361 = vlaneseq
      %v2362 = vshrl.u32 %v2361, 7
      %v2363 = vsub.s32 0, %v2362
      %v2364 = vrot.slane %v1104, %v2363
      %v2365 = vlaneseq
      %v2366 = vshrl.u32 %v2365, 7
      %v2367 = vsub.s32 0, %v2366
      %v2368 = vrot.slane %v1106, %v2367
      %v2369 = vlaneseq
      %v2370 = vshrl.u32 %v2369, 7
      %v2371 = vsub.s32 0, %v2370
      %v2372 = vrot.slane %v1130, %v2371
      %v2373 = vlaneseq
      %v2374 = vshrl.u32 %v2373, 7
      %v2375 = vsub.s32 0, %v2374
      %v2376 = vrot.slane %v1144, %v2375
      %v2377 = vlaneseq
      %v2378 = vshrl.u32 %v2377, 7
      %v2379 = vsub.s32 0, %v2378
      %v2380 = vrot.slane %v1152, %v2379
      %v2381 = vlaneseq
      %v2382 = vshrl.u32 %v2381, 7
      %v2383 = vsub.s32 0, %v2382
      %v2384 = vrot.slane %v1154, %v2383
      %v2385 = vlaneseq
      %v2386 = vshrl.u32 %v2385, 7
      %v2387 = vsub.s32 0, %v2386
      %v2388 = vrot.slane %v1137, %v2387
      %v2389 = vlaneseq
      %v2390 = vshrl.u32 %v2389, 7
      %v2391 = vsub.s32 0, %v2390
      %v2392 = vrot.slane %v1151, %v2391
      %v2393 = vlaneseq
      %v2394 = vshrl.u32 %v2393, 7
      %v2395 = vsub.s32 0, %v2394
      %v2396 = vrot.slane %v1153, %v2395
      %v2397 = vlaneseq
      %v2398 = vshrl.u32 %v2397, 7
      %v2399 = vsub.s32 0, %v2398
      %v2400 = vrot.slane %v1155, %v2399
      %v2401 = vlaneseq
      %v2402 = vshrl.u32 %v2401, 7
      %v2403 = vsub.s32 0, %v2402
      %v2404 = vrot.slane %v1179, %v2403
      %v2405 = vlaneseq
      %v2406 = vshrl.u32 %v2405, 7
      %v2407 = vsub.s32 0, %v2406
      %v2408 = vrot.slane %v1193, %v2407
      %v2409 = vlaneseq
      %v2410 = vshrl.u32 %v2409, 7
      %v2411 = vsub.s32 0, %v2410
      %v2412 = vrot.slane %v1201, %v2411
      %v2413 = vlaneseq
      %v2414 = vshrl.u32 %v2413, 7
      %v2415 = vsub.s32 0, %v2414
      %v2416 = vrot.slane %v1203, %v2415
      %v2417 = vlaneseq
      %v2418 = vshrl.u32 %v2417, 7
      %v2419 = vsub.s32 0, %v2418
      %v2420 = vrot.slane %v1186, %v2419
      %v2421 = vlaneseq
      %v2422 = vshrl.u32 %v2421, 7
      %v2423 = vsub.s32 0, %v2422
      %v2424 = vrot.slane %v1200, %v2423
      %v2425 = vlaneseq
      %v2426 = vshrl.u32 %v2425, 7
      %v2427 = vsub.s32 0, %v2426
      %v2428 = vrot.slane %v1202, %v2427
      %v2429 = vlaneseq
      %v2430 = vshrl.u32 %v2429, 7
      %v2431 = vsub.s32 0, %v2430
      %v2432 = vrot.slane %v1204, %v2431
      %v2433 = vlaneseq
      %v2434 = vshrl.u32 %v2433, 7
      %v2435 = vsub.s32 0, %v2434
      %v2436 = vrot.slane %v1228, %v2435
      %v2437 = vlaneseq
      %v2438 = vshrl.u32 %v2437, 7
      %v2439 = vsub.s32 0, %v2438
      %v2440 = vrot.slane %v1242, %v2439
      %v2441 = vlaneseq
      %v2442 = vshrl.u32 %v2441, 7
      %v2443 = vsub.s32 0, %v2442
      %v2444 = vrot.slane %v1250, %v2443
      %v2445 = vlaneseq
      %v2446 = vshrl.u32 %v2445, 7
      %v2447 = vsub.s32 0, %v2446
      %v2448 = vrot.slane %v1252, %v2447
      %v2449 = vlaneseq
      %v2450 = vshrl.u32 %v2449, 7
      %v2451 = vsub.s32 0, %v2450
      %v2452 = vrot.slane %v1235, %v2451
      %v2453 = vlaneseq
      %v2454 = vshrl.u32 %v2453, 7
      %v2455 = vsub.s32 0, %v2454
      %v2456 = vrot.slane %v1249, %v2455
      %v2457 = vlaneseq
      %v2458 = vshrl.u32 %v2457, 7
      %v2459 = vsub.s32 0, %v2458
      %v2460 = vrot.slane %v1251, %v2459
      %v2461 = vlaneseq
      %v2462 = vshrl.u32 %v2461, 7
      %v2463 = vsub.s32 0, %v2462
      %v2464 = vrot.slane %v1253, %v2463
      %v2465 = vlaneseq
      %v2466 = vshrl.u32 %v2465, 7
      %v2467 = vsub.s32 0, %v2466
      %v2468 = vrot.slane %v1277, %v2467
      %v2469 = vlaneseq
      %v2470 = vshrl.u32 %v2469, 7
      %v2471 = vsub.s32 0, %v2470
      %v2472 = vrot.slane %v1291, %v2471
      %v2473 = vlaneseq
      %v2474 = vshrl.u32 %v2473, 7
      %v2475 = vsub.s32 0, %v2474
      %v2476 = vrot.slane %v1299, %v2475
      %v2477 = vlaneseq
      %v2478 = vshrl.u32 %v2477, 7
      %v2479 = vsub.s32 0, %v2478
      %v2480 = vrot.slane %v1301, %v2479
      %v2481 = vlaneseq
      %v2482 = vshrl.u32 %v2481, 7
      %v2483 = vsub.s32 0, %v2482
      %v2484 = vrot.slane %v1284, %v2483
      %v2485 = vlaneseq
      %v2486 = vshrl.u32 %v2485, 7
      %v2487 = vsub.s32 0, %v2486
      %v2488 = vrot.slane %v1298, %v2487
      %v2489 = vlaneseq
      %v2490 = vshrl.u32 %v2489, 7
      %v2491 = vsub.s32 0, %v2490
      %v2492 = vrot.slane %v1300, %v2491
      %v2493 = vlaneseq
      %v2494 = vshrl.u32 %v2493, 7
      %v2495 = vsub.s32 0, %v2494
      %v2496 = vrot.slane %v1302, %v2495
      %v2497 = vlaneseq
      %v2498 = vshrl.u32 %v2497, 7
      %v2499 = vsub.s32 0, %v2498
      %v2500 = vrot.slane %v1326, %v2499
      %v2501 = vlaneseq
      %v2502 = vshrl.u32 %v2501, 7
      %v2503 = vsub.s32 0, %v2502
      %v2504 = vrot.slane %v1340, %v2503
      %v2505 = vlaneseq
      %v2506 = vshrl.u32 %v2505, 7
      %v2507 = vsub.s32 0, %v2506
      %v2508 = vrot.slane %v1348, %v2507
      %v2509 = vlaneseq
      %v2510 = vshrl.u32 %v2509, 7
      %v2511 = vsub.s32 0, %v2510
      %v2512 = vrot.slane %v1350, %v2511
      %v2513 = vlaneseq
      %v2514 = vshrl.u32 %v2513, 7
      %v2515 = vsub.s32 0, %v2514
      %v2516 = vrot.slane %v1333, %v2515
      %v2517 = vlaneseq
      %v2518 = vshrl.u32 %v2517, 7
      %v2519 = vsub.s32 0, %v2518
      %v2520 = vrot.slane %v1347, %v2519
      %v2521 = vlaneseq
      %v2522 = vshrl.u32 %v2521, 7
      %v2523 = vsub.s32 0, %v2522
      %v2524 = vrot.slane %v1349, %v2523
      %v2525 = vlaneseq
      %v2526 = vshrl.u32 %v2525, 7
      %v2527 = vsub.s32 0, %v2526
      %v2528 = vrot.slane %v1351, %v2527
      %v2529 = vlaneseq
      %v2530 = vshrl.u32 %v2529, 7
      %v2531 = vsub.s32 0, %v2530
      %v2532 = vrot.slane %v1375, %v2531
      %v2533 = vlaneseq
      %v2534 = vshrl.u32 %v2533, 7
      %v2535 = vsub.s32 0, %v2534
      %v2536 = vrot.slane %v1389, %v2535
      %v2537 = vlaneseq
      %v2538 = vshrl.u32 %v2537, 7
      %v2539 = vsub.s32 0, %v2538
      %v2540 = vrot.slane %v1397, %v2539
      %v2541 = vlaneseq
      %v2542 = vshrl.u32 %v2541, 7
      %v2543 = vsub.s32 0, %v2542
      %v2544 = vrot.slane %v1399, %v2543
      %v2545 = vlaneseq
      %v2546 = vshrl.u32 %v2545, 7
      %v2547 = vsub.s32 0, %v2546
      %v2548 = vrot.slane %v1382, %v2547
      %v2549 = vlaneseq
      %v2550 = vshrl.u32 %v2549, 7
      %v2551 = vsub.s32 0, %v2550
      %v2552 = vrot.slane %v1396, %v2551
      %v2553 = vlaneseq
      %v2554 = vshrl.u32 %v2553, 7
      %v2555 = vsub.s32 0, %v2554
      %v2556 = vrot.slane %v1398, %v2555
      %v2557 = vlaneseq
      %v2558 = vshrl.u32 %v2557, 7
      %v2559 = vsub.s32 0, %v2558
      %v2560 = vrot.slane %v1400, %v2559
      %v2561 = vlaneseq
      %v2562 = vshrl.u32 %v2561, 7
      %v2563 = vsub.s32 0, %v2562
      %v2564 = vrot.slane %v1424, %v2563
      %v2565 = vlaneseq
      %v2566 = vshrl.u32 %v2565, 7
      %v2567 = vsub.s32 0, %v2566
      %v2568 = vrot.slane %v1438, %v2567
      %v2569 = vlaneseq
      %v2570 = vshrl.u32 %v2569, 7
      %v2571 = vsub.s32 0, %v2570
      %v2572 = vrot.slane %v1446, %v2571
      %v2573 = vlaneseq
      %v2574 = vshrl.u32 %v2573, 7
      %v2575 = vsub.s32 0, %v2574
      %v2576 = vrot.slane %v1448, %v2575
      %v2577 = vlaneseq
      %v2578 = vshrl.u32 %v2577, 7
      %v2579 = vsub.s32 0, %v2578
      %v2580 = vrot.slane %v1431, %v2579
      %v2581 = vlaneseq
      %v2582 = vshrl.u32 %v2581, 7
      %v2583 = vsub.s32 0, %v2582
      %v2584 = vrot.slane %v1445, %v2583
      %v2585 = vlaneseq
      %v2586 = vshrl.u32 %v2585, 7
      %v2587 = vsub.s32 0, %v2586
      %v2588 = vrot.slane %v1447, %v2587
      %v2589 = vlaneseq
      %v2590 = vshrl.u32 %v2589, 7
      %v2591 = vsub.s32 0, %v2590
      %v2592 = vrot.slane %v1449, %v2591
      %v2593 = vlaneseq
      %v2594 = vshrl.u32 %v2593, 7
      %v2595 = vsub.s32 0, %v2594
      %v2596 = vrot.slane %v1473, %v2595
      %v2597 = vlaneseq
      %v2598 = vshrl.u32 %v2597, 7
      %v2599 = vsub.s32 0, %v2598
      %v2600 = vrot.slane %v1487, %v2599
      %v2601 = vlaneseq
      %v2602 = vshrl.u32 %v2601, 7
      %v2603 = vsub.s32 0, %v2602
      %v2604 = vrot.slane %v1495, %v2603
      %v2605 = vlaneseq
      %v2606 = vshrl.u32 %v2605, 7
      %v2607 = vsub.s32 0, %v2606
      %v2608 = vrot.slane %v1497, %v2607
      %v2609 = vlaneseq
      %v2610 = vshrl.u32 %v2609, 7
      %v2611 = vsub.s32 0, %v2610
      %v2612 = vrot.slane %v1480, %v2611
      %v2613 = vlaneseq
      %v2614 = vshrl.u32 %v2613, 7
      %v2615 = vsub.s32 0, %v2614
      %v2616 = vrot.slane %v1494, %v2615
      %v2617 = vlaneseq
      %v2618 = vshrl.u32 %v2617, 7
      %v2619 = vsub.s32 0, %v2618
      %v2620 = vrot.slane %v1496, %v2619
      %v2621 = vlaneseq
      %v2622 = vshrl.u32 %v2621, 7
      %v2623 = vsub.s32 0, %v2622
      %v2624 = vrot.slane %v1498, %v2623
      %v2625 = vlaneseq
      %v2626 = vshrl.u32 %v2625, 7
      %v2627 = vsub.s32 0, %v2626
      %v2628 = vrot.slane %v1522, %v2627
      %v2629 = vlaneseq
      %v2630 = vshrl.u32 %v2629, 7
      %v2631 = vsub.s32 0, %v2630
      %v2632 = vrot.slane %v1536, %v2631
      %v2633 = vlaneseq
      %v2634 = vshrl.u32 %v2633, 7
      %v2635 = vsub.s32 0, %v2634
      %v2636 = vrot.slane %v1544, %v2635
      %v2637 = vlaneseq
      %v2638 = vshrl.u32 %v2637, 7
      %v2639 = vsub.s32 0, %v2638
      %v2640 = vrot.slane %v1546, %v2639
      %v2641 = vlaneseq
      %v2642 = vshrl.u32 %v2641, 7
      %v2643 = vsub.s32 0, %v2642
      %v2644 = vrot.slane %v1529, %v2643
      %v2645 = vlaneseq
      %v2646 = vshrl.u32 %v2645, 7
      %v2647 = vsub.s32 0, %v2646
      %v2648 = vrot.slane %v1543, %v2647
      %v2649 = vlaneseq
      %v2650 = vshrl.u32 %v2649, 7
      %v2651 = vsub.s32 0, %v2650
      %v2652 = vrot.slane %v1545, %v2651
      %v2653 = vlaneseq
      %v2654 = vshrl.u32 %v2653, 7
      %v2655 = vsub.s32 0, %v2654
      %v2656 = vrot.slane %v1547, %v2655
      %v2657 = vlaneseq
      %v2658 = vshrl.u32 %v2657, 7
      %v2659 = vsub.s32 0, %v2658
      %v2660 = vrot.slane %v1571, %v2659
      %v2661 = vlaneseq
      %v2662 = vshrl.u32 %v2661, 7
      %v2663 = vsub.s32 0, %v2662
      %v2664 = vrot.slane %v1585, %v2663
      %v2665 = vlaneseq
      %v2666 = vshrl.u32 %v2665, 7
      %v2667 = vsub.s32 0, %v2666
      %v2668 = vrot.slane %v1593, %v2667
      %v2669 = vlaneseq
      %v2670 = vshrl.u32 %v2669, 7
      %v2671 = vsub.s32 0, %v2670
      %v2672 = vrot.slane %v1595, %v2671
      %v2673 = vlaneseq
      %v2674 = vshrl.u32 %v2673, 7
      %v2675 = vsub.s32 0, %v2674
      %v2676 = vrot.slane %v1578, %v2675
      %v2677 = vlaneseq
      %v2678 = vshrl.u32 %v2677, 7
      %v2679 = vsub.s32 0, %v2678
      %v2680 = vrot.slane %v1592, %v2679
      %v2681 = vlaneseq
      %v2682 = vshrl.u32 %v2681, 7
      %v2683 = vsub.s32 0, %v2682
      %v2684 = vrot.slane %v1594, %v2683
      %v2685 = vlaneseq
      %v2686 = vshrl.u32 %v2685, 7
      %v2687 = vsub.s32 0, %v2686
      %v2688 = vrot.slane %v1596, %v2687
      %v2689 = vlaneseq
      %v2690 = vshrl.u32 %v2689, 7
      %v2691 = vsub.s32 0, %v2690
      %v2692 = vrot.slane %v1620, %v2691
      %v2693 = vlaneseq
      %v2694 = vshrl.u32 %v2693, 7
      %v2695 = vsub.s32 0, %v2694
      %v2696 = vrot.slane %v1634, %v2695
      %v2697 = vlaneseq
      %v2698 = vshrl.u32 %v2697, 7
      %v2699 = vsub.s32 0, %v2698
      %v2700 = vrot.slane %v1642, %v2699
      %v2701 = vlaneseq
      %v2702 = vshrl.u32 %v2701, 7
      %v2703 = vsub.s32 0, %v2702
      %v2704 = vrot.slane %v1644, %v2703
      %v2705 = vlaneseq
      %v2706 = vshrl.u32 %v2705, 7
      %v2707 = vsub.s32 0, %v2706
      %v2708 = vrot.slane %v1627, %v2707
      %v2709 = vlaneseq
      %v2710 = vshrl.u32 %v2709, 7
      %v2711 = vsub.s32 0, %v2710
      %v2712 = vrot.slane %v1641, %v2711
      %v2713 = vlaneseq
      %v2714 = vshrl.u32 %v2713, 7
      %v2715 = vsub.s32 0, %v2714
      %v2716 = vrot.slane %v1643, %v2715
      %v2717 = vlaneseq
      %v2718 = vshrl.u32 %v2717, 7
      %v2719 = vsub.s32 0, %v2718
      %v2720 = vrot.slane %v1645, %v2719
      %v2721 = vlaneseq
      %v2722 = vshrl.u32 %v2721, 7
      %v2723 = vsub.s32 0, %v2722
      %v2724 = vrot.slane %v1669, %v2723
      %v2725 = vlaneseq
      %v2726 = vshrl.u32 %v2725, 7
      %v2727 = vsub.s32 0, %v2726
      %v2728 = vrot.slane %v1683, %v2727
      %v2729 = vlaneseq
      %v2730 = vshrl.u32 %v2729, 7
      %v2731 = vsub.s32 0, %v2730
      %v2732 = vrot.slane %v1691, %v2731
      %v2733 = vlaneseq
      %v2734 = vshrl.u32 %v2733, 7
      %v2735 = vsub.s32 0, %v2734
      %v2736 = vrot.slane %v1693, %v2735
      %v2737 = vlaneseq
      %v2738 = vshrl.u32 %v2737, 7
      %v2739 = vsub.s32 0, %v2738
      %v2740 = vrot.slane %v1676, %v2739
      %v2741 = vlaneseq
      %v2742 = vshrl.u32 %v2741, 7
      %v2743 = vsub.s32 0, %v2742
      %v2744 = vrot.slane %v1690, %v2743
      %v2745 = vlaneseq
      %v2746 = vshrl.u32 %v2745, 7
      %v2747 = vsub.s32 0, %v2746
      %v2748 = vrot.slane %v1692, %v2747
      %v2749 = vlaneseq
      %v2750 = vshrl.u32 %v2749, 7
      %v2751 = vsub.s32 0, %v2750
      %v2752 = vrot.slane %v1694, %v2751
      %v2753 = vlaneseq
      %v2754 = vshrl.u32 %v2753, 7
      %v2755 = vsub.s32 0, %v2754
      %v2756 = vrot.slane %v1718, %v2755
      %v2757 = vlaneseq
      %v2758 = vshrl.u32 %v2757, 7
      %v2759 = vsub.s32 0, %v2758
      %v2760 = vrot.slane %v1732, %v2759
      %v2761 = vlaneseq
      %v2762 = vshrl.u32 %v2761, 7
      %v2763 = vsub.s32 0, %v2762
      %v2764 = vrot.slane %v1740, %v2763
      %v2765 = vlaneseq
      %v2766 = vshrl.u32 %v2765, 7
      %v2767 = vsub.s32 0, %v2766
      %v2768 = vrot.slane %v1742, %v2767
      %v2769 = vlaneseq
      %v2770 = vshrl.u32 %v2769, 7
      %v2771 = vsub.s32 0, %v2770
      %v2772 = vrot.slane %v1725, %v2771
      %v2773 = vlaneseq
      %v2774 = vshrl.u32 %v2773, 7
      %v2775 = vsub.s32 0, %v2774
      %v2776 = vrot.slane %v1739, %v2775
      %v2777 = vlaneseq
      %v2778 = vshrl.u32 %v2777, 7
      %v2779 = vsub.s32 0, %v2778
      %v2780 = vrot.slane %v1741, %v2779
      %v2781 = vlaneseq
      %v2782 = vshrl.u32 %v2781, 7
      %v2783 = vsub.s32 0, %v2782
      %v2784 = vrot.slane %v1743, %v2783
      %v2785 = vlaneseq
      %v2786 = vshrl.u32 %v2785, 7
      %v2787 = vsub.s32 0, %v2786
      %v2788 = vrot.slane %v1767, %v2787
      %v2789 = vlaneseq
      %v2790 = vshrl.u32 %v2789, 7
      %v2791 = vsub.s32 0, %v2790
      %v2792 = vrot.slane %v1781, %v2791
      %v2793 = vlaneseq
      %v2794 = vshrl.u32 %v2793, 7
      %v2795 = vsub.s32 0, %v2794
      %v2796 = vrot.slane %v1789, %v2795
      %v2797 = vlaneseq
      %v2798 = vshrl.u32 %v2797, 7
      %v2799 = vsub.s32 0, %v2798
      %v2800 = vrot.slane %v1791, %v2799
      %v2801 = vlaneseq
      %v2802 = vshrl.u32 %v2801, 7
      %v2803 = vsub.s32 0, %v2802
      %v2804 = vrot.slane %v1774, %v2803
      %v2805 = vlaneseq
      %v2806 = vshrl.u32 %v2805, 7
      %v2807 = vsub.s32 0, %v2806
      %v2808 = vrot.slane %v1788, %v2807
      %v2809 = vlaneseq
      %v2810 = vshrl.u32 %v2809, 7
      %v2811 = vsub.s32 0, %v2810
      %v2812 = vrot.slane %v1790, %v2811
      %v2813 = vlaneseq
      %v2814 = vshrl.u32 %v2813, 7
      %v2815 = vsub.s32 0, %v2814
      %v2816 = vrot.slane %v1792, %v2815
      %v2817 = vcombine.low %v1796, %v1800
      %v2818 = vcombine.low %v1804, %v1808
      %v2820 = vunpack.c.l.s4 1983009808
      %v2821 = vunpack.c.0.s8 %v2820
      %v2822 = vlaneseq
      %v2823 = vshrl.u32 %v2822, 7
      %v2824 = vsub.s32 %v2821, %v2823
      %v2825 = vrot.slane %v2817, %v2824
      %v2827 = vunpack.c.l.s4 1983009808
      %v2828 = vunpack.c.0.s8 %v2827
      %v2829 = vlaneseq
      %v2830 = vshrl.u32 %v2829, 7
      %v2831 = vsub.s32 %v2828, %v2830
      %v2832 = vrot.slane %v2818, %v2831
      %v2833 = vcombine.low %v2825, %v2832
      %v2834 = vcombine.low %v1812, %v1816
      %v2835 = vcombine.low %v1820, %v1824
      %v2837 = vunpack.c.l.s4 1983009808
      %v2838 = vunpack.c.0.s8 %v2837
      %v2839 = vlaneseq
      %v2840 = vshrl.u32 %v2839, 7
      %v2841 = vsub.s32 %v2838, %v2840
      %v2842 = vrot.slane %v2834, %v2841
      %v2844 = vunpack.c.l.s4 1983009808
      %v2845 = vunpack.c.0.s8 %v2844
      %v2846 = vlaneseq
      %v2847 = vshrl.u32 %v2846, 7
      %v2848 = vsub.s32 %v2845, %v2847
      %v2849 = vrot.slane %v2835, %v2848
      %v2850 = vcombine.low %v2842, %v2849
      %v2851 = vcombine.low %v1828, %v1832
      %v2852 = vcombine.low %v1836, %v1840
      %v2854 = vunpack.c.l.s4 1983009808
      %v2855 = vunpack.c.0.s8 %v2854
      %v2856 = vlaneseq
      %v2857 = vshrl.u32 %v2856, 7
      %v2858 = vsub.s32 %v2855, %v2857
      %v2859 = vrot.slane %v2851, %v2858
      %v2861 = vunpack.c.l.s4 1983009808
      %v2862 = vunpack.c.0.s8 %v2861
      %v2863 = vlaneseq
      %v2864 = vshrl.u32 %v2863, 7
      %v2865 = vsub.s32 %v2862, %v2864
      %v2866 = vrot.slane %v2852, %v2865
      %v2867 = vcombine.low %v2859, %v2866
      %v2868 = vcombine.low %v1844, %v1848
      %v2869 = vcombine.low %v1852, %v1856
      %v2871 = vunpack.c.l.s4 1983009808
      %v2872 = vunpack.c.0.s8 %v2871
      %v2873 = vlaneseq
      %v2874 = vshrl.u32 %v2873, 7
      %v2875 = vsub.s32 %v2872, %v2874
      %v2876 = vrot.slane %v2868, %v2875
      %v2878 = vunpack.c.l.s4 1983009808
      %v2879 = vunpack.c.0.s8 %v2878
      %v2880 = vlaneseq
      %v2881 = vshrl.u32 %v2880, 7
      %v2882 = vsub.s32 %v2879, %v2881
      %v2883 = vrot.slane %v2869, %v2882
      %v2884 = vcombine.low %v2876, %v2883
      %v2885 = vcombine.low %v1860, %v1864
      %v2886 = vcombine.low %v1868, %v1872
      %v2888 = vunpack.c.l.s4 1983009808
      %v2889 = vunpack.c.0.s8 %v2888
      %v2890 = vlaneseq
      %v2891 = vshrl.u32 %v2890, 7
      %v2892 = vsub.s32 %v2889, %v2891
      %v2893 = vrot.slane %v2885, %v2892
      %v2895 = vunpack.c.l.s4 1983009808
      %v2896 = vunpack.c.0.s8 %v2895
      %v2897 = vlaneseq
      %v2898 = vshrl.u32 %v2897, 7
      %v2899 = vsub.s32 %v2896, %v2898
      %v2900 = vrot.slane %v2886, %v2899
      %v2901 = vcombine.low %v2893, %v2900
      %v2902 = vcombine.low %v1876, %v1880
      %v2903 = vcombine.low %v1884, %v1888
      %v2905 = vunpack.c.l.s4 1983009808
      %v2906 = vunpack.c.0.s8 %v2905
      %v2907 = vlaneseq
      %v2908 = vshrl.u32 %v2907, 7
      %v2909 = vsub.s32 %v2906, %v2908
      %v2910 = vrot.slane %v2902, %v2909
      %v2912 = vunpack.c.l.s4 1983009808
      %v2913 = vunpack.c.0.s8 %v2912
      %v2914 = vlaneseq
      %v2915 = vshrl.u32 %v2914, 7
      %v2916 = vsub.s32 %v2913, %v2915
      %v2917 = vrot.slane %v2903, %v2916
      %v2918 = vcombine.low %v2910, %v2917
      %v2919 = vcombine.low %v1892, %v1896
      %v2920 = vcombine.low %v1900, %v1904
      %v2922 = vunpack.c.l.s4 1983009808
      %v2923 = vunpack.c.0.s8 %v2922
      %v2924 = vlaneseq
      %v2925 = vshrl.u32 %v2924, 7
      %v2926 = vsub.s32 %v2923, %v2925
      %v2927 = vrot.slane %v2919, %v2926
      %v2929 = vunpack.c.l.s4 1983009808
      %v2930 = vunpack.c.0.s8 %v2929
      %v2931 = vlaneseq
      %v2932 = vshrl.u32 %v2931, 7
      %v2933 = vsub.s32 %v2930, %v2932
      %v2934 = vrot.slane %v2920, %v2933
      %v2935 = vcombine.low %v2927, %v2934
      %v2936 = vcombine.low %v1908, %v1912
      %v2937 = vcombine.low %v1916, %v1920
      %v2939 = vunpack.c.l.s4 1983009808
      %v2940 = vunpack.c.0.s8 %v2939
      %v2941 = vlaneseq
      %v2942 = vshrl.u32 %v2941, 7
      %v2943 = vsub.s32 %v2940, %v2942
      %v2944 = vrot.slane %v2936, %v2943
      %v2946 = vunpack.c.l.s4 1983009808
      %v2947 = vunpack.c.0.s8 %v2946
      %v2948 = vlaneseq
      %v2949 = vshrl.u32 %v2948, 7
      %v2950 = vsub.s32 %v2947, %v2949
      %v2951 = vrot.slane %v2937, %v2950
      %v2952 = vcombine.low %v2944, %v2951
      %v2953 = vcombine.low %v1924, %v1928
      %v2954 = vcombine.low %v1932, %v1936
      %v2956 = vunpack.c.l.s4 1983009808
      %v2957 = vunpack.c.0.s8 %v2956
      %v2958 = vlaneseq
      %v2959 = vshrl.u32 %v2958, 7
      %v2960 = vsub.s32 %v2957, %v2959
      %v2961 = vrot.slane %v2953, %v2960
      %v2963 = vunpack.c.l.s4 1983009808
      %v2964 = vunpack.c.0.s8 %v2963
      %v2965 = vlaneseq
      %v2966 = vshrl.u32 %v2965, 7
      %v2967 = vsub.s32 %v2964, %v2966
      %v2968 = vrot.slane %v2954, %v2967
      %v2969 = vcombine.low %v2961, %v2968
      %v2970 = vcombine.low %v1940, %v1944
      %v2971 = vcombine.low %v1948, %v1952
      %v2973 = vunpack.c.l.s4 1983009808
      %v2974 = vunpack.c.0.s8 %v2973
      %v2975 = vlaneseq
      %v2976 = vshrl.u32 %v2975, 7
      %v2977 = vsub.s32 %v2974, %v2976
      %v2978 = vrot.slane %v2970, %v2977
      %v2980 = vunpack.c.l.s4 1983009808
      %v2981 = vunpack.c.0.s8 %v2980
      %v2982 = vlaneseq
      %v2983 = vshrl.u32 %v2982, 7
      %v2984 = vsub.s32 %v2981, %v2983
      %v2985 = vrot.slane %v2971, %v2984
      %v2986 = vcombine.low %v2978, %v2985
      %v2987 = vcombine.low %v1956, %v1960
      %v2988 = vcombine.low %v1964, %v1968
      %v2990 = vunpack.c.l.s4 1983009808
      %v2991 = vunpack.c.0.s8 %v2990
      %v2992 = vlaneseq
      %v2993 = vshrl.u32 %v2992, 7
      %v2994 = vsub.s32 %v2991, %v2993
      %v2995 = vrot.slane %v2987, %v2994
      %v2997 = vunpack.c.l.s4 1983009808
      %v2998 = vunpack.c.0.s8 %v2997
      %v2999 = vlaneseq
      %v3000 = vshrl.u32 %v2999, 7
      %v3001 = vsub.s32 %v2998, %v3000
      %v3002 = vrot.slane %v2988, %v3001
      %v3003 = vcombine.low %v2995, %v3002
      %v3004 = vcombine.low %v1972, %v1976
      %v3005 = vcombine.low %v1980, %v1984
      %v3007 = vunpack.c.l.s4 1983009808
      %v3008 = vunpack.c.0.s8 %v3007
      %v3009 = vlaneseq
      %v3010 = vshrl.u32 %v3009, 7
      %v3011 = vsub.s32 %v3008, %v3010
      %v3012 = vrot.slane %v3004, %v3011
      %v3014 = vunpack.c.l.s4 1983009808
      %v3015 = vunpack.c.0.s8 %v3014
      %v3016 = vlaneseq
      %v3017 = vshrl.u32 %v3016, 7
      %v3018 = vsub.s32 %v3015, %v3017
      %v3019 = vrot.slane %v3005, %v3018
      %v3020 = vcombine.low %v3012, %v3019
      %v3021 = vcombine.low %v1988, %v1992
      %v3022 = vcombine.low %v1996, %v2000
      %v3024 = vunpack.c.l.s4 1983009808
      %v3025 = vunpack.c.0.s8 %v3024
      %v3026 = vlaneseq
      %v3027 = vshrl.u32 %v3026, 7
      %v3028 = vsub.s32 %v3025, %v3027
      %v3029 = vrot.slane %v3021, %v3028
      %v3031 = vunpack.c.l.s4 1983009808
      %v3032 = vunpack.c.0.s8 %v3031
      %v3033 = vlaneseq
      %v3034 = vshrl.u32 %v3033, 7
      %v3035 = vsub.s32 %v3032, %v3034
      %v3036 = vrot.slane %v3022, %v3035
      %v3037 = vcombine.low %v3029, %v3036
      %v3038 = vcombine.low %v2004, %v2008
      %v3039 = vcombine.low %v2012, %v2016
      %v3041 = vunpack.c.l.s4 1983009808
      %v3042 = vunpack.c.0.s8 %v3041
      %v3043 = vlaneseq
      %v3044 = vshrl.u32 %v3043, 7
      %v3045 = vsub.s32 %v3042, %v3044
      %v3046 = vrot.slane %v3038, %v3045
      %v3048 = vunpack.c.l.s4 1983009808
      %v3049 = vunpack.c.0.s8 %v3048
      %v3050 = vlaneseq
      %v3051 = vshrl.u32 %v3050, 7
      %v3052 = vsub.s32 %v3049, %v3051
      %v3053 = vrot.slane %v3039, %v3052
      %v3054 = vcombine.low %v3046, %v3053
      %v3055 = vcombine.low %v2020, %v2024
      %v3056 = vcombine.low %v2028, %v2032
      %v3058 = vunpack.c.l.s4 1983009808
      %v3059 = vunpack.c.0.s8 %v3058
      %v3060 = vlaneseq
      %v3061 = vshrl.u32 %v3060, 7
      %v3062 = vsub.s32 %v3059, %v3061
      %v3063 = vrot.slane %v3055, %v3062
      %v3065 = vunpack.c.l.s4 1983009808
      %v3066 = vunpack.c.0.s8 %v3065
      %v3067 = vlaneseq
      %v3068 = vshrl.u32 %v3067, 7
      %v3069 = vsub.s32 %v3066, %v3068
      %v3070 = vrot.slane %v3056, %v3069
      %v3071 = vcombine.low %v3063, %v3070
      %v3072 = vcombine.low %v2036, %v2040
      %v3073 = vcombine.low %v2044, %v2048
      %v3075 = vunpack.c.l.s4 1983009808
      %v3076 = vunpack.c.0.s8 %v3075
      %v3077 = vlaneseq
      %v3078 = vshrl.u32 %v3077, 7
      %v3079 = vsub.s32 %v3076, %v3078
      %v3080 = vrot.slane %v3072, %v3079
      %v3082 = vunpack.c.l.s4 1983009808
      %v3083 = vunpack.c.0.s8 %v3082
      %v3084 = vlaneseq
      %v3085 = vshrl.u32 %v3084, 7
      %v3086 = vsub.s32 %v3083, %v3085
      %v3087 = vrot.slane %v3073, %v3086
      %v3088 = vcombine.low %v3080, %v3087
      %v3089 = vcombine.low %v2052, %v2056
      %v3090 = vcombine.low %v2060, %v2064
      %v3092 = vunpack.c.l.s4 1983009808
      %v3093 = vunpack.c.0.s8 %v3092
      %v3094 = vlaneseq
      %v3095 = vshrl.u32 %v3094, 7
      %v3096 = vsub.s32 %v3093, %v3095
      %v3097 = vrot.slane %v3089, %v3096
      %v3099 = vunpack.c.l.s4 1983009808
      %v3100 = vunpack.c.0.s8 %v3099
      %v3101 = vlaneseq
      %v3102 = vshrl.u32 %v3101, 7
      %v3103 = vsub.s32 %v3100, %v3102
      %v3104 = vrot.slane %v3090, %v3103
      %v3105 = vcombine.low %v3097, %v3104
      %v3106 = vcombine.low %v2068, %v2072
      %v3107 = vcombine.low %v2076, %v2080
      %v3109 = vunpack.c.l.s4 1983009808
      %v3110 = vunpack.c.0.s8 %v3109
      %v3111 = vlaneseq
      %v3112 = vshrl.u32 %v3111, 7
      %v3113 = vsub.s32 %v3110, %v3112
      %v3114 = vrot.slane %v3106, %v3113
      %v3116 = vunpack.c.l.s4 1983009808
      %v3117 = vunpack.c.0.s8 %v3116
      %v3118 = vlaneseq
      %v3119 = vshrl.u32 %v3118, 7
      %v3120 = vsub.s32 %v3117, %v3119
      %v3121 = vrot.slane %v3107, %v3120
      %v3122 = vcombine.low %v3114, %v3121
      %v3123 = vcombine.low %v2084, %v2088
      %v3124 = vcombine.low %v2092, %v2096
      %v3126 = vunpack.c.l.s4 1983009808
      %v3127 = vunpack.c.0.s8 %v3126
      %v3128 = vlaneseq
      %v3129 = vshrl.u32 %v3128, 7
      %v3130 = vsub.s32 %v3127, %v3129
      %v3131 = vrot.slane %v3123, %v3130
      %v3133 = vunpack.c.l.s4 1983009808
      %v3134 = vunpack.c.0.s8 %v3133
      %v3135 = vlaneseq
      %v3136 = vshrl.u32 %v3135, 7
      %v3137 = vsub.s32 %v3134, %v3136
      %v3138 = vrot.slane %v3124, %v3137
      %v3139 = vcombine.low %v3131, %v3138
      %v3140 = vcombine.low %v2100, %v2104
      %v3141 = vcombine.low %v2108, %v2112
      %v3143 = vunpack.c.l.s4 1983009808
      %v3144 = vunpack.c.0.s8 %v3143
      %v3145 = vlaneseq
      %v3146 = vshrl.u32 %v3145, 7
      %v3147 = vsub.s32 %v3144, %v3146
      %v3148 = vrot.slane %v3140, %v3147
      %v3150 = vunpack.c.l.s4 1983009808
      %v3151 = vunpack.c.0.s8 %v3150
      %v3152 = vlaneseq
      %v3153 = vshrl.u32 %v3152, 7
      %v3154 = vsub.s32 %v3151, %v3153
      %v3155 = vrot.slane %v3141, %v3154
      %v3156 = vcombine.low %v3148, %v3155
      %v3157 = vcombine.low %v2116, %v2120
      %v3158 = vcombine.low %v2124, %v2128
      %v3160 = vunpack.c.l.s4 1983009808
      %v3161 = vunpack.c.0.s8 %v3160
      %v3162 = vlaneseq
      %v3163 = vshrl.u32 %v3162, 7
      %v3164 = vsub.s32 %v3161, %v3163
      %v3165 = vrot.slane %v3157, %v3164
      %v3167 = vunpack.c.l.s4 1983009808
      %v3168 = vunpack.c.0.s8 %v3167
      %v3169 = vlaneseq
      %v3170 = vshrl.u32 %v3169, 7
      %v3171 = vsub.s32 %v3168, %v3170
      %v3172 = vrot.slane %v3158, %v3171
      %v3173 = vcombine.low %v3165, %v3172
      %v3174 = vcombine.low %v2132, %v2136
      %v3175 = vcombine.low %v2140, %v2144
      %v3177 = vunpack.c.l.s4 1983009808
      %v3178 = vunpack.c.0.s8 %v3177
      %v3179 = vlaneseq
      %v3180 = vshrl.u32 %v3179, 7
      %v3181 = vsub.s32 %v3178, %v3180
      %v3182 = vrot.slane %v3174, %v3181
      %v3184 = vunpack.c.l.s4 1983009808
      %v3185 = vunpack.c.0.s8 %v3184
      %v3186 = vlaneseq
      %v3187 = vshrl.u32 %v3186, 7
      %v3188 = vsub.s32 %v3185, %v3187
      %v3189 = vrot.slane %v3175, %v3188
      %v3190 = vcombine.low %v3182, %v3189
      %v3191 = vcombine.low %v2148, %v2152
      %v3192 = vcombine.low %v2156, %v2160
      %v3194 = vunpack.c.l.s4 1983009808
      %v3195 = vunpack.c.0.s8 %v3194
      %v3196 = vlaneseq
      %v3197 = vshrl.u32 %v3196, 7
      %v3198 = vsub.s32 %v3195, %v3197
      %v3199 = vrot.slane %v3191, %v3198
      %v3201 = vunpack.c.l.s4 1983009808
      %v3202 = vunpack.c.0.s8 %v3201
      %v3203 = vlaneseq
      %v3204 = vshrl.u32 %v3203, 7
      %v3205 = vsub.s32 %v3202, %v3204
      %v3206 = vrot.slane %v3192, %v3205
      %v3207 = vcombine.low %v3199, %v3206
      %v3208 = vcombine.low %v2164, %v2168
      %v3209 = vcombine.low %v2172, %v2176
      %v3211 = vunpack.c.l.s4 1983009808
      %v3212 = vunpack.c.0.s8 %v3211
      %v3213 = vlaneseq
      %v3214 = vshrl.u32 %v3213, 7
      %v3215 = vsub.s32 %v3212, %v3214
      %v3216 = vrot.slane %v3208, %v3215
      %v3218 = vunpack.c.l.s4 1983009808
      %v3219 = vunpack.c.0.s8 %v3218
      %v3220 = vlaneseq
      %v3221 = vshrl.u32 %v3220, 7
      %v3222 = vsub.s32 %v3219, %v3221
      %v3223 = vrot.slane %v3209, %v3222
      %v3224 = vcombine.low %v3216, %v3223
      %v3225 = vcombine.low %v2180, %v2184
      %v3226 = vcombine.low %v2188, %v2192
      %v3228 = vunpack.c.l.s4 1983009808
      %v3229 = vunpack.c.0.s8 %v3228
      %v3230 = vlaneseq
      %v3231 = vshrl.u32 %v3230, 7
      %v3232 = vsub.s32 %v3229, %v3231
      %v3233 = vrot.slane %v3225, %v3232
      %v3235 = vunpack.c.l.s4 1983009808
      %v3236 = vunpack.c.0.s8 %v3235
      %v3237 = vlaneseq
      %v3238 = vshrl.u32 %v3237, 7
      %v3239 = vsub.s32 %v3236, %v3238
      %v3240 = vrot.slane %v3226, %v3239
      %v3241 = vcombine.low %v3233, %v3240
      %v3242 = vcombine.low %v2196, %v2200
      %v3243 = vcombine.low %v2204, %v2208
      %v3245 = vunpack.c.l.s4 1983009808
      %v3246 = vunpack.c.0.s8 %v3245
      %v3247 = vlaneseq
      %v3248 = vshrl.u32 %v3247, 7
      %v3249 = vsub.s32 %v3246, %v3248
      %v3250 = vrot.slane %v3242, %v3249
      %v3252 = vunpack.c.l.s4 1983009808
      %v3253 = vunpack.c.0.s8 %v3252
      %v3254 = vlaneseq
      %v3255 = vshrl.u32 %v3254, 7
      %v3256 = vsub.s32 %v3253, %v3255
      %v3257 = vrot.slane %v3243, %v3256
      %v3258 = vcombine.low %v3250, %v3257
      %v3259 = vcombine.low %v2212, %v2216
      %v3260 = vcombine.low %v2220, %v2224
      %v3262 = vunpack.c.l.s4 1983009808
      %v3263 = vunpack.c.0.s8 %v3262
      %v3264 = vlaneseq
      %v3265 = vshrl.u32 %v3264, 7
      %v3266 = vsub.s32 %v3263, %v3265
      %v3267 = vrot.slane %v3259, %v3266
      %v3269 = vunpack.c.l.s4 1983009808
      %v3270 = vunpack.c.0.s8 %v3269
      %v3271 = vlaneseq
      %v3272 = vshrl.u32 %v3271, 7
      %v3273 = vsub.s32 %v3270, %v3272
      %v3274 = vrot.slane %v3260, %v3273
      %v3275 = vcombine.low %v3267, %v3274
      %v3276 = vcombine.low %v2228, %v2232
      %v3277 = vcombine.low %v2236, %v2240
      %v3279 = vunpack.c.l.s4 1983009808
      %v3280 = vunpack.c.0.s8 %v3279
      %v3281 = vlaneseq
      %v3282 = vshrl.u32 %v3281, 7
      %v3283 = vsub.s32 %v3280, %v3282
      %v3284 = vrot.slane %v3276, %v3283
      %v3286 = vunpack.c.l.s4 1983009808
      %v3287 = vunpack.c.0.s8 %v3286
      %v3288 = vlaneseq
      %v3289 = vshrl.u32 %v3288, 7
      %v3290 = vsub.s32 %v3287, %v3289
      %v3291 = vrot.slane %v3277, %v3290
      %v3292 = vcombine.low %v3284, %v3291
      %v3293 = vcombine.low %v2244, %v2248
      %v3294 = vcombine.low %v2252, %v2256
      %v3296 = vunpack.c.l.s4 1983009808
      %v3297 = vunpack.c.0.s8 %v3296
      %v3298 = vlaneseq
      %v3299 = vshrl.u32 %v3298, 7
      %v3300 = vsub.s32 %v3297, %v3299
      %v3301 = vrot.slane %v3293, %v3300
      %v3303 = vunpack.c.l.s4 1983009808
      %v3304 = vunpack.c.0.s8 %v3303
      %v3305 = vlaneseq
      %v3306 = vshrl.u32 %v3305, 7
      %v3307 = vsub.s32 %v3304, %v3306
      %v3308 = vrot.slane %v3294, %v3307
      %v3309 = vcombine.low %v3301, %v3308
      %v3310 = vcombine.low %v2260, %v2264
      %v3311 = vcombine.low %v2268, %v2272
      %v3313 = vunpack.c.l.s4 1983009808
      %v3314 = vunpack.c.0.s8 %v3313
      %v3315 = vlaneseq
      %v3316 = vshrl.u32 %v3315, 7
      %v3317 = vsub.s32 %v3314, %v3316
      %v3318 = vrot.slane %v3310, %v3317
      %v3320 = vunpack.c.l.s4 1983009808
      %v3321 = vunpack.c.0.s8 %v3320
      %v3322 = vlaneseq
      %v3323 = vshrl.u32 %v3322, 7
      %v3324 = vsub.s32 %v3321, %v3323
      %v3325 = vrot.slane %v3311, %v3324
      %v3326 = vcombine.low %v3318, %v3325
      %v3327 = vcombine.low %v2276, %v2280
      %v3328 = vcombine.low %v2284, %v2288
      %v3330 = vunpack.c.l.s4 1983009808
      %v3331 = vunpack.c.0.s8 %v3330
      %v3332 = vlaneseq
      %v3333 = vshrl.u32 %v3332, 7
      %v3334 = vsub.s32 %v3331, %v3333
      %v3335 = vrot.slane %v3327, %v3334
      %v3337 = vunpack.c.l.s4 1983009808
      %v3338 = vunpack.c.0.s8 %v3337
      %v3339 = vlaneseq
      %v3340 = vshrl.u32 %v3339, 7
      %v3341 = vsub.s32 %v3338, %v3340
      %v3342 = vrot.slane %v3328, %v3341
      %v3343 = vcombine.low %v3335, %v3342
      %v3344 = vcombine.low %v2292, %v2296
      %v3345 = vcombine.low %v2300, %v2304
      %v3347 = vunpack.c.l.s4 1983009808
      %v3348 = vunpack.c.0.s8 %v3347
      %v3349 = vlaneseq
      %v3350 = vshrl.u32 %v3349, 7
      %v3351 = vsub.s32 %v3348, %v3350
      %v3352 = vrot.slane %v3344, %v3351
      %v3354 = vunpack.c.l.s4 1983009808
      %v3355 = vunpack.c.0.s8 %v3354
      %v3356 = vlaneseq
      %v3357 = vshrl.u32 %v3356, 7
      %v3358 = vsub.s32 %v3355, %v3357
      %v3359 = vrot.slane %v3345, %v3358
      %v3360 = vcombine.low %v3352, %v3359
      %v3361 = vcombine.low %v2308, %v2312
      %v3362 = vcombine.low %v2316, %v2320
      %v3364 = vunpack.c.l.s4 1983009808
      %v3365 = vunpack.c.0.s8 %v3364
      %v3366 = vlaneseq
      %v3367 = vshrl.u32 %v3366, 7
      %v3368 = vsub.s32 %v3365, %v3367
      %v3369 = vrot.slane %v3361, %v3368
      %v3371 = vunpack.c.l.s4 1983009808
      %v3372 = vunpack.c.0.s8 %v3371
      %v3373 = vlaneseq
      %v3374 = vshrl.u32 %v3373, 7
      %v3375 = vsub.s32 %v3372, %v3374
      %v3376 = vrot.slane %v3362, %v3375
      %v3377 = vcombine.low %v3369, %v3376
      %v3378 = vcombine.low %v2324, %v2328
      %v3379 = vcombine.low %v2332, %v2336
      %v3381 = vunpack.c.l.s4 1983009808
      %v3382 = vunpack.c.0.s8 %v3381
      %v3383 = vlaneseq
      %v3384 = vshrl.u32 %v3383, 7
      %v3385 = vsub.s32 %v3382, %v3384
      %v3386 = vrot.slane %v3378, %v3385
      %v3388 = vunpack.c.l.s4 1983009808
      %v3389 = vunpack.c.0.s8 %v3388
      %v3390 = vlaneseq
      %v3391 = vshrl.u32 %v3390, 7
      %v3392 = vsub.s32 %v3389, %v3391
      %v3393 = vrot.slane %v3379, %v3392
      %v3394 = vcombine.low %v3386, %v3393
      %v3395 = vcombine.low %v2340, %v2344
      %v3396 = vcombine.low %v2348, %v2352
      %v3398 = vunpack.c.l.s4 1983009808
      %v3399 = vunpack.c.0.s8 %v3398
      %v3400 = vlaneseq
      %v3401 = vshrl.u32 %v3400, 7
      %v3402 = vsub.s32 %v3399, %v3401
      %v3403 = vrot.slane %v3395, %v3402
      %v3405 = vunpack.c.l.s4 1983009808
      %v3406 = vunpack.c.0.s8 %v3405
      %v3407 = vlaneseq
      %v3408 = vshrl.u32 %v3407, 7
      %v3409 = vsub.s32 %v3406, %v3408
      %v3410 = vrot.slane %v3396, %v3409
      %v3411 = vcombine.low %v3403, %v3410
      %v3412 = vcombine.low %v2356, %v2360
      %v3413 = vcombine.low %v2364, %v2368
      %v3415 = vunpack.c.l.s4 1983009808
      %v3416 = vunpack.c.0.s8 %v3415
      %v3417 = vlaneseq
      %v3418 = vshrl.u32 %v3417, 7
      %v3419 = vsub.s32 %v3416, %v3418
      %v3420 = vrot.slane %v3412, %v3419
      %v3422 = vunpack.c.l.s4 1983009808
      %v3423 = vunpack.c.0.s8 %v3422
      %v3424 = vlaneseq
      %v3425 = vshrl.u32 %v3424, 7
      %v3426 = vsub.s32 %v3423, %v3425
      %v3427 = vrot.slane %v3413, %v3426
      %v3428 = vcombine.low %v3420, %v3427
      %v3429 = vcombine.low %v2372, %v2376
      %v3430 = vcombine.low %v2380, %v2384
      %v3432 = vunpack.c.l.s4 1983009808
      %v3433 = vunpack.c.0.s8 %v3432
      %v3434 = vlaneseq
      %v3435 = vshrl.u32 %v3434, 7
      %v3436 = vsub.s32 %v3433, %v3435
      %v3437 = vrot.slane %v3429, %v3436
      %v3439 = vunpack.c.l.s4 1983009808
      %v3440 = vunpack.c.0.s8 %v3439
      %v3441 = vlaneseq
      %v3442 = vshrl.u32 %v3441, 7
      %v3443 = vsub.s32 %v3440, %v3442
      %v3444 = vrot.slane %v3430, %v3443
      %v3445 = vcombine.low %v3437, %v3444
      %v3446 = vcombine.low %v2388, %v2392
      %v3447 = vcombine.low %v2396, %v2400
      %v3449 = vunpack.c.l.s4 1983009808
      %v3450 = vunpack.c.0.s8 %v3449
      %v3451 = vlaneseq
      %v3452 = vshrl.u32 %v3451, 7
      %v3453 = vsub.s32 %v3450, %v3452
      %v3454 = vrot.slane %v3446, %v3453
      %v3456 = vunpack.c.l.s4 1983009808
      %v3457 = vunpack.c.0.s8 %v3456
      %v3458 = vlaneseq
      %v3459 = vshrl.u32 %v3458, 7
      %v3460 = vsub.s32 %v3457, %v3459
      %v3461 = vrot.slane %v3447, %v3460
      %v3462 = vcombine.low %v3454, %v3461
      %v3463 = vcombine.low %v2404, %v2408
      %v3464 = vcombine.low %v2412, %v2416
      %v3466 = vunpack.c.l.s4 1983009808
      %v3467 = vunpack.c.0.s8 %v3466
      %v3468 = vlaneseq
      %v3469 = vshrl.u32 %v3468, 7
      %v3470 = vsub.s32 %v3467, %v3469
      %v3471 = vrot.slane %v3463, %v3470
      %v3473 = vunpack.c.l.s4 1983009808
      %v3474 = vunpack.c.0.s8 %v3473
      %v3475 = vlaneseq
      %v3476 = vshrl.u32 %v3475, 7
      %v3477 = vsub.s32 %v3474, %v3476
      %v3478 = vrot.slane %v3464, %v3477
      %v3479 = vcombine.low %v3471, %v3478
      %v3480 = vcombine.low %v2420, %v2424
      %v3481 = vcombine.low %v2428, %v2432
      %v3483 = vunpack.c.l.s4 1983009808
      %v3484 = vunpack.c.0.s8 %v3483
      %v3485 = vlaneseq
      %v3486 = vshrl.u32 %v3485, 7
      %v3487 = vsub.s32 %v3484, %v3486
      %v3488 = vrot.slane %v3480, %v3487
      %v3490 = vunpack.c.l.s4 1983009808
      %v3491 = vunpack.c.0.s8 %v3490
      %v3492 = vlaneseq
      %v3493 = vshrl.u32 %v3492, 7
      %v3494 = vsub.s32 %v3491, %v3493
      %v3495 = vrot.slane %v3481, %v3494
      %v3496 = vcombine.low %v3488, %v3495
      %v3497 = vcombine.low %v2436, %v2440
      %v3498 = vcombine.low %v2444, %v2448
      %v3500 = vunpack.c.l.s4 1983009808
      %v3501 = vunpack.c.0.s8 %v3500
      %v3502 = vlaneseq
      %v3503 = vshrl.u32 %v3502, 7
      %v3504 = vsub.s32 %v3501, %v3503
      %v3505 = vrot.slane %v3497, %v3504
      %v3507 = vunpack.c.l.s4 1983009808
      %v3508 = vunpack.c.0.s8 %v3507
      %v3509 = vlaneseq
      %v3510 = vshrl.u32 %v3509, 7
      %v3511 = vsub.s32 %v3508, %v3510
      %v3512 = vrot.slane %v3498, %v3511
      %v3513 = vcombine.low %v3505, %v3512
      %v3514 = vcombine.low %v2452, %v2456
      %v3515 = vcombine.low %v2460, %v2464
      %v3517 = vunpack.c.l.s4 1983009808
      %v3518 = vunpack.c.0.s8 %v3517
      %v3519 = vlaneseq
      %v3520 = vshrl.u32 %v3519, 7
      %v3521 = vsub.s32 %v3518, %v3520
      %v3522 = vrot.slane %v3514, %v3521
      %v3524 = vunpack.c.l.s4 1983009808
      %v3525 = vunpack.c.0.s8 %v3524
      %v3526 = vlaneseq
      %v3527 = vshrl.u32 %v3526, 7
      %v3528 = vsub.s32 %v3525, %v3527
      %v3529 = vrot.slane %v3515, %v3528
      %v3530 = vcombine.low %v3522, %v3529
      %v3531 = vcombine.low %v2468, %v2472
      %v3532 = vcombine.low %v2476, %v2480
      %v3534 = vunpack.c.l.s4 1983009808
      %v3535 = vunpack.c.0.s8 %v3534
      %v3536 = vlaneseq
      %v3537 = vshrl.u32 %v3536, 7
      %v3538 = vsub.s32 %v3535, %v3537
      %v3539 = vrot.slane %v3531, %v3538
      %v3541 = vunpack.c.l.s4 1983009808
      %v3542 = vunpack.c.0.s8 %v3541
      %v3543 = vlaneseq
      %v3544 = vshrl.u32 %v3543, 7
      %v3545 = vsub.s32 %v3542, %v3544
      %v3546 = vrot.slane %v3532, %v3545
      %v3547 = vcombine.low %v3539, %v3546
      %v3548 = vcombine.low %v2484, %v2488
      %v3549 = vcombine.low %v2492, %v2496
      %v3551 = vunpack.c.l.s4 1983009808
      %v3552 = vunpack.c.0.s8 %v3551
      %v3553 = vlaneseq
      %v3554 = vshrl.u32 %v3553, 7
      %v3555 = vsub.s32 %v3552, %v3554
      %v3556 = vrot.slane %v3548, %v3555
      %v3558 = vunpack.c.l.s4 1983009808
      %v3559 = vunpack.c.0.s8 %v3558
      %v3560 = vlaneseq
      %v3561 = vshrl.u32 %v3560, 7
      %v3562 = vsub.s32 %v3559, %v3561
      %v3563 = vrot.slane %v3549, %v3562
      %v3564 = vcombine.low %v3556, %v3563
      %v3565 = vcombine.low %v2500, %v2504
      %v3566 = vcombine.low %v2508, %v2512
      %v3568 = vunpack.c.l.s4 1983009808
      %v3569 = vunpack.c.0.s8 %v3568
      %v3570 = vlaneseq
      %v3571 = vshrl.u32 %v3570, 7
      %v3572 = vsub.s32 %v3569, %v3571
      %v3573 = vrot.slane %v3565, %v3572
      %v3575 = vunpack.c.l.s4 1983009808
      %v3576 = vunpack.c.0.s8 %v3575
      %v3577 = vlaneseq
      %v3578 = vshrl.u32 %v3577, 7
      %v3579 = vsub.s32 %v3576, %v3578
      %v3580 = vrot.slane %v3566, %v3579
      %v3581 = vcombine.low %v3573, %v3580
      %v3582 = vcombine.low %v2516, %v2520
      %v3583 = vcombine.low %v2524, %v2528
      %v3585 = vunpack.c.l.s4 1983009808
      %v3586 = vunpack.c.0.s8 %v3585
      %v3587 = vlaneseq
      %v3588 = vshrl.u32 %v3587, 7
      %v3589 = vsub.s32 %v3586, %v3588
      %v3590 = vrot.slane %v3582, %v3589
      %v3592 = vunpack.c.l.s4 1983009808
      %v3593 = vunpack.c.0.s8 %v3592
      %v3594 = vlaneseq
      %v3595 = vshrl.u32 %v3594, 7
      %v3596 = vsub.s32 %v3593, %v3595
      %v3597 = vrot.slane %v3583, %v3596
      %v3598 = vcombine.low %v3590, %v3597
      %v3599 = vcombine.low %v2532, %v2536
      %v3600 = vcombine.low %v2540, %v2544
      %v3602 = vunpack.c.l.s4 1983009808
      %v3603 = vunpack.c.0.s8 %v3602
      %v3604 = vlaneseq
      %v3605 = vshrl.u32 %v3604, 7
      %v3606 = vsub.s32 %v3603, %v3605
      %v3607 = vrot.slane %v3599, %v3606
      %v3609 = vunpack.c.l.s4 1983009808
      %v3610 = vunpack.c.0.s8 %v3609
      %v3611 = vlaneseq
      %v3612 = vshrl.u32 %v3611, 7
      %v3613 = vsub.s32 %v3610, %v3612
      %v3614 = vrot.slane %v3600, %v3613
      %v3615 = vcombine.low %v3607, %v3614
      %v3616 = vcombine.low %v2548, %v2552
      %v3617 = vcombine.low %v2556, %v2560
      %v3619 = vunpack.c.l.s4 1983009808
      %v3620 = vunpack.c.0.s8 %v3619
      %v3621 = vlaneseq
      %v3622 = vshrl.u32 %v3621, 7
      %v3623 = vsub.s32 %v3620, %v3622
      %v3624 = vrot.slane %v3616, %v3623
      %v3626 = vunpack.c.l.s4 1983009808
      %v3627 = vunpack.c.0.s8 %v3626
      %v3628 = vlaneseq
      %v3629 = vshrl.u32 %v3628, 7
      %v3630 = vsub.s32 %v3627, %v3629
      %v3631 = vrot.slane %v3617, %v3630
      %v3632 = vcombine.low %v3624, %v3631
      %v3633 = vcombine.low %v2564, %v2568
      %v3634 = vcombine.low %v2572, %v2576
      %v3636 = vunpack.c.l.s4 1983009808
      %v3637 = vunpack.c.0.s8 %v3636
      %v3638 = vlaneseq
      %v3639 = vshrl.u32 %v3638, 7
      %v3640 = vsub.s32 %v3637, %v3639
      %v3641 = vrot.slane %v3633, %v3640
      %v3643 = vunpack.c.l.s4 1983009808
      %v3644 = vunpack.c.0.s8 %v3643
      %v3645 = vlaneseq
      %v3646 = vshrl.u32 %v3645, 7
      %v3647 = vsub.s32 %v3644, %v3646
      %v3648 = vrot.slane %v3634, %v3647
      %v3649 = vcombine.low %v3641, %v3648
      %v3650 = vcombine.low %v2580, %v2584
      %v3651 = vcombine.low %v2588, %v2592
      %v3653 = vunpack.c.l.s4 1983009808
      %v3654 = vunpack.c.0.s8 %v3653
      %v3655 = vlaneseq
      %v3656 = vshrl.u32 %v3655, 7
      %v3657 = vsub.s32 %v3654, %v3656
      %v3658 = vrot.slane %v3650, %v3657
      %v3660 = vunpack.c.l.s4 1983009808
      %v3661 = vunpack.c.0.s8 %v3660
      %v3662 = vlaneseq
      %v3663 = vshrl.u32 %v3662, 7
      %v3664 = vsub.s32 %v3661, %v3663
      %v3665 = vrot.slane %v3651, %v3664
      %v3666 = vcombine.low %v3658, %v3665
      %v3667 = vcombine.low %v2596, %v2600
      %v3668 = vcombine.low %v2604, %v2608
      %v3670 = vunpack.c.l.s4 1983009808
      %v3671 = vunpack.c.0.s8 %v3670
      %v3672 = vlaneseq
      %v3673 = vshrl.u32 %v3672, 7
      %v3674 = vsub.s32 %v3671, %v3673
      %v3675 = vrot.slane %v3667, %v3674
      %v3677 = vunpack.c.l.s4 1983009808
      %v3678 = vunpack.c.0.s8 %v3677
      %v3679 = vlaneseq
      %v3680 = vshrl.u32 %v3679, 7
      %v3681 = vsub.s32 %v3678, %v3680
      %v3682 = vrot.slane %v3668, %v3681
      %v3683 = vcombine.low %v3675, %v3682
      %v3684 = vcombine.low %v2612, %v2616
      %v3685 = vcombine.low %v2620, %v2624
      %v3687 = vunpack.c.l.s4 1983009808
      %v3688 = vunpack.c.0.s8 %v3687
      %v3689 = vlaneseq
      %v3690 = vshrl.u32 %v3689, 7
      %v3691 = vsub.s32 %v3688, %v3690
      %v3692 = vrot.slane %v3684, %v3691
      %v3694 = vunpack.c.l.s4 1983009808
      %v3695 = vunpack.c.0.s8 %v3694
      %v3696 = vlaneseq
      %v3697 = vshrl.u32 %v3696, 7
      %v3698 = vsub.s32 %v3695, %v3697
      %v3699 = vrot.slane %v3685, %v3698
      %v3700 = vcombine.low %v3692, %v3699
      %v3701 = vcombine.low %v2628, %v2632
      %v3702 = vcombine.low %v2636, %v2640
      %v3704 = vunpack.c.l.s4 1983009808
      %v3705 = vunpack.c.0.s8 %v3704
      %v3706 = vlaneseq
      %v3707 = vshrl.u32 %v3706, 7
      %v3708 = vsub.s32 %v3705, %v3707
      %v3709 = vrot.slane %v3701, %v3708
      %v3711 = vunpack.c.l.s4 1983009808
      %v3712 = vunpack.c.0.s8 %v3711
      %v3713 = vlaneseq
      %v3714 = vshrl.u32 %v3713, 7
      %v3715 = vsub.s32 %v3712, %v3714
      %v3716 = vrot.slane %v3702, %v3715
      %v3717 = vcombine.low %v3709, %v3716
      %v3718 = vcombine.low %v2644, %v2648
      %v3719 = vcombine.low %v2652, %v2656
      %v3721 = vunpack.c.l.s4 1983009808
      %v3722 = vunpack.c.0.s8 %v3721
      %v3723 = vlaneseq
      %v3724 = vshrl.u32 %v3723, 7
      %v3725 = vsub.s32 %v3722, %v3724
      %v3726 = vrot.slane %v3718, %v3725
      %v3728 = vunpack.c.l.s4 1983009808
      %v3729 = vunpack.c.0.s8 %v3728
      %v3730 = vlaneseq
      %v3731 = vshrl.u32 %v3730, 7
      %v3732 = vsub.s32 %v3729, %v3731
      %v3733 = vrot.slane %v3719, %v3732
      %v3734 = vcombine.low %v3726, %v3733
      %v3735 = vcombine.low %v2660, %v2664
      %v3736 = vcombine.low %v2668, %v2672
      %v3738 = vunpack.c.l.s4 1983009808
      %v3739 = vunpack.c.0.s8 %v3738
      %v3740 = vlaneseq
      %v3741 = vshrl.u32 %v3740, 7
      %v3742 = vsub.s32 %v3739, %v3741
      %v3743 = vrot.slane %v3735, %v3742
      %v3745 = vunpack.c.l.s4 1983009808
      %v3746 = vunpack.c.0.s8 %v3745
      %v3747 = vlaneseq
      %v3748 = vshrl.u32 %v3747, 7
      %v3749 = vsub.s32 %v3746, %v3748
      %v3750 = vrot.slane %v3736, %v3749
      %v3751 = vcombine.low %v3743, %v3750
      %v3752 = vcombine.low %v2676, %v2680
      %v3753 = vcombine.low %v2684, %v2688
      %v3755 = vunpack.c.l.s4 1983009808
      %v3756 = vunpack.c.0.s8 %v3755
      %v3757 = vlaneseq
      %v3758 = vshrl.u32 %v3757, 7
      %v3759 = vsub.s32 %v3756, %v3758
      %v3760 = vrot.slane %v3752, %v3759
      %v3762 = vunpack.c.l.s4 1983009808
      %v3763 = vunpack.c.0.s8 %v3762
      %v3764 = vlaneseq
      %v3765 = vshrl.u32 %v3764, 7
      %v3766 = vsub.s32 %v3763, %v3765
      %v3767 = vrot.slane %v3753, %v3766
      %v3768 = vcombine.low %v3760, %v3767
      %v3769 = vcombine.low %v2692, %v2696
      %v3770 = vcombine.low %v2700, %v2704
      %v3772 = vunpack.c.l.s4 1983009808
      %v3773 = vunpack.c.0.s8 %v3772
      %v3774 = vlaneseq
      %v3775 = vshrl.u32 %v3774, 7
      %v3776 = vsub.s32 %v3773, %v3775
      %v3777 = vrot.slane %v3769, %v3776
      %v3779 = vunpack.c.l.s4 1983009808
      %v3780 = vunpack.c.0.s8 %v3779
      %v3781 = vlaneseq
      %v3782 = vshrl.u32 %v3781, 7
      %v3783 = vsub.s32 %v3780, %v3782
      %v3784 = vrot.slane %v3770, %v3783
      %v3785 = vcombine.low %v3777, %v3784
      %v3786 = vcombine.low %v2708, %v2712
      %v3787 = vcombine.low %v2716, %v2720
      %v3789 = vunpack.c.l.s4 1983009808
      %v3790 = vunpack.c.0.s8 %v3789
      %v3791 = vlaneseq
      %v3792 = vshrl.u32 %v3791, 7
      %v3793 = vsub.s32 %v3790, %v3792
      %v3794 = vrot.slane %v3786, %v3793
      %v3796 = vunpack.c.l.s4 1983009808
      %v3797 = vunpack.c.0.s8 %v3796
      %v3798 = vlaneseq
      %v3799 = vshrl.u32 %v3798, 7
      %v3800 = vsub.s32 %v3797, %v3799
      %v3801 = vrot.slane %v3787, %v3800
      %v3802 = vcombine.low %v3794, %v3801
      %v3803 = vcombine.low %v2724, %v2728
      %v3804 = vcombine.low %v2732, %v2736
      %v3806 = vunpack.c.l.s4 1983009808
      %v3807 = vunpack.c.0.s8 %v3806
      %v3808 = vlaneseq
      %v3809 = vshrl.u32 %v3808, 7
      %v3810 = vsub.s32 %v3807, %v3809
      %v3811 = vrot.slane %v3803, %v3810
      %v3813 = vunpack.c.l.s4 1983009808
      %v3814 = vunpack.c.0.s8 %v3813
      %v3815 = vlaneseq
      %v3816 = vshrl.u32 %v3815, 7
      %v3817 = vsub.s32 %v3814, %v3816
      %v3818 = vrot.slane %v3804, %v3817
      %v3819 = vcombine.low %v3811, %v3818
      %v3820 = vcombine.low %v2740, %v2744
      %v3821 = vcombine.low %v2748, %v2752
      %v3823 = vunpack.c.l.s4 1983009808
      %v3824 = vunpack.c.0.s8 %v3823
      %v3825 = vlaneseq
      %v3826 = vshrl.u32 %v3825, 7
      %v3827 = vsub.s32 %v3824, %v3826
      %v3828 = vrot.slane %v3820, %v3827
      %v3830 = vunpack.c.l.s4 1983009808
      %v3831 = vunpack.c.0.s8 %v3830
      %v3832 = vlaneseq
      %v3833 = vshrl.u32 %v3832, 7
      %v3834 = vsub.s32 %v3831, %v3833
      %v3835 = vrot.slane %v3821, %v3834
      %v3836 = vcombine.low %v3828, %v3835
      %v3837 = vcombine.low %v2756, %v2760
      %v3838 = vcombine.low %v2764, %v2768
      %v3840 = vunpack.c.l.s4 1983009808
      %v3841 = vunpack.c.0.s8 %v3840
      %v3842 = vlaneseq
      %v3843 = vshrl.u32 %v3842, 7
      %v3844 = vsub.s32 %v3841, %v3843
      %v3845 = vrot.slane %v3837, %v3844
      %v3847 = vunpack.c.l.s4 1983009808
      %v3848 = vunpack.c.0.s8 %v3847
      %v3849 = vlaneseq
      %v3850 = vshrl.u32 %v3849, 7
      %v3851 = vsub.s32 %v3848, %v3850
      %v3852 = vrot.slane %v3838, %v3851
      %v3853 = vcombine.low %v3845, %v3852
      %v3854 = vcombine.low %v2772, %v2776
      %v3855 = vcombine.low %v2780, %v2784
      %v3857 = vunpack.c.l.s4 1983009808
      %v3858 = vunpack.c.0.s8 %v3857
      %v3859 = vlaneseq
      %v3860 = vshrl.u32 %v3859, 7
      %v3861 = vsub.s32 %v3858, %v3860
      %v3862 = vrot.slane %v3854, %v3861
      %v3864 = vunpack.c.l.s4 1983009808
      %v3865 = vunpack.c.0.s8 %v3864
      %v3866 = vlaneseq
      %v3867 = vshrl.u32 %v3866, 7
      %v3868 = vsub.s32 %v3865, %v3867
      %v3869 = vrot.slane %v3855, %v3868
      %v3870 = vcombine.low %v3862, %v3869
      %v3871 = vcombine.low %v2788, %v2792
      %v3872 = vcombine.low %v2796, %v2800
      %v3874 = vunpack.c.l.s4 1983009808
      %v3875 = vunpack.c.0.s8 %v3874
      %v3876 = vlaneseq
      %v3877 = vshrl.u32 %v3876, 7
      %v3878 = vsub.s32 %v3875, %v3877
      %v3879 = vrot.slane %v3871, %v3878
      %v3881 = vunpack.c.l.s4 1983009808
      %v3882 = vunpack.c.0.s8 %v3881
      %v3883 = vlaneseq
      %v3884 = vshrl.u32 %v3883, 7
      %v3885 = vsub.s32 %v3882, %v3884
      %v3886 = vrot.slane %v3872, %v3885
      %v3887 = vcombine.low %v3879, %v3886
      %v3888 = vcombine.low %v2804, %v2808
      %v3889 = vcombine.low %v2812, %v2816
      %v3891 = vunpack.c.l.s4 1983009808
      %v3892 = vunpack.c.0.s8 %v3891
      %v3893 = vlaneseq
      %v3894 = vshrl.u32 %v3893, 7
      %v3895 = vsub.s32 %v3892, %v3894
      %v3896 = vrot.slane %v3888, %v3895
      %v3898 = vunpack.c.l.s4 1983009808
      %v3899 = vunpack.c.0.s8 %v3898
      %v3900 = vlaneseq
      %v3901 = vshrl.u32 %v3900, 7
      %v3902 = vsub.s32 %v3899, %v3901
      %v3903 = vrot.slane %v3889, %v3902
      %v3904 = vcombine.low %v3896, %v3903
      %vm3969 = vcmask 31744
      %3970 = vst.msk [vmem:[%s159] sm:$0xff] %vm3969, %v2833
      %3971 = vst.msk [vmem:[%s159 + $0x8] sm:$0xff] %vm3969, %v2850
      %3972 = vst.msk [vmem:[%s159 + $0x10] sm:$0xff] %vm3969, %v2867
      %3973 = vst.msk [vmem:[%s159 + $0x18] sm:$0xff] %vm3969, %v2884
      %3974 = vst.msk [vmem:[%s159 + $0x20] sm:$0xff] %vm3969, %v2833
      %3975 = vst.msk [vmem:[%s159 + $0x28] sm:$0xff] %vm3969, %v2850
      %3976 = vst.msk [vmem:[%s159 + $0x30] sm:$0xff] %vm3969, %v2867
      %3977 = vst.msk [vmem:[%s159 + $0x38] sm:$0xff] %vm3969, %v2884
      %3978 = vst.msk [vmem:[%s159 + $0x40] sm:$0xff] %vm3969, %v2901
      %3979 = vst.msk [vmem:[%s159 + $0x48] sm:$0xff] %vm3969, %v2918
      %3980 = vst.msk [vmem:[%s159 + $0x50] sm:$0xff] %vm3969, %v2935
      %3981 = vst.msk [vmem:[%s159 + $0x58] sm:$0xff] %vm3969, %v2952
      %3982 = vst.msk [vmem:[%s159 + $0x60] sm:$0xff] %vm3969, %v2901
      %3983 = vst.msk [vmem:[%s159 + $0x68] sm:$0xff] %vm3969, %v2918
      %3984 = vst.msk [vmem:[%s159 + $0x70] sm:$0xff] %vm3969, %v2935
      %3985 = vst.msk [vmem:[%s159 + $0x78] sm:$0xff] %vm3969, %v2952
      %3986 = vst.msk [vmem:[%s159 + $0x80] sm:$0xff] %vm3969, %v2969
      %3987 = vst.msk [vmem:[%s159 + $0x88] sm:$0xff] %vm3969, %v2986
      %3988 = vst.msk [vmem:[%s159 + $0x90] sm:$0xff] %vm3969, %v3003
      %3989 = vst.msk [vmem:[%s159 + $0x98] sm:$0xff] %vm3969, %v3020
      %3990 = vst.msk [vmem:[%s159 + $0xa0] sm:$0xff] %vm3969, %v2969
      %3991 = vst.msk [vmem:[%s159 + $0xa8] sm:$0xff] %vm3969, %v2986
      %3992 = vst.msk [vmem:[%s159 + $0xb0] sm:$0xff] %vm3969, %v3003
      %3993 = vst.msk [vmem:[%s159 + $0xb8] sm:$0xff] %vm3969, %v3020
      %3994 = vst.msk [vmem:[%s159 + $0xc0] sm:$0xff] %vm3969, %v3037
      %3995 = vst.msk [vmem:[%s159 + $0xc8] sm:$0xff] %vm3969, %v3054
      %3996 = vst.msk [vmem:[%s159 + $0xd0] sm:$0xff] %vm3969, %v3071
      %3997 = vst.msk [vmem:[%s159 + $0xd8] sm:$0xff] %vm3969, %v3088
      %3998 = vst.msk [vmem:[%s159 + $0xe0] sm:$0xff] %vm3969, %v3037
      %3999 = vst.msk [vmem:[%s159 + $0xe8] sm:$0xff] %vm3969, %v3054
      %4000 = vst.msk [vmem:[%s159 + $0xf0] sm:$0xff] %vm3969, %v3071
      %4001 = vst.msk [vmem:[%s159 + $0xf8] sm:$0xff] %vm3969, %v3088
      %4002 = vst.msk [vmem:[%s159 + $0x100] sm:$0xff] %vm3969, %v3105
      %4003 = vst.msk [vmem:[%s159 + $0x108] sm:$0xff] %vm3969, %v3122
      %4004 = vst.msk [vmem:[%s159 + $0x110] sm:$0xff] %vm3969, %v3139
      %4005 = vst.msk [vmem:[%s159 + $0x118] sm:$0xff] %vm3969, %v3156
      %4006 = vst.msk [vmem:[%s159 + $0x120] sm:$0xff] %vm3969, %v3105
      %4007 = vst.msk [vmem:[%s159 + $0x128] sm:$0xff] %vm3969, %v3122
      %4008 = vst.msk [vmem:[%s159 + $0x130] sm:$0xff] %vm3969, %v3139
      %4009 = vst.msk [vmem:[%s159 + $0x138] sm:$0xff] %vm3969, %v3156
      %4010 = vst.msk [vmem:[%s159 + $0x140] sm:$0xff] %vm3969, %v3173
      %4011 = vst.msk [vmem:[%s159 + $0x148] sm:$0xff] %vm3969, %v3190
      %4012 = vst.msk [vmem:[%s159 + $0x150] sm:$0xff] %vm3969, %v3207
      %4013 = vst.msk [vmem:[%s159 + $0x158] sm:$0xff] %vm3969, %v3224
      %4014 = vst.msk [vmem:[%s159 + $0x160] sm:$0xff] %vm3969, %v3173
      %4015 = vst.msk [vmem:[%s159 + $0x168] sm:$0xff] %vm3969, %v3190
      %4016 = vst.msk [vmem:[%s159 + $0x170] sm:$0xff] %vm3969, %v3207
      %4017 = vst.msk [vmem:[%s159 + $0x178] sm:$0xff] %vm3969, %v3224
      %4018 = vst.msk [vmem:[%s159 + $0x180] sm:$0xff] %vm3969, %v3241
      %4019 = vst.msk [vmem:[%s159 + $0x188] sm:$0xff] %vm3969, %v3258
      %4020 = vst.msk [vmem:[%s159 + $0x190] sm:$0xff] %vm3969, %v3275
      %4021 = vst.msk [vmem:[%s159 + $0x198] sm:$0xff] %vm3969, %v3292
      %4022 = vst.msk [vmem:[%s159 + $0x1a0] sm:$0xff] %vm3969, %v3241
      %4023 = vst.msk [vmem:[%s159 + $0x1a8] sm:$0xff] %vm3969, %v3258
      %4024 = vst.msk [vmem:[%s159 + $0x1b0] sm:$0xff] %vm3969, %v3275
      %4025 = vst.msk [vmem:[%s159 + $0x1b8] sm:$0xff] %vm3969, %v3292
      %4026 = vst.msk [vmem:[%s159 + $0x1c0] sm:$0xff] %vm3969, %v3309
      %4027 = vst.msk [vmem:[%s159 + $0x1c8] sm:$0xff] %vm3969, %v3326
      %4028 = vst.msk [vmem:[%s159 + $0x1d0] sm:$0xff] %vm3969, %v3343
      %4029 = vst.msk [vmem:[%s159 + $0x1d8] sm:$0xff] %vm3969, %v3360
      %4030 = vst.msk [vmem:[%s159 + $0x1e0] sm:$0xff] %vm3969, %v3309
      %4031 = vst.msk [vmem:[%s159 + $0x1e8] sm:$0xff] %vm3969, %v3326
      %4032 = vst.msk [vmem:[%s159 + $0x1f0] sm:$0xff] %vm3969, %v3343
      %4033 = vst.msk [vmem:[%s159 + $0x1f8] sm:$0xff] %vm3969, %v3360
      %4034 = vst.msk [vmem:[%s159 + $0x200] sm:$0xff] %vm3969, %v3377
      %4035 = vst.msk [vmem:[%s159 + $0x208] sm:$0xff] %vm3969, %v3394
      %4036 = vst.msk [vmem:[%s159 + $0x210] sm:$0xff] %vm3969, %v3411
      %4037 = vst.msk [vmem:[%s159 + $0x218] sm:$0xff] %vm3969, %v3428
      %4038 = vst.msk [vmem:[%s159 + $0x220] sm:$0xff] %vm3969, %v3377
      %4039 = vst.msk [vmem:[%s159 + $0x228] sm:$0xff] %vm3969, %v3394
      %4040 = vst.msk [vmem:[%s159 + $0x230] sm:$0xff] %vm3969, %v3411
      %4041 = vst.msk [vmem:[%s159 + $0x238] sm:$0xff] %vm3969, %v3428
      %4042 = vst.msk [vmem:[%s159 + $0x240] sm:$0xff] %vm3969, %v3445
      %4043 = vst.msk [vmem:[%s159 + $0x248] sm:$0xff] %vm3969, %v3462
      %4044 = vst.msk [vmem:[%s159 + $0x250] sm:$0xff] %vm3969, %v3479
      %4045 = vst.msk [vmem:[%s159 + $0x258] sm:$0xff] %vm3969, %v3496
      %4046 = vst.msk [vmem:[%s159 + $0x260] sm:$0xff] %vm3969, %v3445
      %4047 = vst.msk [vmem:[%s159 + $0x268] sm:$0xff] %vm3969, %v3462
      %4048 = vst.msk [vmem:[%s159 + $0x270] sm:$0xff] %vm3969, %v3479
      %4049 = vst.msk [vmem:[%s159 + $0x278] sm:$0xff] %vm3969, %v3496
      %4050 = vst.msk [vmem:[%s159 + $0x280] sm:$0xff] %vm3969, %v3513
      %4051 = vst.msk [vmem:[%s159 + $0x288] sm:$0xff] %vm3969, %v3530
      %4052 = vst.msk [vmem:[%s159 + $0x290] sm:$0xff] %vm3969, %v3547
      %4053 = vst.msk [vmem:[%s159 + $0x298] sm:$0xff] %vm3969, %v3564
      %4054 = vst.msk [vmem:[%s159 + $0x2a0] sm:$0xff] %vm3969, %v3513
      %4055 = vst.msk [vmem:[%s159 + $0x2a8] sm:$0xff] %vm3969, %v3530
      %4056 = vst.msk [vmem:[%s159 + $0x2b0] sm:$0xff] %vm3969, %v3547
      %4057 = vst.msk [vmem:[%s159 + $0x2b8] sm:$0xff] %vm3969, %v3564
      %4058 = vst.msk [vmem:[%s159 + $0x2c0] sm:$0xff] %vm3969, %v3581
      %4059 = vst.msk [vmem:[%s159 + $0x2c8] sm:$0xff] %vm3969, %v3598
      %4060 = vst.msk [vmem:[%s159 + $0x2d0] sm:$0xff] %vm3969, %v3615
      %4061 = vst.msk [vmem:[%s159 + $0x2d8] sm:$0xff] %vm3969, %v3632
      %4062 = vst.msk [vmem:[%s159 + $0x2e0] sm:$0xff] %vm3969, %v3581
      %4063 = vst.msk [vmem:[%s159 + $0x2e8] sm:$0xff] %vm3969, %v3598
      %4064 = vst.msk [vmem:[%s159 + $0x2f0] sm:$0xff] %vm3969, %v3615
      %4065 = vst.msk [vmem:[%s159 + $0x2f8] sm:$0xff] %vm3969, %v3632
      %4066 = vst.msk [vmem:[%s159 + $0x300] sm:$0xff] %vm3969, %v3649
      %4067 = vst.msk [vmem:[%s159 + $0x308] sm:$0xff] %vm3969, %v3666
      %4068 = vst.msk [vmem:[%s159 + $0x310] sm:$0xff] %vm3969, %v3683
      %4069 = vst.msk [vmem:[%s159 + $0x318] sm:$0xff] %vm3969, %v3700
      %4070 = vst.msk [vmem:[%s159 + $0x320] sm:$0xff] %vm3969, %v3649
      %4071 = vst.msk [vmem:[%s159 + $0x328] sm:$0xff] %vm3969, %v3666
      %4072 = vst.msk [vmem:[%s159 + $0x330] sm:$0xff] %vm3969, %v3683
      %4073 = vst.msk [vmem:[%s159 + $0x338] sm:$0xff] %vm3969, %v3700
      %4074 = vst.msk [vmem:[%s159 + $0x340] sm:$0xff] %vm3969, %v3717
      %4075 = vst.msk [vmem:[%s159 + $0x348] sm:$0xff] %vm3969, %v3734
      %4076 = vst.msk [vmem:[%s159 + $0x350] sm:$0xff] %vm3969, %v3751
      %4077 = vst.msk [vmem:[%s159 + $0x358] sm:$0xff] %vm3969, %v3768
      %4078 = vst.msk [vmem:[%s159 + $0x360] sm:$0xff] %vm3969, %v3717
      %4079 = vst.msk [vmem:[%s159 + $0x368] sm:$0xff] %vm3969, %v3734
      %4080 = vst.msk [vmem:[%s159 + $0x370] sm:$0xff] %vm3969, %v3751
      %4081 = vst.msk [vmem:[%s159 + $0x378] sm:$0xff] %vm3969, %v3768
      %4082 = vst.msk [vmem:[%s159 + $0x380] sm:$0xff] %vm3969, %v3785
      %4083 = vst.msk [vmem:[%s159 + $0x388] sm:$0xff] %vm3969, %v3802
      %4084 = vst.msk [vmem:[%s159 + $0x390] sm:$0xff] %vm3969, %v3819
      %4085 = vst.msk [vmem:[%s159 + $0x398] sm:$0xff] %vm3969, %v3836
      %4086 = vst.msk [vmem:[%s159 + $0x3a0] sm:$0xff] %vm3969, %v3785
      %4087 = vst.msk [vmem:[%s159 + $0x3a8] sm:$0xff] %vm3969, %v3802
      %4088 = vst.msk [vmem:[%s159 + $0x3b0] sm:$0xff] %vm3969, %v3819
      %4089 = vst.msk [vmem:[%s159 + $0x3b8] sm:$0xff] %vm3969, %v3836
      %4090 = vst.msk [vmem:[%s159 + $0x3c0] sm:$0xff] %vm3969, %v3853
      %4091 = vst.msk [vmem:[%s159 + $0x3c8] sm:$0xff] %vm3969, %v3870
      %4092 = vst.msk [vmem:[%s159 + $0x3d0] sm:$0xff] %vm3969, %v3887
      %4093 = vst.msk [vmem:[%s159 + $0x3d8] sm:$0xff] %vm3969, %v3904
      %4094 = vst.msk [vmem:[%s159 + $0x3e0] sm:$0xff] %vm3969, %v3853
      %4095 = vst.msk [vmem:[%s159 + $0x3e8] sm:$0xff] %vm3969, %v3870
      %4096 = vst.msk [vmem:[%s159 + $0x3f0] sm:$0xff] %vm3969, %v3887
      %4097 = vst.msk [vmem:[%s159 + $0x3f8] sm:$0xff] %vm3969, %v3904
      %s4098 = smul.u32 32, %s17
      %p4099 = scmp.lt.s32.totalorder %s16, 1
      %s4100 = scalar_select %p4099, %s16, 1
      %p4101 = scmp.lt.s32.totalorder %s4098, 31
      %s4102 = scalar_select %p4101, %s4098, 31
      %s4103 = smul.addr %s4102, 4
      %s4104 = smul.addr %s4100, 128
      %s4105 = sadd.s32 %s4103, %s4104
      %s4106 = smul.addr %s4105, 8
      %s4107 = scalar_lea.vmem %s1, %s4106
      // Predicated region
      $region25: #{tpu_custom_call.1} parent=23 // pred_check
        %p4108 = pneg %p72
      $region26: #{tpu_custom_call.1} parent=23 // pred_check_branch
        %4110 = sbr.rel (%p4108) target = $region28
      $region27: #{tpu_custom_call.1} parent=23 // pred_region
        %s4111 = smul.u32 32, %s17
      $region28: #{tpu_custom_call.1} parent=23 // pred_fallthru
        _
    $region24: #{tpu_custom_call.1} parent=5 // pred_fallthru
      _
    %p4112 = scmp.le.s32.totalorder 2, %s7
    // Predicated region
    $region29: #{tpu_custom_call.1} parent=5 // pred_check
      %p4113 = pneg %p4112
    $region30: #{tpu_custom_call.1} parent=5 // pred_check_branch
      %4115 = sbr.rel (%p4113) target = $region32
    $region31: #{tpu_custom_call.1} parent=5 // pred_region
      %s4116 = ssub.s32 %s7, 2
      // Predicated region
      $region33: #{tpu_custom_call.1} parent=31 // pred_check
        %p4117 = pneg %p78
      $region34: #{tpu_custom_call.1} parent=31 // pred_check_branch
        %4119 = sbr.rel (%p4117) target = $region36
      $region35: #{tpu_custom_call.1} parent=31 // pred_region
        %s4120 = smul.u32 32, %s19
        %p4121 = scmp.lt.s32.totalorder %s18, 1
        %s4122 = scalar_select %p4121, %s18, 1
        %p4123 = scmp.lt.s32.totalorder %s4120, 31
        %s4124 = scalar_select %p4123, %s4120, 31
        %s4125 = smul.addr %s4124, 4
        %s4126 = smul.addr %s4122, 128
        %s4127 = sadd.s32 %s4125, %s4126
        %s4128 = smul.addr %s4127, 8
        %s4129 = scalar_lea.vmem %s1, %s4128
      $region36: #{tpu_custom_call.1} parent=31 // pred_fallthru
        _
    $region32: #{tpu_custom_call.1} parent=5 // pred_fallthru
      _
  $region6: #{tpu_custom_call.1} parent=0 // loop_footer
    %s11 = sadd.s32 1, %s7
  $region7: #{tpu_custom_call.1} parent=0 // loop_footer_branch
    %6 = sbr.rel target = $region3
  $region8: #{tpu_custom_call.1} parent=0 // loop_exit
    _

</llo_original>
